<compile_context>
chip_gen: v7x
topology: tpu7x:2x2x1
jax: 0.10.0
libtpu: 0.0.40
codegen_flags: <defaults>
</compile_context>

<pallas_src>
import functools
import math

import jax
import jax.numpy as jnp
from jax import lax
from jax.experimental import pallas as pl
from jax.experimental.pallas import tpu as pltpu

LN_EPS = 1e-5  # PyTorch nn.LayerNorm default
VMEM_LIMIT_BYTES = 48 * 1024 * 1024  # explicit limit with headroom under v7x's 64 MiB/TC


def _layernorm(x, gamma, beta):
    mean = jnp.mean(x, axis=-1, keepdims=True)
    var = jnp.mean(jnp.square(x - mean), axis=-1, keepdims=True)
    return (x - mean) * lax.rsqrt(var + LN_EPS) * gamma + beta


def clip_layer_kernel(n_heads,
                      x_ref,
                      g1_ref, b1_ref,
                      w_qkv_ref, b_qkv_ref,
                      w_out_ref, b_out_ref,
                      g2_ref, b2_ref,
                      w_fc1_ref, b_fc1_ref,
                      w_fc2_ref, b_fc2_ref,
                      o_ref):
    # x_ref / o_ref: (block_b, T, D) slab of sequences for this grid step.
    Bb, T, D = x_ref.shape
    M = Bb * T
    dh = D // n_heads
    scale = 1.0 / math.sqrt(dh)

    # Flatten the sequences into one (M, D) row-slab so LN / QKV / out-proj / MLP
    # matmuls fill the MXU rows (free reshape: leading-dim merge, T is sublane-aligned).
    x = x_ref[...].astype(jnp.float32).reshape(M, D)

    # ---------------- LayerNorm 1 (f32) ----------------
    h = _layernorm(x, g1_ref[...], b1_ref[...])

    # ---------------- Fused QKV projection: bf16 MXU, f32 accumulation ----------------
    qkv = jnp.dot(h.astype(jnp.bfloat16), w_qkv_ref[...],
                  preferred_element_type=jnp.float32) + b_qkv_ref[...]   # (M, 3D) f32
    qkv = qkv.reshape(Bb, T, 3 * D)

    # ---------------- Causal multi-head attention ----------------
    row = lax.broadcasted_iota(jnp.int32, (T, T), 0)
    col = lax.broadcasted_iota(jnp.int32, (T, T), 1)
    keep = (col <= row)[None, :, :]      # (1, T, T); pad keys sit above the diagonal.

    w_out = w_out_ref[...]               # (D, D) bf16, loaded once, sliced per head.

    attn = jnp.zeros((M, D), jnp.float32)
    for hd in range(n_heads):            # static, unrolled, small
        lo = hd * dh
        q = qkv[:, :, lo:lo + dh].astype(jnp.bfloat16)                  # (Bb, T, dh)
        k = qkv[:, :, D + lo:D + lo + dh].astype(jnp.bfloat16)
        v = qkv[:, :, 2 * D + lo:2 * D + lo + dh].astype(jnp.bfloat16)

        # Sequence-batched score / context dots (bf16 inputs, f32 accumulation).
        s = jnp.einsum("bqd,bkd->bqk", q, k,
                       preferred_element_type=jnp.float32) * scale      # (Bb, T, T) f32
        s = jnp.where(keep, s, -1e30)
        s = s - jnp.max(s, axis=-1, keepdims=True)
        p = jnp.exp(s)
        p = p * pl.reciprocal(jnp.sum(p, axis=-1, keepdims=True), approx=True)
        ctx = jnp.einsum("bqk,bkd->bqd", p.astype(jnp.bfloat16), v,
                         preferred_element_type=jnp.float32)            # (Bb, T, dh) f32

        # Per-head out-projection accumulation: no (T, D) context scratch and no
        # partial-lane masked stores -- every store stays full-width / lane-dense.
        attn = attn + jnp.dot(ctx.reshape(M, dh).astype(jnp.bfloat16),
                              w_out[lo:lo + dh, :],
                              preferred_element_type=jnp.float32)

    x = x + attn + b_out_ref[...]                                        # residual 1

    # ---------------- LayerNorm 2 + QuickGELU MLP ----------------
    h2 = _layernorm(x, g2_ref[...], b2_ref[...])
    m = jnp.dot(h2.astype(jnp.bfloat16), w_fc1_ref[...],
                preferred_element_type=jnp.float32) + b_fc1_ref[...]     # (M, 4D) f32
    m = m * jax.nn.sigmoid(1.702 * m)                                    # QuickGELU (f32)
    m = jnp.dot(m.astype(jnp.bfloat16), w_fc2_ref[...],
                preferred_element_type=jnp.float32) + b_fc2_ref[...]     # (M, D) f32

    o_ref[...] = (x + m).reshape(Bb, T, D).astype(o_ref.dtype)           # residual 2


def _pick_block_b(B, T):
    """Number of sequences folded into one grid step."""
    divisors = [d for d in range(1, B + 1) if B % d == 0]
    # Prefer the smallest divisor giving >=256 MXU rows while still leaving >=2 grid
    # steps (so both v7x TensorCores get work); otherwise the largest divisor that
    # keeps the row-slab at <=512 rows.
    for d in divisors:
        if d * T >= 256 and B // d >= 2:
            return d
    best = 1
    for d in divisors:
        if d * T <= 512:
            best = d
    return best


def clip_layer(x, params, n_heads, block_b=None):
    """x: (B, T, D) f32.  params: CLIPLayer parameters in JAX layout (linear weights
    are (in, out), i.e. already transposed vs. torch)."""
    B, T, D = x.shape
    (g1, b1, w_qkv, b_qkv, w_out, b_out,
     g2, b2, w_fc1, b_fc1, w_fc2, b_fc2) = params
    assert D % n_heads == 0

    if block_b is None:
        block_b = _pick_block_b(B, T)
    if B % block_b != 0:
        raise ValueError(f"block_b={block_b} must divide batch {B}")

    # Pad T to a sublane multiple so row-slab reshapes and (T, T) score tiles are
    # tile-aligned.  Pad tokens are zeros at the end of the sequence, so the causal
    # mask already hides them from every real query row.
    T_pad = -(-T // 8) * 8
    x_p = jnp.pad(x, ((0, 0), (0, T_pad - T), (0, 0))) if T_pad != T else x

    # Weights in bf16 (MXU-native; halves the resident VMEM footprint).  Biases and
    # LayerNorm params stay f32, presented as (1, N) -> clean (sublane, lane) tiles.
    w_qkv = w_qkv.astype(jnp.bfloat16)
    w_out = w_out.astype(jnp.bfloat16)
    w_fc1 = w_fc1.astype(jnp.bfloat16)
    w_fc2 = w_fc2.astype(jnp.bfloat16)
    g1 = g1.reshape(1, D).astype(jnp.float32)
    b1 = b1.reshape(1, D).astype(jnp.float32)
    b_qkv = b_qkv.reshape(1, 3 * D).astype(jnp.float32)
    b_out = b_out.reshape(1, D).astype(jnp.float32)
    g2 = g2.reshape(1, D).astype(jnp.float32)
    b2 = b2.reshape(1, D).astype(jnp.float32)
    b_fc1 = b_fc1.reshape(1, 4 * D).astype(jnp.float32)
    b_fc2 = b_fc2.reshape(1, D).astype(jnp.float32)

    operands = (x_p, g1, b1, w_qkv, b_qkv, w_out, b_out,
                g2, b2, w_fc1, b_fc1, w_fc2, b_fc2)

    def call(single_buffer_weights):
        def resident(shape):
            # Whole-array block, constant index map -> fetched once, resident across
            # the batch grid.  Single-buffered so the resident weight footprint is
            # halved (needed to fit v7x's 64 MiB/TC VMEM at production CLIP sizes).
            zeros = (0,) * len(shape)
            kwargs = {}
            if single_buffer_weights:
                kwargs["pipeline_mode"] = pl.Buffered(1)
            return pl.BlockSpec(shape, lambda b: zeros, **kwargs)

        grid_spec = pltpu.PrefetchScalarGridSpec(
            num_scalar_prefetch=0,
            grid=(B // block_b,),
            in_specs=[
                pl.BlockSpec((block_b, T_pad, D), lambda b: (b, 0, 0)),  # x slab
                resident((1, D)), resident((1, D)),                      # LN1 gamma/beta
                resident((D, 3 * D)), resident((1, 3 * D)),              # W_qkv / b_qkv
                resident((D, D)), resident((1, D)),                      # W_out / b_out
                resident((1, D)), resident((1, D)),                      # LN2 gamma/beta
                resident((D, 4 * D)), resident((1, 4 * D)),              # W_fc1 / b_fc1
                resident((4 * D, D)), resident((1, D)),                  # W_fc2 / b_fc2
            ],
            out_specs=pl.BlockSpec((block_b, T_pad, D), lambda b: (b, 0, 0)),
        )
        return pl.pallas_call(
            functools.partial(clip_layer_kernel, n_heads),
            out_shape=jax.ShapeDtypeStruct((B, T_pad, D), x.dtype),
            grid_spec=grid_spec,
            compiler_params=pltpu.CompilerParams(
                dimension_semantics=("parallel",),
                vmem_limit_bytes=VMEM_LIMIT_BYTES,
            ),
        )(*operands)

    try:
        out = call(single_buffer_weights=True)
    except Exception:
        # Fallback for JAX builds where pl.Buffered(1) on pallas_call BlockSpecs is
        # unsupported; default double-buffering is functionally identical.
        out = call(single_buffer_weights=False)

    return out[:, :T, :] if T_pad != T else out


# ----------------------------- pure-JAX references -----------------------------
def clip_layer_ref(x, params, n_heads, mixed_precision=False):
    """mixed_precision=True mirrors the kernel's bf16-operand / f32-accumulate policy;
    False computes a full-f32 (HIGHEST precision) reference of the module semantics."""
    (g1, b1, w_qkv, b_qkv, w_out, b_out,
     g2, b2, w_fc1, b_fc1, w_fc2, b_fc2) = params
    B, T, D = x.shape
    dh = D // n_heads

    if mixed_precision:
        cast = lambda a: a.astype(jnp.bfloat16)
        prec = None
    else:
        cast = lambda a: a
        prec = lax.Precision.HIGHEST

    def mm(a, b):
        return jnp.dot(cast(a), cast(b), precision=prec,
                       preferred_element_type=jnp.float32)

    residual = x
    h = _layernorm(x, g1, b1)
    qkv = mm(h, w_qkv) + b_qkv
    q, k, v = jnp.split(qkv, 3, axis=-1)
    q = q.reshape(B, T, n_heads, dh).transpose(0, 2, 1, 3)
    k = k.reshape(B, T, n_heads, dh).transpose(0, 2, 1, 3)
    v = v.reshape(B, T, n_heads, dh).transpose(0, 2, 1, 3)
    s = jnp.einsum("bhqd,bhkd->bhqk", cast(q), cast(k), precision=prec,
                   preferred_element_type=jnp.float32) / math.sqrt(dh)
    mask = jnp.triu(jnp.ones((T, T), dtype=bool), 1)
    s = jnp.where(mask, -1e30, s)
    p = jax.nn.softmax(s, axis=-1)
    ctx = jnp.einsum("bhqk,bhkd->bhqd", cast(p), cast(v), precision=prec,
                     preferred_element_type=jnp.float32)
    ctx = ctx.transpose(0, 2, 1, 3).reshape(B, T, D)
    x = residual + (mm(ctx, w_out) + b_out)

    residual = x
    h = _layernorm(x, g2, b2)
    m = mm(h, w_fc1) + b_fc1
    m = m * jax.nn.sigmoid(1.702 * m)
    m = mm(m, w_fc2) + b_fc2
    return residual + m


if __name__ == "__main__":
    # Small shapes consistent with the module: batch=2, seq=8, n_embed=32, n_heads=4.
    B, T, D, H = 2, 8, 32, 4

    key = jax.random.PRNGKey(0)
    ks = jax.random.split(key, 13)

    x = jax.random.normal(ks[0], (B, T, D), jnp.float32) * 0.5
    g1 = 1.0 + 0.1 * jax.random.normal(ks[1], (D,), jnp.float32)
    b1 = 0.1 * jax.random.normal(ks[2], (D,), jnp.float32)
    w_qkv = jax.random.normal(ks[3], (D, 3 * D), jnp.float32) / math.sqrt(D)
    b_qkv = 0.1 * jax.random.normal(ks[4], (3 * D,), jnp.float32)
    w_out = jax.random.normal(ks[5], (D, D), jnp.float32) / math.sqrt(D)
    b_out = 0.1 * jax.random.normal(ks[6], (D,), jnp.float32)
    g2 = 1.0 + 0.1 * jax.random.normal(ks[7], (D,), jnp.float32)
    b2 = 0.1 * jax.random.normal(ks[8], (D,), jnp.float32)
    w_fc1 = jax.random.normal(ks[9], (D, 4 * D), jnp.float32) / math.sqrt(D)
    b_fc1 = 0.1 * jax.random.normal(ks[10], (4 * D,), jnp.float32)
    w_fc2 = jax.random.normal(ks[11], (4 * D, D), jnp.float32) / math.sqrt(4 * D)
    b_fc2 = 0.1 * jax.random.normal(ks[12], (D,), jnp.float32)

    params = (g1, b1, w_qkv, b_qkv, w_out, b_out,
              g2, b2, w_fc1, b_fc1, w_fc2, b_fc2)

    out = clip_layer(x, params, n_heads=H)
    out = jax.block_until_ready(out)
    assert out.shape == (B, T, D)

    # Tight check against a reference with the same mixed-precision policy
    # (bf16 matmul operands, f32 accumulation).
    ref_mixed = clip_layer_ref(x, params, H, mixed_precision=True)
    err_mixed = float(jnp.max(jnp.abs(out - ref_mixed)))
    assert jnp.allclose(out, ref_mixed, atol=1e-2, rtol=1e-2), \
        f"mismatch vs mixed-precision reference, max abs err={err_mixed}"

    # Loose sanity check against the full-f32 module semantics.
    ref_f32 = clip_layer_ref(x, params, H, mixed_precision=False)
    err_f32 = float(jnp.max(jnp.abs(out - ref_f32)))
    assert jnp.allclose(out, ref_f32, atol=1e-1, rtol=1e-1), \
        f"mismatch vs f32 reference, max abs err={err_f32}"

    print("KERNEL_OK")
</pallas_src>

<mosaic_0001>
module attributes {stable_mosaic.version = 11 : i64} {
  func.func @clip_layer_kernel(%arg0: i32, %arg1: memref<2x8x32xf32, #tpu.memory_space<vmem>>, %arg2: memref<1x32xf32, #tpu.memory_space<vmem>>, %arg3: memref<1x32xf32, #tpu.memory_space<vmem>>, %arg4: memref<32x96xbf16, #tpu.memory_space<vmem>>, %arg5: memref<1x96xf32, #tpu.memory_space<vmem>>, %arg6: memref<32x32xbf16, #tpu.memory_space<vmem>>, %arg7: memref<1x32xf32, #tpu.memory_space<vmem>>, %arg8: memref<1x32xf32, #tpu.memory_space<vmem>>, %arg9: memref<1x32xf32, #tpu.memory_space<vmem>>, %arg10: memref<32x128xbf16, #tpu.memory_space<vmem>>, %arg11: memref<1x128xf32, #tpu.memory_space<vmem>>, %arg12: memref<128x32xbf16, #tpu.memory_space<vmem>>, %arg13: memref<1x32xf32, #tpu.memory_space<vmem>>, %arg14: memref<2x8x32xf32, #tpu.memory_space<vmem>>) attributes {dimension_semantics = [#tpu.dimension_semantics<parallel>], iteration_bounds = array<i64: 1>, scalar_prefetch = 0 : i64, scratch_operands = 0 : i64, tpu.core_type = #tpu.core_type<tc>, window_params = [{transform_indices = @transform_0, window_bounds = array<i64: 2, 8, 32>}, {pipeline_mode = #tpu.pipeline_mode<synchronous>, transform_indices = @transform_1, window_bounds = array<i64: 1, 32>}, {pipeline_mode = #tpu.pipeline_mode<synchronous>, transform_indices = @transform_2, window_bounds = array<i64: 1, 32>}, {pipeline_mode = #tpu.pipeline_mode<synchronous>, transform_indices = @transform_3, window_bounds = array<i64: 32, 96>}, {pipeline_mode = #tpu.pipeline_mode<synchronous>, transform_indices = @transform_4, window_bounds = array<i64: 1, 96>}, {pipeline_mode = #tpu.pipeline_mode<synchronous>, transform_indices = @transform_5, window_bounds = array<i64: 32, 32>}, {pipeline_mode = #tpu.pipeline_mode<synchronous>, transform_indices = @transform_6, window_bounds = array<i64: 1, 32>}, {pipeline_mode = #tpu.pipeline_mode<synchronous>, transform_indices = @transform_7, window_bounds = array<i64: 1, 32>}, {pipeline_mode = #tpu.pipeline_mode<synchronous>, transform_indices = @transform_8, window_bounds = array<i64: 1, 32>}, {pipeline_mode = #tpu.pipeline_mode<synchronous>, transform_indices = @transform_9, window_bounds = array<i64: 32, 128>}, {pipeline_mode = #tpu.pipeline_mode<synchronous>, transform_indices = @transform_10, window_bounds = array<i64: 1, 128>}, {pipeline_mode = #tpu.pipeline_mode<synchronous>, transform_indices = @transform_11, window_bounds = array<i64: 128, 32>}, {pipeline_mode = #tpu.pipeline_mode<synchronous>, transform_indices = @transform_12, window_bounds = array<i64: 1, 32>}, {transform_indices = @transform_13, window_bounds = array<i64: 2, 8, 32>}]} {
    %c0 = arith.constant 0 : index
    %c0_0 = arith.constant 0 : index
    %c0_1 = arith.constant 0 : index
    %0 = vector.load %arg1[%c0, %c0_0, %c0_1] : memref<2x8x32xf32, #tpu.memory_space<vmem>>, vector<2x8x32xf32>
    %1 = vector.shape_cast %0 : vector<2x8x32xf32> to vector<16x32xf32>
    %c0_2 = arith.constant 0 : index
    %c0_3 = arith.constant 0 : index
    %2 = vector.load %arg2[%c0_2, %c0_3] : memref<1x32xf32, #tpu.memory_space<vmem>>, vector<1x32xf32>
    %c0_4 = arith.constant 0 : index
    %c0_5 = arith.constant 0 : index
    %3 = vector.load %arg3[%c0_4, %c0_5] : memref<1x32xf32, #tpu.memory_space<vmem>>, vector<1x32xf32>
    %cst = arith.constant dense<0.000000e+00> : vector<16xf32>
    %4 = vector.multi_reduction <add>, %1, %cst [1] : vector<16x32xf32> to vector<16xf32>
    %5 = vector.shape_cast %4 : vector<16xf32> to vector<16x1xf32>
    %cst_6 = arith.constant 3.200000e+01 : f32
    %6 = vector.broadcast %cst_6 : f32 to vector<16x1xf32>
    %7 = arith.divf %5, %6 : vector<16x1xf32>
    %8 = vector.broadcast %7 : vector<16x1xf32> to vector<16x32xf32>
    %9 = arith.subf %1, %8 : vector<16x32xf32>
    %10 = arith.mulf %9, %9 : vector<16x32xf32>
    %cst_7 = arith.constant dense<0.000000e+00> : vector<16xf32>
    %11 = vector.multi_reduction <add>, %10, %cst_7 [1] : vector<16x32xf32> to vector<16xf32>
    %12 = vector.shape_cast %11 : vector<16xf32> to vector<16x1xf32>
    %cst_8 = arith.constant 3.200000e+01 : f32
    %13 = vector.broadcast %cst_8 : f32 to vector<16x1xf32>
    %14 = arith.divf %12, %13 : vector<16x1xf32>
    %15 = vector.broadcast %7 : vector<16x1xf32> to vector<16x32xf32>
    %16 = arith.subf %1, %15 : vector<16x32xf32>
    %cst_9 = arith.constant 9.99999974E-6 : f32
    %17 = vector.broadcast %cst_9 : f32 to vector<16x1xf32>
    %18 = arith.addf %14, %17 : vector<16x1xf32>
    %19 = math.rsqrt %18 : vector<16x1xf32>
    %20 = vector.broadcast %19 : vector<16x1xf32> to vector<16x32xf32>
    %21 = arith.mulf %16, %20 : vector<16x32xf32>
    %22 = vector.broadcast %2 : vector<1x32xf32> to vector<16x32xf32>
    %23 = arith.mulf %21, %22 : vector<16x32xf32>
    %24 = vector.broadcast %3 : vector<1x32xf32> to vector<16x32xf32>
    %25 = arith.addf %23, %24 : vector<16x32xf32>
    %26 = arith.truncf %25 : vector<16x32xf32> to vector<16x32xbf16>
    %c0_10 = arith.constant 0 : index
    %c0_11 = arith.constant 0 : index
    %27 = vector.load %arg4[%c0_10, %c0_11] : memref<32x96xbf16, #tpu.memory_space<vmem>>, vector<32x96xbf16>
    %cst_12 = arith.constant dense<0.000000e+00> : vector<16x96xf32>
    %28 = tpu.matmul %26, %27, %cst_12 {dimension_numbers = #tpu.dot_dimension_numbers<[1], [0], [0], [1], [0, 0, 1, 1], [], []>} : vector<16x32xbf16>, vector<32x96xbf16>, vector<16x96xf32> -> vector<16x96xf32>
    %c0_13 = arith.constant 0 : index
    %c0_14 = arith.constant 0 : index
    %29 = vector.load %arg5[%c0_13, %c0_14] : memref<1x96xf32, #tpu.memory_space<vmem>>, vector<1x96xf32>
    %30 = vector.broadcast %29 : vector<1x96xf32> to vector<16x96xf32>
    %31 = arith.addf %28, %30 : vector<16x96xf32>
    %32 = vector.shape_cast %31 : vector<16x96xf32> to vector<2x8x96xf32>
    %33 = tpu.iota {dimensions = array<i32: 0>} : vector<8x8xi32>
    %34 = tpu.iota {dimensions = array<i32: 1>} : vector<8x8xi32>
    %35 = arith.cmpi sle, %34, %33 : vector<8x8xi32>
    %36 = vector.shape_cast %35 : vector<8x8xi1> to vector<1x8x8xi1>
    %c0_15 = arith.constant 0 : index
    %c0_16 = arith.constant 0 : index
    %37 = vector.load %arg6[%c0_15, %c0_16] : memref<32x32xbf16, #tpu.memory_space<vmem>>, vector<32x32xbf16>
    %cst_17 = arith.constant 0.000000e+00 : f32
    %38 = vector.broadcast %cst_17 : f32 to vector<16x32xf32>
    %39 = vector.extract_strided_slice %32 {offsets = [0, 0, 0], sizes = [2, 8, 8], strides = [1, 1, 1]} : vector<2x8x96xf32> to vector<2x8x8xf32>
    %40 = arith.truncf %39 : vector<2x8x8xf32> to vector<2x8x8xbf16>
    %41 = vector.extract_strided_slice %32 {offsets = [0, 0, 32], sizes = [2, 8, 8], strides = [1, 1, 1]} : vector<2x8x96xf32> to vector<2x8x8xf32>
    %42 = arith.truncf %41 : vector<2x8x8xf32> to vector<2x8x8xbf16>
    %43 = vector.extract_strided_slice %32 {offsets = [0, 0, 64], sizes = [2, 8, 8], strides = [1, 1, 1]} : vector<2x8x96xf32> to vector<2x8x8xf32>
    %44 = arith.truncf %43 : vector<2x8x8xf32> to vector<2x8x8xbf16>
    "tpu.trace_start"() <{level = 10 : i32, message = "bqd,bkd->bqk"}> : () -> ()
    %cst_18 = arith.constant dense<0.000000e+00> : vector<2x8x8xf32>
    %45 = tpu.matmul %40, %42, %cst_18 {dimension_numbers = #tpu.dot_dimension_numbers<[2], [2], [1], [1], [0, 0, 0, 1, 1, 1], [0], [0]>} : vector<2x8x8xbf16>, vector<2x8x8xbf16>, vector<2x8x8xf32> -> vector<2x8x8xf32>
    "tpu.trace_stop"() : () -> ()
    %cst_19 = arith.constant 0.353553385 : f32
    %46 = vector.broadcast %cst_19 : f32 to vector<2x8x8xf32>
    %47 = arith.mulf %45, %46 : vector<2x8x8xf32>
    %cst_20 = arith.constant -1.000000e+30 : f32
    %48 = vector.shape_cast %36 : vector<1x8x8xi1> to vector<1x8x8xi1>
    %49 = vector.broadcast %48 : vector<1x8x8xi1> to vector<2x8x8xi1>
    %50 = vector.broadcast %cst_20 : f32 to vector<2x8x8xf32>
    %51 = arith.select %49, %47, %50 : vector<2x8x8xi1>, vector<2x8x8xf32>
    %cst_21 = arith.constant dense<0xFF800000> : vector<2x8xf32>
    %52 = vector.multi_reduction <maximumf>, %51, %cst_21 [2] : vector<2x8x8xf32> to vector<2x8xf32>
    %53 = vector.shape_cast %52 : vector<2x8xf32> to vector<2x8x1xf32>
    %54 = vector.broadcast %53 : vector<2x8x1xf32> to vector<2x8x8xf32>
    %55 = arith.subf %51, %54 : vector<2x8x8xf32>
    %56 = math.exp %55 : vector<2x8x8xf32>
    %cst_22 = arith.constant dense<0.000000e+00> : vector<2x8xf32>
    %57 = vector.multi_reduction <add>, %56, %cst_22 [2] : vector<2x8x8xf32> to vector<2x8xf32>
    %58 = vector.shape_cast %57 : vector<2x8xf32> to vector<2x8x1xf32>
    %59 = tpu.reciprocal %58 {approx = true} : vector<2x8x1xf32> -> vector<2x8x1xf32>
    %60 = vector.broadcast %59 : vector<2x8x1xf32> to vector<2x8x8xf32>
    %61 = arith.mulf %56, %60 : vector<2x8x8xf32>
    %62 = arith.truncf %61 : vector<2x8x8xf32> to vector<2x8x8xbf16>
    "tpu.trace_start"() <{level = 10 : i32, message = "bqk,bkd->bqd"}> : () -> ()
    %cst_23 = arith.constant dense<0.000000e+00> : vector<2x8x8xf32>
    %63 = tpu.matmul %62, %44, %cst_23 {dimension_numbers = #tpu.dot_dimension_numbers<[2], [1], [1], [2], [0, 0, 0, 1, 1, 2], [0], [0]>} : vector<2x8x8xbf16>, vector<2x8x8xbf16>, vector<2x8x8xf32> -> vector<2x8x8xf32>
    "tpu.trace_stop"() : () -> ()
    %64 = vector.shape_cast %63 : vector<2x8x8xf32> to vector<16x8xf32>
    %65 = arith.truncf %64 : vector<16x8xf32> to vector<16x8xbf16>
    %66 = vector.extract_strided_slice %37 {offsets = [0, 0], sizes = [8, 32], strides = [1, 1]} : vector<32x32xbf16> to vector<8x32xbf16>
    %cst_24 = arith.constant dense<0.000000e+00> : vector<16x32xf32>
    %67 = tpu.matmul %65, %66, %cst_24 {dimension_numbers = #tpu.dot_dimension_numbers<[1], [0], [0], [1], [0, 0, 1, 1], [], []>} : vector<16x8xbf16>, vector<8x32xbf16>, vector<16x32xf32> -> vector<16x32xf32>
    %68 = arith.addf %38, %67 : vector<16x32xf32>
    %69 = vector.extract_strided_slice %32 {offsets = [0, 0, 8], sizes = [2, 8, 8], strides = [1, 1, 1]} : vector<2x8x96xf32> to vector<2x8x8xf32>
    %70 = arith.truncf %69 : vector<2x8x8xf32> to vector<2x8x8xbf16>
    %71 = vector.extract_strided_slice %32 {offsets = [0, 0, 40], sizes = [2, 8, 8], strides = [1, 1, 1]} : vector<2x8x96xf32> to vector<2x8x8xf32>
    %72 = arith.truncf %71 : vector<2x8x8xf32> to vector<2x8x8xbf16>
    %73 = vector.extract_strided_slice %32 {offsets = [0, 0, 72], sizes = [2, 8, 8], strides = [1, 1, 1]} : vector<2x8x96xf32> to vector<2x8x8xf32>
    %74 = arith.truncf %73 : vector<2x8x8xf32> to vector<2x8x8xbf16>
    "tpu.trace_start"() <{level = 10 : i32, message = "bqd,bkd->bqk"}> : () -> ()
    %cst_25 = arith.constant dense<0.000000e+00> : vector<2x8x8xf32>
    %75 = tpu.matmul %70, %72, %cst_25 {dimension_numbers = #tpu.dot_dimension_numbers<[2], [2], [1], [1], [0, 0, 0, 1, 1, 1], [0], [0]>} : vector<2x8x8xbf16>, vector<2x8x8xbf16>, vector<2x8x8xf32> -> vector<2x8x8xf32>
    "tpu.trace_stop"() : () -> ()
    %cst_26 = arith.constant 0.353553385 : f32
    %76 = vector.broadcast %cst_26 : f32 to vector<2x8x8xf32>
    %77 = arith.mulf %75, %76 : vector<2x8x8xf32>
    %cst_27 = arith.constant -1.000000e+30 : f32
    %78 = vector.shape_cast %36 : vector<1x8x8xi1> to vector<1x8x8xi1>
    %79 = vector.broadcast %78 : vector<1x8x8xi1> to vector<2x8x8xi1>
    %80 = vector.broadcast %cst_27 : f32 to vector<2x8x8xf32>
    %81 = arith.select %79, %77, %80 : vector<2x8x8xi1>, vector<2x8x8xf32>
    %cst_28 = arith.constant dense<0xFF800000> : vector<2x8xf32>
    %82 = vector.multi_reduction <maximumf>, %81, %cst_28 [2] : vector<2x8x8xf32> to vector<2x8xf32>
    %83 = vector.shape_cast %82 : vector<2x8xf32> to vector<2x8x1xf32>
    %84 = vector.broadcast %83 : vector<2x8x1xf32> to vector<2x8x8xf32>
    %85 = arith.subf %81, %84 : vector<2x8x8xf32>
    %86 = math.exp %85 : vector<2x8x8xf32>
    %cst_29 = arith.constant dense<0.000000e+00> : vector<2x8xf32>
    %87 = vector.multi_reduction <add>, %86, %cst_29 [2] : vector<2x8x8xf32> to vector<2x8xf32>
    %88 = vector.shape_cast %87 : vector<2x8xf32> to vector<2x8x1xf32>
    %89 = tpu.reciprocal %88 {approx = true} : vector<2x8x1xf32> -> vector<2x8x1xf32>
    %90 = vector.broadcast %89 : vector<2x8x1xf32> to vector<2x8x8xf32>
    %91 = arith.mulf %86, %90 : vector<2x8x8xf32>
    %92 = arith.truncf %91 : vector<2x8x8xf32> to vector<2x8x8xbf16>
    "tpu.trace_start"() <{level = 10 : i32, message = "bqk,bkd->bqd"}> : () -> ()
    %cst_30 = arith.constant dense<0.000000e+00> : vector<2x8x8xf32>
    %93 = tpu.matmul %92, %74, %cst_30 {dimension_numbers = #tpu.dot_dimension_numbers<[2], [1], [1], [2], [0, 0, 0, 1, 1, 2], [0], [0]>} : vector<2x8x8xbf16>, vector<2x8x8xbf16>, vector<2x8x8xf32> -> vector<2x8x8xf32>
    "tpu.trace_stop"() : () -> ()
    %94 = vector.shape_cast %93 : vector<2x8x8xf32> to vector<16x8xf32>
    %95 = arith.truncf %94 : vector<16x8xf32> to vector<16x8xbf16>
    %96 = vector.extract_strided_slice %37 {offsets = [8, 0], sizes = [8, 32], strides = [1, 1]} : vector<32x32xbf16> to vector<8x32xbf16>
    %cst_31 = arith.constant dense<0.000000e+00> : vector<16x32xf32>
    %97 = tpu.matmul %95, %96, %cst_31 {dimension_numbers = #tpu.dot_dimension_numbers<[1], [0], [0], [1], [0, 0, 1, 1], [], []>} : vector<16x8xbf16>, vector<8x32xbf16>, vector<16x32xf32> -> vector<16x32xf32>
    %98 = arith.addf %68, %97 : vector<16x32xf32>
    %99 = vector.extract_strided_slice %32 {offsets = [0, 0, 16], sizes = [2, 8, 8], strides = [1, 1, 1]} : vector<2x8x96xf32> to vector<2x8x8xf32>
    %100 = arith.truncf %99 : vector<2x8x8xf32> to vector<2x8x8xbf16>
    %101 = vector.extract_strided_slice %32 {offsets = [0, 0, 48], sizes = [2, 8, 8], strides = [1, 1, 1]} : vector<2x8x96xf32> to vector<2x8x8xf32>
    %102 = arith.truncf %101 : vector<2x8x8xf32> to vector<2x8x8xbf16>
    %103 = vector.extract_strided_slice %32 {offsets = [0, 0, 80], sizes = [2, 8, 8], strides = [1, 1, 1]} : vector<2x8x96xf32> to vector<2x8x8xf32>
    %104 = arith.truncf %103 : vector<2x8x8xf32> to vector<2x8x8xbf16>
    "tpu.trace_start"() <{level = 10 : i32, message = "bqd,bkd->bqk"}> : () -> ()
    %cst_32 = arith.constant dense<0.000000e+00> : vector<2x8x8xf32>
    %105 = tpu.matmul %100, %102, %cst_32 {dimension_numbers = #tpu.dot_dimension_numbers<[2], [2], [1], [1], [0, 0, 0, 1, 1, 1], [0], [0]>} : vector<2x8x8xbf16>, vector<2x8x8xbf16>, vector<2x8x8xf32> -> vector<2x8x8xf32>
    "tpu.trace_stop"() : () -> ()
    %cst_33 = arith.constant 0.353553385 : f32
    %106 = vector.broadcast %cst_33 : f32 to vector<2x8x8xf32>
    %107 = arith.mulf %105, %106 : vector<2x8x8xf32>
    %cst_34 = arith.constant -1.000000e+30 : f32
    %108 = vector.shape_cast %36 : vector<1x8x8xi1> to vector<1x8x8xi1>
    %109 = vector.broadcast %108 : vector<1x8x8xi1> to vector<2x8x8xi1>
    %110 = vector.broadcast %cst_34 : f32 to vector<2x8x8xf32>
    %111 = arith.select %109, %107, %110 : vector<2x8x8xi1>, vector<2x8x8xf32>
    %cst_35 = arith.constant dense<0xFF800000> : vector<2x8xf32>
    %112 = vector.multi_reduction <maximumf>, %111, %cst_35 [2] : vector<2x8x8xf32> to vector<2x8xf32>
    %113 = vector.shape_cast %112 : vector<2x8xf32> to vector<2x8x1xf32>
    %114 = vector.broadcast %113 : vector<2x8x1xf32> to vector<2x8x8xf32>
    %115 = arith.subf %111, %114 : vector<2x8x8xf32>
    %116 = math.exp %115 : vector<2x8x8xf32>
    %cst_36 = arith.constant dense<0.000000e+00> : vector<2x8xf32>
    %117 = vector.multi_reduction <add>, %116, %cst_36 [2] : vector<2x8x8xf32> to vector<2x8xf32>
    %118 = vector.shape_cast %117 : vector<2x8xf32> to vector<2x8x1xf32>
    %119 = tpu.reciprocal %118 {approx = true} : vector<2x8x1xf32> -> vector<2x8x1xf32>
    %120 = vector.broadcast %119 : vector<2x8x1xf32> to vector<2x8x8xf32>
    %121 = arith.mulf %116, %120 : vector<2x8x8xf32>
    %122 = arith.truncf %121 : vector<2x8x8xf32> to vector<2x8x8xbf16>
    "tpu.trace_start"() <{level = 10 : i32, message = "bqk,bkd->bqd"}> : () -> ()
    %cst_37 = arith.constant dense<0.000000e+00> : vector<2x8x8xf32>
    %123 = tpu.matmul %122, %104, %cst_37 {dimension_numbers = #tpu.dot_dimension_numbers<[2], [1], [1], [2], [0, 0, 0, 1, 1, 2], [0], [0]>} : vector<2x8x8xbf16>, vector<2x8x8xbf16>, vector<2x8x8xf32> -> vector<2x8x8xf32>
    "tpu.trace_stop"() : () -> ()
    %124 = vector.shape_cast %123 : vector<2x8x8xf32> to vector<16x8xf32>
    %125 = arith.truncf %124 : vector<16x8xf32> to vector<16x8xbf16>
    %126 = vector.extract_strided_slice %37 {offsets = [16, 0], sizes = [8, 32], strides = [1, 1]} : vector<32x32xbf16> to vector<8x32xbf16>
    %cst_38 = arith.constant dense<0.000000e+00> : vector<16x32xf32>
    %127 = tpu.matmul %125, %126, %cst_38 {dimension_numbers = #tpu.dot_dimension_numbers<[1], [0], [0], [1], [0, 0, 1, 1], [], []>} : vector<16x8xbf16>, vector<8x32xbf16>, vector<16x32xf32> -> vector<16x32xf32>
    %128 = arith.addf %98, %127 : vector<16x32xf32>
    %129 = vector.extract_strided_slice %32 {offsets = [0, 0, 24], sizes = [2, 8, 8], strides = [1, 1, 1]} : vector<2x8x96xf32> to vector<2x8x8xf32>
    %130 = arith.truncf %129 : vector<2x8x8xf32> to vector<2x8x8xbf16>
    %131 = vector.extract_strided_slice %32 {offsets = [0, 0, 56], sizes = [2, 8, 8], strides = [1, 1, 1]} : vector<2x8x96xf32> to vector<2x8x8xf32>
    %132 = arith.truncf %131 : vector<2x8x8xf32> to vector<2x8x8xbf16>
    %133 = vector.extract_strided_slice %32 {offsets = [0, 0, 88], sizes = [2, 8, 8], strides = [1, 1, 1]} : vector<2x8x96xf32> to vector<2x8x8xf32>
    %134 = arith.truncf %133 : vector<2x8x8xf32> to vector<2x8x8xbf16>
    "tpu.trace_start"() <{level = 10 : i32, message = "bqd,bkd->bqk"}> : () -> ()
    %cst_39 = arith.constant dense<0.000000e+00> : vector<2x8x8xf32>
    %135 = tpu.matmul %130, %132, %cst_39 {dimension_numbers = #tpu.dot_dimension_numbers<[2], [2], [1], [1], [0, 0, 0, 1, 1, 1], [0], [0]>} : vector<2x8x8xbf16>, vector<2x8x8xbf16>, vector<2x8x8xf32> -> vector<2x8x8xf32>
    "tpu.trace_stop"() : () -> ()
    %cst_40 = arith.constant 0.353553385 : f32
    %136 = vector.broadcast %cst_40 : f32 to vector<2x8x8xf32>
    %137 = arith.mulf %135, %136 : vector<2x8x8xf32>
    %cst_41 = arith.constant -1.000000e+30 : f32
    %138 = vector.shape_cast %36 : vector<1x8x8xi1> to vector<1x8x8xi1>
    %139 = vector.broadcast %138 : vector<1x8x8xi1> to vector<2x8x8xi1>
    %140 = vector.broadcast %cst_41 : f32 to vector<2x8x8xf32>
    %141 = arith.select %139, %137, %140 : vector<2x8x8xi1>, vector<2x8x8xf32>
    %cst_42 = arith.constant dense<0xFF800000> : vector<2x8xf32>
    %142 = vector.multi_reduction <maximumf>, %141, %cst_42 [2] : vector<2x8x8xf32> to vector<2x8xf32>
    %143 = vector.shape_cast %142 : vector<2x8xf32> to vector<2x8x1xf32>
    %144 = vector.broadcast %143 : vector<2x8x1xf32> to vector<2x8x8xf32>
    %145 = arith.subf %141, %144 : vector<2x8x8xf32>
    %146 = math.exp %145 : vector<2x8x8xf32>
    %cst_43 = arith.constant dense<0.000000e+00> : vector<2x8xf32>
    %147 = vector.multi_reduction <add>, %146, %cst_43 [2] : vector<2x8x8xf32> to vector<2x8xf32>
    %148 = vector.shape_cast %147 : vector<2x8xf32> to vector<2x8x1xf32>
    %149 = tpu.reciprocal %148 {approx = true} : vector<2x8x1xf32> -> vector<2x8x1xf32>
    %150 = vector.broadcast %149 : vector<2x8x1xf32> to vector<2x8x8xf32>
    %151 = arith.mulf %146, %150 : vector<2x8x8xf32>
    %152 = arith.truncf %151 : vector<2x8x8xf32> to vector<2x8x8xbf16>
    "tpu.trace_start"() <{level = 10 : i32, message = "bqk,bkd->bqd"}> : () -> ()
    %cst_44 = arith.constant dense<0.000000e+00> : vector<2x8x8xf32>
    %153 = tpu.matmul %152, %134, %cst_44 {dimension_numbers = #tpu.dot_dimension_numbers<[2], [1], [1], [2], [0, 0, 0, 1, 1, 2], [0], [0]>} : vector<2x8x8xbf16>, vector<2x8x8xbf16>, vector<2x8x8xf32> -> vector<2x8x8xf32>
    "tpu.trace_stop"() : () -> ()
    %154 = vector.shape_cast %153 : vector<2x8x8xf32> to vector<16x8xf32>
    %155 = arith.truncf %154 : vector<16x8xf32> to vector<16x8xbf16>
    %156 = vector.extract_strided_slice %37 {offsets = [24, 0], sizes = [8, 32], strides = [1, 1]} : vector<32x32xbf16> to vector<8x32xbf16>
    %cst_45 = arith.constant dense<0.000000e+00> : vector<16x32xf32>
    %157 = tpu.matmul %155, %156, %cst_45 {dimension_numbers = #tpu.dot_dimension_numbers<[1], [0], [0], [1], [0, 0, 1, 1], [], []>} : vector<16x8xbf16>, vector<8x32xbf16>, vector<16x32xf32> -> vector<16x32xf32>
    %158 = arith.addf %128, %157 : vector<16x32xf32>
    %159 = arith.addf %1, %158 : vector<16x32xf32>
    %c0_46 = arith.constant 0 : index
    %c0_47 = arith.constant 0 : index
    %160 = vector.load %arg7[%c0_46, %c0_47] : memref<1x32xf32, #tpu.memory_space<vmem>>, vector<1x32xf32>
    %161 = vector.broadcast %160 : vector<1x32xf32> to vector<16x32xf32>
    %162 = arith.addf %159, %161 : vector<16x32xf32>
    %c0_48 = arith.constant 0 : index
    %c0_49 = arith.constant 0 : index
    %163 = vector.load %arg8[%c0_48, %c0_49] : memref<1x32xf32, #tpu.memory_space<vmem>>, vector<1x32xf32>
    %c0_50 = arith.constant 0 : index
    %c0_51 = arith.constant 0 : index
    %164 = vector.load %arg9[%c0_50, %c0_51] : memref<1x32xf32, #tpu.memory_space<vmem>>, vector<1x32xf32>
    %cst_52 = arith.constant dense<0.000000e+00> : vector<16xf32>
    %165 = vector.multi_reduction <add>, %162, %cst_52 [1] : vector<16x32xf32> to vector<16xf32>
    %166 = vector.shape_cast %165 : vector<16xf32> to vector<16x1xf32>
    %cst_53 = arith.constant 3.200000e+01 : f32
    %167 = vector.broadcast %cst_53 : f32 to vector<16x1xf32>
    %168 = arith.divf %166, %167 : vector<16x1xf32>
    %169 = vector.broadcast %168 : vector<16x1xf32> to vector<16x32xf32>
    %170 = arith.subf %162, %169 : vector<16x32xf32>
    %171 = arith.mulf %170, %170 : vector<16x32xf32>
    %cst_54 = arith.constant dense<0.000000e+00> : vector<16xf32>
    %172 = vector.multi_reduction <add>, %171, %cst_54 [1] : vector<16x32xf32> to vector<16xf32>
    %173 = vector.shape_cast %172 : vector<16xf32> to vector<16x1xf32>
    %cst_55 = arith.constant 3.200000e+01 : f32
    %174 = vector.broadcast %cst_55 : f32 to vector<16x1xf32>
    %175 = arith.divf %173, %174 : vector<16x1xf32>
    %176 = vector.broadcast %168 : vector<16x1xf32> to vector<16x32xf32>
    %177 = arith.subf %162, %176 : vector<16x32xf32>
    %cst_56 = arith.constant 9.99999974E-6 : f32
    %178 = vector.broadcast %cst_56 : f32 to vector<16x1xf32>
    %179 = arith.addf %175, %178 : vector<16x1xf32>
    %180 = math.rsqrt %179 : vector<16x1xf32>
    %181 = vector.broadcast %180 : vector<16x1xf32> to vector<16x32xf32>
    %182 = arith.mulf %177, %181 : vector<16x32xf32>
    %183 = vector.broadcast %163 : vector<1x32xf32> to vector<16x32xf32>
    %184 = arith.mulf %182, %183 : vector<16x32xf32>
    %185 = vector.broadcast %164 : vector<1x32xf32> to vector<16x32xf32>
    %186 = arith.addf %184, %185 : vector<16x32xf32>
    %187 = arith.truncf %186 : vector<16x32xf32> to vector<16x32xbf16>
    %c0_57 = arith.constant 0 : index
    %c0_58 = arith.constant 0 : index
    %188 = vector.load %arg10[%c0_57, %c0_58] : memref<32x128xbf16, #tpu.memory_space<vmem>>, vector<32x128xbf16>
    %cst_59 = arith.constant dense<0.000000e+00> : vector<16x128xf32>
    %189 = tpu.matmul %187, %188, %cst_59 {dimension_numbers = #tpu.dot_dimension_numbers<[1], [0], [0], [1], [0, 0, 1, 1], [], []>} : vector<16x32xbf16>, vector<32x128xbf16>, vector<16x128xf32> -> vector<16x128xf32>
    %c0_60 = arith.constant 0 : index
    %c0_61 = arith.constant 0 : index
    %190 = vector.load %arg11[%c0_60, %c0_61] : memref<1x128xf32, #tpu.memory_space<vmem>>, vector<1x128xf32>
    %191 = vector.broadcast %190 : vector<1x128xf32> to vector<16x128xf32>
    %192 = arith.addf %189, %191 : vector<16x128xf32>
    %cst_62 = arith.constant 1.702000e+00 : f32
    %193 = vector.broadcast %cst_62 : f32 to vector<16x128xf32>
    %194 = arith.mulf %193, %192 : vector<16x128xf32>
    %195 = arith.negf %194 : vector<16x128xf32>
    %196 = math.exp %195 : vector<16x128xf32>
    %cst_63 = arith.constant 1.000000e+00 : f32
    %197 = vector.broadcast %cst_63 : f32 to vector<16x128xf32>
    %198 = arith.addf %197, %196 : vector<16x128xf32>
    %199 = arith.divf %197, %198 : vector<16x128xf32>
    %200 = arith.mulf %192, %199 : vector<16x128xf32>
    %201 = arith.truncf %200 : vector<16x128xf32> to vector<16x128xbf16>
    %c0_64 = arith.constant 0 : index
    %c0_65 = arith.constant 0 : index
    %202 = vector.load %arg12[%c0_64, %c0_65] : memref<128x32xbf16, #tpu.memory_space<vmem>>, vector<128x32xbf16>
    %cst_66 = arith.constant dense<0.000000e+00> : vector<16x32xf32>
    %203 = tpu.matmul %201, %202, %cst_66 {dimension_numbers = #tpu.dot_dimension_numbers<[1], [0], [0], [1], [0, 0, 1, 1], [], []>} : vector<16x128xbf16>, vector<128x32xbf16>, vector<16x32xf32> -> vector<16x32xf32>
    %c0_67 = arith.constant 0 : index
    %c0_68 = arith.constant 0 : index
    %204 = vector.load %arg13[%c0_67, %c0_68] : memref<1x32xf32, #tpu.memory_space<vmem>>, vector<1x32xf32>
    %205 = vector.broadcast %204 : vector<1x32xf32> to vector<16x32xf32>
    %206 = arith.addf %203, %205 : vector<16x32xf32>
    %207 = arith.addf %162, %206 : vector<16x32xf32>
    %208 = vector.shape_cast %207 : vector<16x32xf32> to vector<2x8x32xf32>
    %c0_69 = arith.constant 0 : index
    %c0_70 = arith.constant 0 : index
    %c0_71 = arith.constant 0 : index
    %209 = vector.load %arg14[%c0_69, %c0_70, %c0_71] : memref<2x8x32xf32, #tpu.memory_space<vmem>>, vector<2x8x32xf32>
    tpu.vector_store %arg14[%c0_69, %c0_70, %c0_71], %208 {strides = array<i32>} : memref<2x8x32xf32, #tpu.memory_space<vmem>>, vector<2x8x32xf32>,
    return
  }
  func.func @transform_0(%arg0: i32) -> (i32, i32, i32) {
    %c0_i32 = arith.constant 0 : i32
    %c0_i32_0 = arith.constant 0 : i32
    %c0_i32_1 = arith.constant 0 : i32
    return %arg0, %c0_i32, %c0_i32_0 : i32, i32, i32
  }
  func.func @transform_1(%arg0: i32) -> (i32, i32) {
    %c0_i32 = arith.constant 0 : i32
    %c0_i32_0 = arith.constant 0 : i32
    %c0_i32_1 = arith.constant 0 : i32
    return %c0_i32, %c0_i32_0 : i32, i32
  }
  func.func @transform_2(%arg0: i32) -> (i32, i32) {
    %c0_i32 = arith.constant 0 : i32
    %c0_i32_0 = arith.constant 0 : i32
    %c0_i32_1 = arith.constant 0 : i32
    return %c0_i32, %c0_i32_0 : i32, i32
  }
  func.func @transform_3(%arg0: i32) -> (i32, i32) {
    %c0_i32 = arith.constant 0 : i32
    %c0_i32_0 = arith.constant 0 : i32
    %c0_i32_1 = arith.constant 0 : i32
    return %c0_i32, %c0_i32_0 : i32, i32
  }
  func.func @transform_4(%arg0: i32) -> (i32, i32) {
    %c0_i32 = arith.constant 0 : i32
    %c0_i32_0 = arith.constant 0 : i32
    %c0_i32_1 = arith.constant 0 : i32
    return %c0_i32, %c0_i32_0 : i32, i32
  }
  func.func @transform_5(%arg0: i32) -> (i32, i32) {
    %c0_i32 = arith.constant 0 : i32
    %c0_i32_0 = arith.constant 0 : i32
    %c0_i32_1 = arith.constant 0 : i32
    return %c0_i32, %c0_i32_0 : i32, i32
  }
  func.func @transform_6(%arg0: i32) -> (i32, i32) {
    %c0_i32 = arith.constant 0 : i32
    %c0_i32_0 = arith.constant 0 : i32
    %c0_i32_1 = arith.constant 0 : i32
    return %c0_i32, %c0_i32_0 : i32, i32
  }
  func.func @transform_7(%arg0: i32) -> (i32, i32) {
    %c0_i32 = arith.constant 0 : i32
    %c0_i32_0 = arith.constant 0 : i32
    %c0_i32_1 = arith.constant 0 : i32
    return %c0_i32, %c0_i32_0 : i32, i32
  }
  func.func @transform_8(%arg0: i32) -> (i32, i32) {
    %c0_i32 = arith.constant 0 : i32
    %c0_i32_0 = arith.constant 0 : i32
    %c0_i32_1 = arith.constant 0 : i32
    return %c0_i32, %c0_i32_0 : i32, i32
  }
  func.func @transform_9(%arg0: i32) -> (i32, i32) {
    %c0_i32 = arith.constant 0 : i32
    %c0_i32_0 = arith.constant 0 : i32
    %c0_i32_1 = arith.constant 0 : i32
    return %c0_i32, %c0_i32_0 : i32, i32
  }
  func.func @transform_10(%arg0: i32) -> (i32, i32) {
    %c0_i32 = arith.constant 0 : i32
    %c0_i32_0 = arith.constant 0 : i32
    %c0_i32_1 = arith.constant 0 : i32
    return %c0_i32, %c0_i32_0 : i32, i32
  }
  func.func @transform_11(%arg0: i32) -> (i32, i32) {
    %c0_i32 = arith.constant 0 : i32
    %c0_i32_0 = arith.constant 0 : i32
    %c0_i32_1 = arith.constant 0 : i32
    return %c0_i32, %c0_i32_0 : i32, i32
  }
  func.func @transform_12(%arg0: i32) -> (i32, i32) {
    %c0_i32 = arith.constant 0 : i32
    %c0_i32_0 = arith.constant 0 : i32
    %c0_i32_1 = arith.constant 0 : i32
    return %c0_i32, %c0_i32_0 : i32, i32
  }
  func.func @transform_13(%arg0: i32) -> (i32, i32, i32) {
    %c0_i32 = arith.constant 0 : i32
    %c0_i32_0 = arith.constant 0 : i32
    %c0_i32_1 = arith.constant 0 : i32
    return %arg0, %c0_i32, %c0_i32_0 : i32, i32, i32
  }
}

module attributes {stable_mosaic.version = 11 : i64} {
  func.func @clip_layer_kernel(%arg0: i32, %arg1: memref<2x8x32xf32, #tpu.memory_space<vmem>>, %arg2: memref<1x32xf32, #tpu.memory_space<vmem>>, %arg3: memref<1x32xf32, #tpu.memory_space<vmem>>, %arg4: memref<32x96xbf16, #tpu.memory_space<vmem>>, %arg5: memref<1x96xf32, #tpu.memory_space<vmem>>, %arg6: memref<32x32xbf16, #tpu.memory_space<vmem>>, %arg7: memref<1x32xf32, #tpu.memory_space<vmem>>, %arg8: memref<1x32xf32, #tpu.memory_space<vmem>>, %arg9: memref<1x32xf32, #tpu.memory_space<vmem>>, %arg10: memref<32x128xbf16, #tpu.memory_space<vmem>>, %arg11: memref<1x128xf32, #tpu.memory_space<vmem>>, %arg12: memref<128x32xbf16, #tpu.memory_space<vmem>>, %arg13: memref<1x32xf32, #tpu.memory_space<vmem>>, %arg14: memref<2x8x32xf32, #tpu.memory_space<vmem>>) attributes {dimension_semantics = [#tpu.dimension_semantics<parallel>], iteration_bounds = array<i64: 1>, scalar_prefetch = 0 : i64, scratch_operands = 0 : i64, tpu.core_type = #tpu.core_type<tc>, window_params = [{transform_indices = @transform_0, window_bounds = array<i64: 2, 8, 32>}, {pipeline_mode = #tpu.pipeline_mode<synchronous>, transform_indices = @transform_1, window_bounds = array<i64: 1, 32>}, {pipeline_mode = #tpu.pipeline_mode<synchronous>, transform_indices = @transform_2, window_bounds = array<i64: 1, 32>}, {pipeline_mode = #tpu.pipeline_mode<synchronous>, transform_indices = @transform_3, window_bounds = array<i64: 32, 96>}, {pipeline_mode = #tpu.pipeline_mode<synchronous>, transform_indices = @transform_4, window_bounds = array<i64: 1, 96>}, {pipeline_mode = #tpu.pipeline_mode<synchronous>, transform_indices = @transform_5, window_bounds = array<i64: 32, 32>}, {pipeline_mode = #tpu.pipeline_mode<synchronous>, transform_indices = @transform_6, window_bounds = array<i64: 1, 32>}, {pipeline_mode = #tpu.pipeline_mode<synchronous>, transform_indices = @transform_7, window_bounds = array<i64: 1, 32>}, {pipeline_mode = #tpu.pipeline_mode<synchronous>, transform_indices = @transform_8, window_bounds = array<i64: 1, 32>}, {pipeline_mode = #tpu.pipeline_mode<synchronous>, transform_indices = @transform_9, window_bounds = array<i64: 32, 128>}, {pipeline_mode = #tpu.pipeline_mode<synchronous>, transform_indices = @transform_10, window_bounds = array<i64: 1, 128>}, {pipeline_mode = #tpu.pipeline_mode<synchronous>, transform_indices = @transform_11, window_bounds = array<i64: 128, 32>}, {pipeline_mode = #tpu.pipeline_mode<synchronous>, transform_indices = @transform_12, window_bounds = array<i64: 1, 32>}, {transform_indices = @transform_13, window_bounds = array<i64: 2, 8, 32>}]} {
    %c0 = arith.constant 0 : index
    %c0_0 = arith.constant 0 : index
    %c0_1 = arith.constant 0 : index
    %0 = vector.load %arg1[%c0, %c0_0, %c0_1] : memref<2x8x32xf32, #tpu.memory_space<vmem>>, vector<2x8x32xf32>
    %1 = vector.shape_cast %0 : vector<2x8x32xf32> to vector<16x32xf32>
    %c0_2 = arith.constant 0 : index
    %c0_3 = arith.constant 0 : index
    %2 = vector.load %arg2[%c0_2, %c0_3] : memref<1x32xf32, #tpu.memory_space<vmem>>, vector<1x32xf32>
    %c0_4 = arith.constant 0 : index
    %c0_5 = arith.constant 0 : index
    %3 = vector.load %arg3[%c0_4, %c0_5] : memref<1x32xf32, #tpu.memory_space<vmem>>, vector<1x32xf32>
    %cst = arith.constant dense<0.000000e+00> : vector<16xf32>
    %4 = vector.multi_reduction <add>, %1, %cst [1] : vector<16x32xf32> to vector<16xf32>
    %5 = vector.shape_cast %4 : vector<16xf32> to vector<16x1xf32>
    %cst_6 = arith.constant 3.200000e+01 : f32
    %6 = vector.broadcast %cst_6 : f32 to vector<16x1xf32>
    %7 = arith.divf %5, %6 : vector<16x1xf32>
    %8 = vector.broadcast %7 : vector<16x1xf32> to vector<16x32xf32>
    %9 = arith.subf %1, %8 : vector<16x32xf32>
    %10 = arith.mulf %9, %9 : vector<16x32xf32>
    %cst_7 = arith.constant dense<0.000000e+00> : vector<16xf32>
    %11 = vector.multi_reduction <add>, %10, %cst_7 [1] : vector<16x32xf32> to vector<16xf32>
    %12 = vector.shape_cast %11 : vector<16xf32> to vector<16x1xf32>
    %cst_8 = arith.constant 3.200000e+01 : f32
    %13 = vector.broadcast %cst_8 : f32 to vector<16x1xf32>
    %14 = arith.divf %12, %13 : vector<16x1xf32>
    %15 = vector.broadcast %7 : vector<16x1xf32> to vector<16x32xf32>
    %16 = arith.subf %1, %15 : vector<16x32xf32>
    %cst_9 = arith.constant 9.99999974E-6 : f32
    %17 = vector.broadcast %cst_9 : f32 to vector<16x1xf32>
    %18 = arith.addf %14, %17 : vector<16x1xf32>
    %19 = math.rsqrt %18 : vector<16x1xf32>
    %20 = vector.broadcast %19 : vector<16x1xf32> to vector<16x32xf32>
    %21 = arith.mulf %16, %20 : vector<16x32xf32>
    %22 = vector.broadcast %2 : vector<1x32xf32> to vector<16x32xf32>
    %23 = arith.mulf %21, %22 : vector<16x32xf32>
    %24 = vector.broadcast %3 : vector<1x32xf32> to vector<16x32xf32>
    %25 = arith.addf %23, %24 : vector<16x32xf32>
    %26 = arith.truncf %25 : vector<16x32xf32> to vector<16x32xbf16>
    %c0_10 = arith.constant 0 : index
    %c0_11 = arith.constant 0 : index
    %27 = vector.load %arg4[%c0_10, %c0_11] : memref<32x96xbf16, #tpu.memory_space<vmem>>, vector<32x96xbf16>
    %cst_12 = arith.constant dense<0.000000e+00> : vector<16x96xf32>
    %28 = tpu.matmul %26, %27, %cst_12 {dimension_numbers = #tpu.dot_dimension_numbers<[1], [0], [0], [1], [0, 0, 1, 1], [], []>} : vector<16x32xbf16>, vector<32x96xbf16>, vector<16x96xf32> -> vector<16x96xf32>
    %c0_13 = arith.constant 0 : index
    %c0_14 = arith.constant 0 : index
    %29 = vector.load %arg5[%c0_13, %c0_14] : memref<1x96xf32, #tpu.memory_space<vmem>>, vector<1x96xf32>
    %30 = vector.broadcast %29 : vector<1x96xf32> to vector<16x96xf32>
    %31 = arith.addf %28, %30 : vector<16x96xf32>
    %32 = vector.shape_cast %31 : vector<16x96xf32> to vector<2x8x96xf32>
    %33 = tpu.iota {dimensions = array<i32: 0>} : vector<8x8xi32>
    %34 = tpu.iota {dimensions = array<i32: 1>} : vector<8x8xi32>
    %35 = arith.cmpi sle, %34, %33 : vector<8x8xi32>
    %36 = vector.shape_cast %35 : vector<8x8xi1> to vector<1x8x8xi1>
    %c0_15 = arith.constant 0 : index
    %c0_16 = arith.constant 0 : index
    %37 = vector.load %arg6[%c0_15, %c0_16] : memref<32x32xbf16, #tpu.memory_space<vmem>>, vector<32x32xbf16>
    %cst_17 = arith.constant 0.000000e+00 : f32
    %38 = vector.broadcast %cst_17 : f32 to vector<16x32xf32>
    %39 = vector.extract_strided_slice %32 {offsets = [0, 0, 0], sizes = [2, 8, 8], strides = [1, 1, 1]} : vector<2x8x96xf32> to vector<2x8x8xf32>
    %40 = arith.truncf %39 : vector<2x8x8xf32> to vector<2x8x8xbf16>
    %41 = vector.extract_strided_slice %32 {offsets = [0, 0, 32], sizes = [2, 8, 8], strides = [1, 1, 1]} : vector<2x8x96xf32> to vector<2x8x8xf32>
    %42 = arith.truncf %41 : vector<2x8x8xf32> to vector<2x8x8xbf16>
    %43 = vector.extract_strided_slice %32 {offsets = [0, 0, 64], sizes = [2, 8, 8], strides = [1, 1, 1]} : vector<2x8x96xf32> to vector<2x8x8xf32>
    %44 = arith.truncf %43 : vector<2x8x8xf32> to vector<2x8x8xbf16>
    "tpu.trace_start"() <{level = 10 : i32, message = "bqd,bkd->bqk"}> : () -> ()
    %cst_18 = arith.constant dense<0.000000e+00> : vector<2x8x8xf32>
    %45 = tpu.matmul %40, %42, %cst_18 {dimension_numbers = #tpu.dot_dimension_numbers<[2], [2], [1], [1], [0, 0, 0, 1, 1, 1], [0], [0]>} : vector<2x8x8xbf16>, vector<2x8x8xbf16>, vector<2x8x8xf32> -> vector<2x8x8xf32>
    "tpu.trace_stop"() : () -> ()
    %cst_19 = arith.constant 0.353553385 : f32
    %46 = vector.broadcast %cst_19 : f32 to vector<2x8x8xf32>
    %47 = arith.mulf %45, %46 : vector<2x8x8xf32>
    %cst_20 = arith.constant -1.000000e+30 : f32
    %48 = vector.shape_cast %36 : vector<1x8x8xi1> to vector<1x8x8xi1>
    %49 = vector.broadcast %48 : vector<1x8x8xi1> to vector<2x8x8xi1>
    %50 = vector.broadcast %cst_20 : f32 to vector<2x8x8xf32>
    %51 = arith.select %49, %47, %50 : vector<2x8x8xi1>, vector<2x8x8xf32>
    %cst_21 = arith.constant dense<0xFF800000> : vector<2x8xf32>
    %52 = vector.multi_reduction <maximumf>, %51, %cst_21 [2] : vector<2x8x8xf32> to vector<2x8xf32>
    %53 = vector.shape_cast %52 : vector<2x8xf32> to vector<2x8x1xf32>
    %54 = vector.broadcast %53 : vector<2x8x1xf32> to vector<2x8x8xf32>
    %55 = arith.subf %51, %54 : vector<2x8x8xf32>
    %56 = math.exp %55 : vector<2x8x8xf32>
    %cst_22 = arith.constant dense<0.000000e+00> : vector<2x8xf32>
    %57 = vector.multi_reduction <add>, %56, %cst_22 [2] : vector<2x8x8xf32> to vector<2x8xf32>
    %58 = vector.shape_cast %57 : vector<2x8xf32> to vector<2x8x1xf32>
    %59 = tpu.reciprocal %58 {approx = true} : vector<2x8x1xf32> -> vector<2x8x1xf32>
    %60 = vector.broadcast %59 : vector<2x8x1xf32> to vector<2x8x8xf32>
    %61 = arith.mulf %56, %60 : vector<2x8x8xf32>
    %62 = arith.truncf %61 : vector<2x8x8xf32> to vector<2x8x8xbf16>
    "tpu.trace_start"() <{level = 10 : i32, message = "bqk,bkd->bqd"}> : () -> ()
    %cst_23 = arith.constant dense<0.000000e+00> : vector<2x8x8xf32>
    %63 = tpu.matmul %62, %44, %cst_23 {dimension_numbers = #tpu.dot_dimension_numbers<[2], [1], [1], [2], [0, 0, 0, 1, 1, 2], [0], [0]>} : vector<2x8x8xbf16>, vector<2x8x8xbf16>, vector<2x8x8xf32> -> vector<2x8x8xf32>
    "tpu.trace_stop"() : () -> ()
    %64 = vector.shape_cast %63 : vector<2x8x8xf32> to vector<16x8xf32>
    %65 = arith.truncf %64 : vector<16x8xf32> to vector<16x8xbf16>
    %66 = vector.extract_strided_slice %37 {offsets = [0, 0], sizes = [8, 32], strides = [1, 1]} : vector<32x32xbf16> to vector<8x32xbf16>
    %cst_24 = arith.constant dense<0.000000e+00> : vector<16x32xf32>
    %67 = tpu.matmul %65, %66, %cst_24 {dimension_numbers = #tpu.dot_dimension_numbers<[1], [0], [0], [1], [0, 0, 1, 1], [], []>} : vector<16x8xbf16>, vector<8x32xbf16>, vector<16x32xf32> -> vector<16x32xf32>
    %68 = arith.addf %38, %67 : vector<16x32xf32>
    %69 = vector.extract_strided_slice %32 {offsets = [0, 0, 8], sizes = [2, 8, 8], strides = [1, 1, 1]} : vector<2x8x96xf32> to vector<2x8x8xf32>
    %70 = arith.truncf %69 : vector<2x8x8xf32> to vector<2x8x8xbf16>
    %71 = vector.extract_strided_slice %32 {offsets = [0, 0, 40], sizes = [2, 8, 8], strides = [1, 1, 1]} : vector<2x8x96xf32> to vector<2x8x8xf32>
    %72 = arith.truncf %71 : vector<2x8x8xf32> to vector<2x8x8xbf16>
    %73 = vector.extract_strided_slice %32 {offsets = [0, 0, 72], sizes = [2, 8, 8], strides = [1, 1, 1]} : vector<2x8x96xf32> to vector<2x8x8xf32>
    %74 = arith.truncf %73 : vector<2x8x8xf32> to vector<2x8x8xbf16>
    "tpu.trace_start"() <{level = 10 : i32, message = "bqd,bkd->bqk"}> : () -> ()
    %cst_25 = arith.constant dense<0.000000e+00> : vector<2x8x8xf32>
    %75 = tpu.matmul %70, %72, %cst_25 {dimension_numbers = #tpu.dot_dimension_numbers<[2], [2], [1], [1], [0, 0, 0, 1, 1, 1], [0], [0]>} : vector<2x8x8xbf16>, vector<2x8x8xbf16>, vector<2x8x8xf32> -> vector<2x8x8xf32>
    "tpu.trace_stop"() : () -> ()
    %cst_26 = arith.constant 0.353553385 : f32
    %76 = vector.broadcast %cst_26 : f32 to vector<2x8x8xf32>
    %77 = arith.mulf %75, %76 : vector<2x8x8xf32>
    %cst_27 = arith.constant -1.000000e+30 : f32
    %78 = vector.shape_cast %36 : vector<1x8x8xi1> to vector<1x8x8xi1>
    %79 = vector.broadcast %78 : vector<1x8x8xi1> to vector<2x8x8xi1>
    %80 = vector.broadcast %cst_27 : f32 to vector<2x8x8xf32>
    %81 = arith.select %79, %77, %80 : vector<2x8x8xi1>, vector<2x8x8xf32>
    %cst_28 = arith.constant dense<0xFF800000> : vector<2x8xf32>
    %82 = vector.multi_reduction <maximumf>, %81, %cst_28 [2] : vector<2x8x8xf32> to vector<2x8xf32>
    %83 = vector.shape_cast %82 : vector<2x8xf32> to vector<2x8x1xf32>
    %84 = vector.broadcast %83 : vector<2x8x1xf32> to vector<2x8x8xf32>
    %85 = arith.subf %81, %84 : vector<2x8x8xf32>
    %86 = math.exp %85 : vector<2x8x8xf32>
    %cst_29 = arith.constant dense<0.000000e+00> : vector<2x8xf32>
    %87 = vector.multi_reduction <add>, %86, %cst_29 [2] : vector<2x8x8xf32> to vector<2x8xf32>
    %88 = vector.shape_cast %87 : vector<2x8xf32> to vector<2x8x1xf32>
    %89 = tpu.reciprocal %88 {approx = true} : vector<2x8x1xf32> -> vector<2x8x1xf32>
    %90 = vector.broadcast %89 : vector<2x8x1xf32> to vector<2x8x8xf32>
    %91 = arith.mulf %86, %90 : vector<2x8x8xf32>
    %92 = arith.truncf %91 : vector<2x8x8xf32> to vector<2x8x8xbf16>
    "tpu.trace_start"() <{level = 10 : i32, message = "bqk,bkd->bqd"}> : () -> ()
    %cst_30 = arith.constant dense<0.000000e+00> : vector<2x8x8xf32>
    %93 = tpu.matmul %92, %74, %cst_30 {dimension_numbers = #tpu.dot_dimension_numbers<[2], [1], [1], [2], [0, 0, 0, 1, 1, 2], [0], [0]>} : vector<2x8x8xbf16>, vector<2x8x8xbf16>, vector<2x8x8xf32> -> vector<2x8x8xf32>
    "tpu.trace_stop"() : () -> ()
    %94 = vector.shape_cast %93 : vector<2x8x8xf32> to vector<16x8xf32>
    %95 = arith.truncf %94 : vector<16x8xf32> to vector<16x8xbf16>
    %96 = vector.extract_strided_slice %37 {offsets = [8, 0], sizes = [8, 32], strides = [1, 1]} : vector<32x32xbf16> to vector<8x32xbf16>
    %cst_31 = arith.constant dense<0.000000e+00> : vector<16x32xf32>
    %97 = tpu.matmul %95, %96, %cst_31 {dimension_numbers = #tpu.dot_dimension_numbers<[1], [0], [0], [1], [0, 0, 1, 1], [], []>} : vector<16x8xbf16>, vector<8x32xbf16>, vector<16x32xf32> -> vector<16x32xf32>
    %98 = arith.addf %68, %97 : vector<16x32xf32>
    %99 = vector.extract_strided_slice %32 {offsets = [0, 0, 16], sizes = [2, 8, 8], strides = [1, 1, 1]} : vector<2x8x96xf32> to vector<2x8x8xf32>
    %100 = arith.truncf %99 : vector<2x8x8xf32> to vector<2x8x8xbf16>
    %101 = vector.extract_strided_slice %32 {offsets = [0, 0, 48], sizes = [2, 8, 8], strides = [1, 1, 1]} : vector<2x8x96xf32> to vector<2x8x8xf32>
    %102 = arith.truncf %101 : vector<2x8x8xf32> to vector<2x8x8xbf16>
    %103 = vector.extract_strided_slice %32 {offsets = [0, 0, 80], sizes = [2, 8, 8], strides = [1, 1, 1]} : vector<2x8x96xf32> to vector<2x8x8xf32>
    %104 = arith.truncf %103 : vector<2x8x8xf32> to vector<2x8x8xbf16>
    "tpu.trace_start"() <{level = 10 : i32, message = "bqd,bkd->bqk"}> : () -> ()
    %cst_32 = arith.constant dense<0.000000e+00> : vector<2x8x8xf32>
    %105 = tpu.matmul %100, %102, %cst_32 {dimension_numbers = #tpu.dot_dimension_numbers<[2], [2], [1], [1], [0, 0, 0, 1, 1, 1], [0], [0]>} : vector<2x8x8xbf16>, vector<2x8x8xbf16>, vector<2x8x8xf32> -> vector<2x8x8xf32>
    "tpu.trace_stop"() : () -> ()
    %cst_33 = arith.constant 0.353553385 : f32
    %106 = vector.broadcast %cst_33 : f32 to vector<2x8x8xf32>
    %107 = arith.mulf %105, %106 : vector<2x8x8xf32>
    %cst_34 = arith.constant -1.000000e+30 : f32
    %108 = vector.shape_cast %36 : vector<1x8x8xi1> to vector<1x8x8xi1>
    %109 = vector.broadcast %108 : vector<1x8x8xi1> to vector<2x8x8xi1>
    %110 = vector.broadcast %cst_34 : f32 to vector<2x8x8xf32>
    %111 = arith.select %109, %107, %110 : vector<2x8x8xi1>, vector<2x8x8xf32>
    %cst_35 = arith.constant dense<0xFF800000> : vector<2x8xf32>
    %112 = vector.multi_reduction <maximumf>, %111, %cst_35 [2] : vector<2x8x8xf32> to vector<2x8xf32>
    %113 = vector.shape_cast %112 : vector<2x8xf32> to vector<2x8x1xf32>
    %114 = vector.broadcast %113 : vector<2x8x1xf32> to vector<2x8x8xf32>
    %115 = arith.subf %111, %114 : vector<2x8x8xf32>
    %116 = math.exp %115 : vector<2x8x8xf32>
    %cst_36 = arith.constant dense<0.000000e+00> : vector<2x8xf32>
    %117 = vector.multi_reduction <add>, %116, %cst_36 [2] : vector<2x8x8xf32> to vector<2x8xf32>
    %118 = vector.shape_cast %117 : vector<2x8xf32> to vector<2x8x1xf32>
    %119 = tpu.reciprocal %118 {approx = true} : vector<2x8x1xf32> -> vector<2x8x1xf32>
    %120 = vector.broadcast %119 : vector<2x8x1xf32> to vector<2x8x8xf32>
    %121 = arith.mulf %116, %120 : vector<2x8x8xf32>
    %122 = arith.truncf %121 : vector<2x8x8xf32> to vector<2x8x8xbf16>
    "tpu.trace_start"() <{level = 10 : i32, message = "bqk,bkd->bqd"}> : () -> ()
    %cst_37 = arith.constant dense<0.000000e+00> : vector<2x8x8xf32>
    %123 = tpu.matmul %122, %104, %cst_37 {dimension_numbers = #tpu.dot_dimension_numbers<[2], [1], [1], [2], [0, 0, 0, 1, 1, 2], [0], [0]>} : vector<2x8x8xbf16>, vector<2x8x8xbf16>, vector<2x8x8xf32> -> vector<2x8x8xf32>
    "tpu.trace_stop"() : () -> ()
    %124 = vector.shape_cast %123 : vector<2x8x8xf32> to vector<16x8xf32>
    %125 = arith.truncf %124 : vector<16x8xf32> to vector<16x8xbf16>
    %126 = vector.extract_strided_slice %37 {offsets = [16, 0], sizes = [8, 32], strides = [1, 1]} : vector<32x32xbf16> to vector<8x32xbf16>
    %cst_38 = arith.constant dense<0.000000e+00> : vector<16x32xf32>
    %127 = tpu.matmul %125, %126, %cst_38 {dimension_numbers = #tpu.dot_dimension_numbers<[1], [0], [0], [1], [0, 0, 1, 1], [], []>} : vector<16x8xbf16>, vector<8x32xbf16>, vector<16x32xf32> -> vector<16x32xf32>
    %128 = arith.addf %98, %127 : vector<16x32xf32>
    %129 = vector.extract_strided_slice %32 {offsets = [0, 0, 24], sizes = [2, 8, 8], strides = [1, 1, 1]} : vector<2x8x96xf32> to vector<2x8x8xf32>
    %130 = arith.truncf %129 : vector<2x8x8xf32> to vector<2x8x8xbf16>
    %131 = vector.extract_strided_slice %32 {offsets = [0, 0, 56], sizes = [2, 8, 8], strides = [1, 1, 1]} : vector<2x8x96xf32> to vector<2x8x8xf32>
    %132 = arith.truncf %131 : vector<2x8x8xf32> to vector<2x8x8xbf16>
    %133 = vector.extract_strided_slice %32 {offsets = [0, 0, 88], sizes = [2, 8, 8], strides = [1, 1, 1]} : vector<2x8x96xf32> to vector<2x8x8xf32>
    %134 = arith.truncf %133 : vector<2x8x8xf32> to vector<2x8x8xbf16>
    "tpu.trace_start"() <{level = 10 : i32, message = "bqd,bkd->bqk"}> : () -> ()
    %cst_39 = arith.constant dense<0.000000e+00> : vector<2x8x8xf32>
    %135 = tpu.matmul %130, %132, %cst_39 {dimension_numbers = #tpu.dot_dimension_numbers<[2], [2], [1], [1], [0, 0, 0, 1, 1, 1], [0], [0]>} : vector<2x8x8xbf16>, vector<2x8x8xbf16>, vector<2x8x8xf32> -> vector<2x8x8xf32>
    "tpu.trace_stop"() : () -> ()
    %cst_40 = arith.constant 0.353553385 : f32
    %136 = vector.broadcast %cst_40 : f32 to vector<2x8x8xf32>
    %137 = arith.mulf %135, %136 : vector<2x8x8xf32>
    %cst_41 = arith.constant -1.000000e+30 : f32
    %138 = vector.shape_cast %36 : vector<1x8x8xi1> to vector<1x8x8xi1>
    %139 = vector.broadcast %138 : vector<1x8x8xi1> to vector<2x8x8xi1>
    %140 = vector.broadcast %cst_41 : f32 to vector<2x8x8xf32>
    %141 = arith.select %139, %137, %140 : vector<2x8x8xi1>, vector<2x8x8xf32>
    %cst_42 = arith.constant dense<0xFF800000> : vector<2x8xf32>
    %142 = vector.multi_reduction <maximumf>, %141, %cst_42 [2] : vector<2x8x8xf32> to vector<2x8xf32>
    %143 = vector.shape_cast %142 : vector<2x8xf32> to vector<2x8x1xf32>
    %144 = vector.broadcast %143 : vector<2x8x1xf32> to vector<2x8x8xf32>
    %145 = arith.subf %141, %144 : vector<2x8x8xf32>
    %146 = math.exp %145 : vector<2x8x8xf32>
    %cst_43 = arith.constant dense<0.000000e+00> : vector<2x8xf32>
    %147 = vector.multi_reduction <add>, %146, %cst_43 [2] : vector<2x8x8xf32> to vector<2x8xf32>
    %148 = vector.shape_cast %147 : vector<2x8xf32> to vector<2x8x1xf32>
    %149 = tpu.reciprocal %148 {approx = true} : vector<2x8x1xf32> -> vector<2x8x1xf32>
    %150 = vector.broadcast %149 : vector<2x8x1xf32> to vector<2x8x8xf32>
    %151 = arith.mulf %146, %150 : vector<2x8x8xf32>
    %152 = arith.truncf %151 : vector<2x8x8xf32> to vector<2x8x8xbf16>
    "tpu.trace_start"() <{level = 10 : i32, message = "bqk,bkd->bqd"}> : () -> ()
    %cst_44 = arith.constant dense<0.000000e+00> : vector<2x8x8xf32>
    %153 = tpu.matmul %152, %134, %cst_44 {dimension_numbers = #tpu.dot_dimension_numbers<[2], [1], [1], [2], [0, 0, 0, 1, 1, 2], [0], [0]>} : vector<2x8x8xbf16>, vector<2x8x8xbf16>, vector<2x8x8xf32> -> vector<2x8x8xf32>
    "tpu.trace_stop"() : () -> ()
    %154 = vector.shape_cast %153 : vector<2x8x8xf32> to vector<16x8xf32>
    %155 = arith.truncf %154 : vector<16x8xf32> to vector<16x8xbf16>
    %156 = vector.extract_strided_slice %37 {offsets = [24, 0], sizes = [8, 32], strides = [1, 1]} : vector<32x32xbf16> to vector<8x32xbf16>
    %cst_45 = arith.constant dense<0.000000e+00> : vector<16x32xf32>
    %157 = tpu.matmul %155, %156, %cst_45 {dimension_numbers = #tpu.dot_dimension_numbers<[1], [0], [0], [1], [0, 0, 1, 1], [], []>} : vector<16x8xbf16>, vector<8x32xbf16>, vector<16x32xf32> -> vector<16x32xf32>
    %158 = arith.addf %128, %157 : vector<16x32xf32>
    %159 = arith.addf %1, %158 : vector<16x32xf32>
    %c0_46 = arith.constant 0 : index
    %c0_47 = arith.constant 0 : index
    %160 = vector.load %arg7[%c0_46, %c0_47] : memref<1x32xf32, #tpu.memory_space<vmem>>, vector<1x32xf32>
    %161 = vector.broadcast %160 : vector<1x32xf32> to vector<16x32xf32>
    %162 = arith.addf %159, %161 : vector<16x32xf32>
    %c0_48 = arith.constant 0 : index
    %c0_49 = arith.constant 0 : index
    %163 = vector.load %arg8[%c0_48, %c0_49] : memref<1x32xf32, #tpu.memory_space<vmem>>, vector<1x32xf32>
    %c0_50 = arith.constant 0 : index
    %c0_51 = arith.constant 0 : index
    %164 = vector.load %arg9[%c0_50, %c0_51] : memref<1x32xf32, #tpu.memory_space<vmem>>, vector<1x32xf32>
    %cst_52 = arith.constant dense<0.000000e+00> : vector<16xf32>
    %165 = vector.multi_reduction <add>, %162, %cst_52 [1] : vector<16x32xf32> to vector<16xf32>
    %166 = vector.shape_cast %165 : vector<16xf32> to vector<16x1xf32>
    %cst_53 = arith.constant 3.200000e+01 : f32
    %167 = vector.broadcast %cst_53 : f32 to vector<16x1xf32>
    %168 = arith.divf %166, %167 : vector<16x1xf32>
    %169 = vector.broadcast %168 : vector<16x1xf32> to vector<16x32xf32>
    %170 = arith.subf %162, %169 : vector<16x32xf32>
    %171 = arith.mulf %170, %170 : vector<16x32xf32>
    %cst_54 = arith.constant dense<0.000000e+00> : vector<16xf32>
    %172 = vector.multi_reduction <add>, %171, %cst_54 [1] : vector<16x32xf32> to vector<16xf32>
    %173 = vector.shape_cast %172 : vector<16xf32> to vector<16x1xf32>
    %cst_55 = arith.constant 3.200000e+01 : f32
    %174 = vector.broadcast %cst_55 : f32 to vector<16x1xf32>
    %175 = arith.divf %173, %174 : vector<16x1xf32>
    %176 = vector.broadcast %168 : vector<16x1xf32> to vector<16x32xf32>
    %177 = arith.subf %162, %176 : vector<16x32xf32>
    %cst_56 = arith.constant 9.99999974E-6 : f32
    %178 = vector.broadcast %cst_56 : f32 to vector<16x1xf32>
    %179 = arith.addf %175, %178 : vector<16x1xf32>
    %180 = math.rsqrt %179 : vector<16x1xf32>
    %181 = vector.broadcast %180 : vector<16x1xf32> to vector<16x32xf32>
    %182 = arith.mulf %177, %181 : vector<16x32xf32>
    %183 = vector.broadcast %163 : vector<1x32xf32> to vector<16x32xf32>
    %184 = arith.mulf %182, %183 : vector<16x32xf32>
    %185 = vector.broadcast %164 : vector<1x32xf32> to vector<16x32xf32>
    %186 = arith.addf %184, %185 : vector<16x32xf32>
    %187 = arith.truncf %186 : vector<16x32xf32> to vector<16x32xbf16>
    %c0_57 = arith.constant 0 : index
    %c0_58 = arith.constant 0 : index
    %188 = vector.load %arg10[%c0_57, %c0_58] : memref<32x128xbf16, #tpu.memory_space<vmem>>, vector<32x128xbf16>
    %cst_59 = arith.constant dense<0.000000e+00> : vector<16x128xf32>
    %189 = tpu.matmul %187, %188, %cst_59 {dimension_numbers = #tpu.dot_dimension_numbers<[1], [0], [0], [1], [0, 0, 1, 1], [], []>} : vector<16x32xbf16>, vector<32x128xbf16>, vector<16x128xf32> -> vector<16x128xf32>
    %c0_60 = arith.constant 0 : index
    %c0_61 = arith.constant 0 : index
    %190 = vector.load %arg11[%c0_60, %c0_61] : memref<1x128xf32, #tpu.memory_space<vmem>>, vector<1x128xf32>
    %191 = vector.broadcast %190 : vector<1x128xf32> to vector<16x128xf32>
    %192 = arith.addf %189, %191 : vector<16x128xf32>
    %cst_62 = arith.constant 1.702000e+00 : f32
    %193 = vector.broadcast %cst_62 : f32 to vector<16x128xf32>
    %194 = arith.mulf %193, %192 : vector<16x128xf32>
    %195 = arith.negf %194 : vector<16x128xf32>
    %196 = math.exp %195 : vector<16x128xf32>
    %cst_63 = arith.constant 1.000000e+00 : f32
    %197 = vector.broadcast %cst_63 : f32 to vector<16x128xf32>
    %198 = arith.addf %197, %196 : vector<16x128xf32>
    %199 = arith.divf %197, %198 : vector<16x128xf32>
    %200 = arith.mulf %192, %199 : vector<16x128xf32>
    %201 = arith.truncf %200 : vector<16x128xf32> to vector<16x128xbf16>
    %c0_64 = arith.constant 0 : index
    %c0_65 = arith.constant 0 : index
    %202 = vector.load %arg12[%c0_64, %c0_65] : memref<128x32xbf16, #tpu.memory_space<vmem>>, vector<128x32xbf16>
    %cst_66 = arith.constant dense<0.000000e+00> : vector<16x32xf32>
    %203 = tpu.matmul %201, %202, %cst_66 {dimension_numbers = #tpu.dot_dimension_numbers<[1], [0], [0], [1], [0, 0, 1, 1], [], []>} : vector<16x128xbf16>, vector<128x32xbf16>, vector<16x32xf32> -> vector<16x32xf32>
    %c0_67 = arith.constant 0 : index
    %c0_68 = arith.constant 0 : index
    %204 = vector.load %arg13[%c0_67, %c0_68] : memref<1x32xf32, #tpu.memory_space<vmem>>, vector<1x32xf32>
    %205 = vector.broadcast %204 : vector<1x32xf32> to vector<16x32xf32>
    %206 = arith.addf %203, %205 : vector<16x32xf32>
    %207 = arith.addf %162, %206 : vector<16x32xf32>
    %208 = vector.shape_cast %207 : vector<16x32xf32> to vector<2x8x32xf32>
    %c0_69 = arith.constant 0 : index
    %c0_70 = arith.constant 0 : index
    %c0_71 = arith.constant 0 : index
    %209 = vector.load %arg14[%c0_69, %c0_70, %c0_71] : memref<2x8x32xf32, #tpu.memory_space<vmem>>, vector<2x8x32xf32>
    tpu.vector_store %arg14[%c0_69, %c0_70, %c0_71], %208 {strides = array<i32>} : memref<2x8x32xf32, #tpu.memory_space<vmem>>, vector<2x8x32xf32>,
    return
  }
  func.func @transform_0(%arg0: i32) -> (i32, i32, i32) {
    %c0_i32 = arith.constant 0 : i32
    %c0_i32_0 = arith.constant 0 : i32
    %c0_i32_1 = arith.constant 0 : i32
    return %arg0, %c0_i32, %c0_i32_0 : i32, i32, i32
  }
  func.func @transform_1(%arg0: i32) -> (i32, i32) {
    %c0_i32 = arith.constant 0 : i32
    %c0_i32_0 = arith.constant 0 : i32
    %c0_i32_1 = arith.constant 0 : i32
    return %c0_i32, %c0_i32_0 : i32, i32
  }
  func.func @transform_2(%arg0: i32) -> (i32, i32) {
    %c0_i32 = arith.constant 0 : i32
    %c0_i32_0 = arith.constant 0 : i32
    %c0_i32_1 = arith.constant 0 : i32
    return %c0_i32, %c0_i32_0 : i32, i32
  }
  func.func @transform_3(%arg0: i32) -> (i32, i32) {
    %c0_i32 = arith.constant 0 : i32
    %c0_i32_0 = arith.constant 0 : i32
    %c0_i32_1 = arith.constant 0 : i32
    return %c0_i32, %c0_i32_0 : i32, i32
  }
  func.func @transform_4(%arg0: i32) -> (i32, i32) {
    %c0_i32 = arith.constant 0 : i32
    %c0_i32_0 = arith.constant 0 : i32
    %c0_i32_1 = arith.constant 0 : i32
    return %c0_i32, %c0_i32_0 : i32, i32
  }
  func.func @transform_5(%arg0: i32) -> (i32, i32) {
    %c0_i32 = arith.constant 0 : i32
    %c0_i32_0 = arith.constant 0 : i32
    %c0_i32_1 = arith.constant 0 : i32
    return %c0_i32, %c0_i32_0 : i32, i32
  }
  func.func @transform_6(%arg0: i32) -> (i32, i32) {
    %c0_i32 = arith.constant 0 : i32
    %c0_i32_0 = arith.constant 0 : i32
    %c0_i32_1 = arith.constant 0 : i32
    return %c0_i32, %c0_i32_0 : i32, i32
  }
  func.func @transform_7(%arg0: i32) -> (i32, i32) {
    %c0_i32 = arith.constant 0 : i32
    %c0_i32_0 = arith.constant 0 : i32
    %c0_i32_1 = arith.constant 0 : i32
    return %c0_i32, %c0_i32_0 : i32, i32
  }
  func.func @transform_8(%arg0: i32) -> (i32, i32) {
    %c0_i32 = arith.constant 0 : i32
    %c0_i32_0 = arith.constant 0 : i32
    %c0_i32_1 = arith.constant 0 : i32
    return %c0_i32, %c0_i32_0 : i32, i32
  }
  func.func @transform_9(%arg0: i32) -> (i32, i32) {
    %c0_i32 = arith.constant 0 : i32
    %c0_i32_0 = arith.constant 0 : i32
    %c0_i32_1 = arith.constant 0 : i32
    return %c0_i32, %c0_i32_0 : i32, i32
  }
  func.func @transform_10(%arg0: i32) -> (i32, i32) {
    %c0_i32 = arith.constant 0 : i32
    %c0_i32_0 = arith.constant 0 : i32
    %c0_i32_1 = arith.constant 0 : i32
    return %c0_i32, %c0_i32_0 : i32, i32
  }
  func.func @transform_11(%arg0: i32) -> (i32, i32) {
    %c0_i32 = arith.constant 0 : i32
    %c0_i32_0 = arith.constant 0 : i32
    %c0_i32_1 = arith.constant 0 : i32
    return %c0_i32, %c0_i32_0 : i32, i32
  }
  func.func @transform_12(%arg0: i32) -> (i32, i32) {
    %c0_i32 = arith.constant 0 : i32
    %c0_i32_0 = arith.constant 0 : i32
    %c0_i32_1 = arith.constant 0 : i32
    return %c0_i32, %c0_i32_0 : i32, i32
  }
  func.func @transform_13(%arg0: i32) -> (i32, i32, i32) {
    %c0_i32 = arith.constant 0 : i32
    %c0_i32_0 = arith.constant 0 : i32
    %c0_i32_1 = arith.constant 0 : i32
    return %arg0, %c0_i32, %c0_i32_0 : i32, i32, i32
  }
}

</mosaic_0001>

<llo_original>
// kernel: tpu_custom_call.1
$region0: #{tpu_custom_call.1}
  #allocation0 [shape = 'u32[]', space=smem, size = 0x4, offset = 0x4, fixed_abs, tag = 'smem constant byte address 0x4 - core index']
  #allocation1 [shape = 'u32[144,128]{1,0:T(1,128)}', space=vmem, size = 0x12000, scoped, tag = 'internal scratch']
  %s0 = inlined_call_operand.vmem [shape: f32[2,8,32], index: 0, kind: input, shape index: {}]
  %s1 = inlined_call_operand.vmem [shape: f32[1,32], index: 1, kind: input, shape index: {}]
  %s2 = inlined_call_operand.vmem [shape: f32[1,32], index: 2, kind: input, shape index: {}]
  %s3 = inlined_call_operand.vmem [shape: bf16[32,96], index: 3, kind: input, shape index: {}]
  %s4 = inlined_call_operand.vmem [shape: f32[1,96], index: 4, kind: input, shape index: {}]
  %s5 = inlined_call_operand.vmem [shape: bf16[32,32], index: 5, kind: input, shape index: {}]
  %s6 = inlined_call_operand.vmem [shape: f32[1,32], index: 6, kind: input, shape index: {}]
  %s7 = inlined_call_operand.vmem [shape: f32[1,32], index: 7, kind: input, shape index: {}]
  %s8 = inlined_call_operand.vmem [shape: f32[1,32], index: 8, kind: input, shape index: {}]
  %s9 = inlined_call_operand.vmem [shape: bf16[32,128], index: 9, kind: input, shape index: {}]
  %s10 = inlined_call_operand.vmem [shape: f32[1,128], index: 10, kind: input, shape index: {}]
  %s11 = inlined_call_operand.vmem [shape: bf16[128,32], index: 11, kind: input, shape index: {}]
  %s12 = inlined_call_operand.vmem [shape: f32[1,32], index: 12, kind: input, shape index: {}]
  %s13 = inlined_call_operand.hbm [shape: f32[2,8,32], index: 13, kind: output, shape index: {}]
  %s14 = sld [smem:[#allocation0]]
  $region62: #{tpu_custom_call.1} parent=0
    _
  %s16 = ssub.s32 1, %s14
  %s17 = scalar_select 0, %s16, %s14
  $region1: #{tpu_custom_call.1} parent=0
    #allocation2 [shape = 'u8[8192]{0}', space=vmem, size = 0x2000, scoped, tag = 'output window, operand 0, single buffered']
    #allocation3 [shape = 's32[1]{0}', space=sflag, size = 0x4, scoped, tag = 'scoped memory for tpu_custom_call.1']
    %18 = vsyncpa [#allocation3], 0
    // Predicated region
    $region2: #{tpu_custom_call.1} parent=1 // pred_check
      _
    $region3: #{tpu_custom_call.1} parent=1 // pred_check_branch
      %20 = sbr.rel (0) target = $region5
    $region4: #{tpu_custom_call.1} parent=1 // pred_region
      _
    $region5: #{tpu_custom_call.1} parent=1 // pred_fallthru
      _
    // Predicated region
    $region6: #{tpu_custom_call.1} parent=1 // pred_check
      _
    $region7: #{tpu_custom_call.1} parent=1 // pred_check_branch
      %22 = sbr.rel (0) target = $region9
    $region8: #{tpu_custom_call.1} parent=1 // pred_region
      _
    $region9: #{tpu_custom_call.1} parent=1 // pred_fallthru
      _
    // Predicated region
    $region10: #{tpu_custom_call.1} parent=1 // pred_check
      _
    $region11: #{tpu_custom_call.1} parent=1 // pred_check_branch
      %24 = sbr.rel (0) target = $region13
    $region12: #{tpu_custom_call.1} parent=1 // pred_region
      _
    $region13: #{tpu_custom_call.1} parent=1 // pred_fallthru
      _
    // Predicated region
    $region14: #{tpu_custom_call.1} parent=1 // pred_check
      _
    $region15: #{tpu_custom_call.1} parent=1 // pred_check_branch
      %26 = sbr.rel (0) target = $region17
    $region16: #{tpu_custom_call.1} parent=1 // pred_region
      _
    $region17: #{tpu_custom_call.1} parent=1 // pred_fallthru
      _
    // Predicated region
    $region18: #{tpu_custom_call.1} parent=1 // pred_check
      _
    $region19: #{tpu_custom_call.1} parent=1 // pred_check_branch
      %28 = sbr.rel (0) target = $region21
    $region20: #{tpu_custom_call.1} parent=1 // pred_region
      _
    $region21: #{tpu_custom_call.1} parent=1 // pred_fallthru
      _
    // Predicated region
    $region22: #{tpu_custom_call.1} parent=1 // pred_check
      _
    $region23: #{tpu_custom_call.1} parent=1 // pred_check_branch
      %30 = sbr.rel (0) target = $region25
    $region24: #{tpu_custom_call.1} parent=1 // pred_region
      _
    $region25: #{tpu_custom_call.1} parent=1 // pred_fallthru
      _
    // Predicated region
    $region26: #{tpu_custom_call.1} parent=1 // pred_check
      _
    $region27: #{tpu_custom_call.1} parent=1 // pred_check_branch
      %32 = sbr.rel (0) target = $region29
    $region28: #{tpu_custom_call.1} parent=1 // pred_region
      _
    $region29: #{tpu_custom_call.1} parent=1 // pred_fallthru
      _
    // Predicated region
    $region30: #{tpu_custom_call.1} parent=1 // pred_check
      _
    $region31: #{tpu_custom_call.1} parent=1 // pred_check_branch
      %34 = sbr.rel (0) target = $region33
    $region32: #{tpu_custom_call.1} parent=1 // pred_region
      _
    $region33: #{tpu_custom_call.1} parent=1 // pred_fallthru
      _
    // Predicated region
    $region34: #{tpu_custom_call.1} parent=1 // pred_check
      _
    $region35: #{tpu_custom_call.1} parent=1 // pred_check_branch
      %36 = sbr.rel (0) target = $region37
    $region36: #{tpu_custom_call.1} parent=1 // pred_region
      _
    $region37: #{tpu_custom_call.1} parent=1 // pred_fallthru
      _
    // Predicated region
    $region38: #{tpu_custom_call.1} parent=1 // pred_check
      _
    $region39: #{tpu_custom_call.1} parent=1 // pred_check_branch
      %38 = sbr.rel (0) target = $region41
    $region40: #{tpu_custom_call.1} parent=1 // pred_region
      _
    $region41: #{tpu_custom_call.1} parent=1 // pred_fallthru
      _
    // Predicated region
    $region42: #{tpu_custom_call.1} parent=1 // pred_check
      _
    $region43: #{tpu_custom_call.1} parent=1 // pred_check_branch
      %40 = sbr.rel (0) target = $region45
    $region44: #{tpu_custom_call.1} parent=1 // pred_region
      _
    $region45: #{tpu_custom_call.1} parent=1 // pred_fallthru
      _
    // Predicated region
    $region46: #{tpu_custom_call.1} parent=1 // pred_check
      _
    $region47: #{tpu_custom_call.1} parent=1 // pred_check_branch
      %42 = sbr.rel (0) target = $region49
    $region48: #{tpu_custom_call.1} parent=1 // pred_region
      _
    $region49: #{tpu_custom_call.1} parent=1 // pred_fallthru
      _
    // Predicated region
    $region50: #{tpu_custom_call.1} parent=1 // pred_check
      _
    $region51: #{tpu_custom_call.1} parent=1 // pred_check_branch
      %44 = sbr.rel (0) target = $region53
    $region52: #{tpu_custom_call.1} parent=1 // pred_region
      _
    $region53: #{tpu_custom_call.1} parent=1 // pred_fallthru
      _
    %v46 = vld [vmem:[%s0] sm:$0xff]
    %v47 = vld [vmem:[%s0 + $0x8] sm:$0xff]
    %v48 = vld [vmem:[%s1] sm:$0x1]
    %v49 = vld [vmem:[%s2] sm:$0x1]
    %vm50 = vcmask 261120
    %v51 = vsel %vm50, %v46, 0.0
    %52 = vadd.xlane.f32.xlu0 %v51
    %v53 = vpop.xlane.xlu0 %52
    %v54 = vsel %vm50, %v47, 0.0
    %55 = vadd.xlane.f32.xlu0 %v54
    %v56 = vpop.xlane.xlu0 %55
    %v57 = vrcp.pop 32.0
    %v58 = vmul.f32 %v53, %v57
    %v59 = vmul.f32 %v56, %v57
    %v60 = vsub.f32 %v46, %v58
    %v61 = vsub.f32 %v47, %v59
    %v62 = vmul.f32 %v60, %v60
    %v63 = vmul.f32 %v61, %v61
    %v64 = vsel %vm50, %v62, 0.0
    %65 = vadd.xlane.f32.xlu0 %v64
    %v66 = vpop.xlane.xlu0 %65
    %v67 = vsel %vm50, %v63, 0.0
    %68 = vadd.xlane.f32.xlu0 %v67
    %v69 = vpop.xlane.xlu0 %68
    %v70 = vmul.f32 %v66, %v57
    %v71 = vmul.f32 %v69, %v57
    %v72 = vadd.f32 %v70, 1e-05
    %v73 = vadd.f32 %v71, 1e-05
    %v74 = vrsqrt.pop %v72
    %v75 = vrsqrt.pop %v73
    %v76 = vmul.f32 %v60, %v74
    %v77 = vmul.f32 %v61, %v75
    %v79 = vlaneseq
    %v80 = vshrl.u32 %v79, 7
    %v81 = vsub.s32 0, %v80
    %v82 = vrot.slane %v48, %v81
    %v84 = vmul.f32 %v76, %v82
    %v85 = vmul.f32 %v77, %v82
    %v87 = vlaneseq
    %v88 = vshrl.u32 %v87, 7
    %v89 = vsub.s32 0, %v88
    %v90 = vrot.slane %v49, %v89
    %v92 = vadd.f32 %v84, %v90
    %v93 = vadd.f32 %v85, %v90
    %v94 = vpack.c.bf16 %v93, %v92
    %v95 = vld [vmem:[%s3] sm:$0xf]
    %v96 = vld [vmem:[%s3 + $0x4] sm:$0xf]
    %v97 = vld [vmem:[%s3 + $0x8] sm:$0xf]
    %v98 = vld [vmem:[%s3 + $0xc] sm:$0xf]
    %v99 = vld [vmem:[%s4] sm:$0x1]
    %v101 = vlaneseq
    %v102 = vshrl.u32 %v101, 7
    %v103 = vsub.s32 0, %v102
    %v104 = vrot.slane %v99, %v103
    %v110 = vunpack.c.l.b16 %v95
    %v111 = vunpack.c.l.b16 %v96
    %v112 = vunpack.c.l.b16 %v97
    %v113 = vunpack.c.l.b16 %v98
    %v114 = vpack.c.b16 %v111, %v110
    %v115 = vpack.c.b16 %v113, %v112
    %v119 = vsel %vm50, %v94, 0
    %121 = vmatprep.subr.bf16.mxu0 0
    %122 = vmatpush1.bf16.msra.mxu0 %v114
    %123 = vmatprep.subr.bf16.mxu0 0
    %124 = vmatpush1.bf16.msra.mxu0 %v115
    %125 = vmatprep.subr.bf16.mxu0 0
    %126 = vmatpush1.bf16.msra.mxu0 0
    %127 = vmatprep.subr.bf16.mxu0 0
    %128 = vmatpush1.bf16.msra.mxu0 0
    %129 = vmatprep.subr.bf16.mxu0 0
    %130 = vmatpush1.bf16.msra.mxu0 0
    %131 = vmatprep.subr.bf16.mxu0 0
    %132 = vmatpush1.bf16.msra.mxu0 0
    %133 = vmatprep.subr.bf16.mxu0 0
    %134 = vmatpush1.bf16.msra.mxu0 0
    %135 = vmatprep.subr.bf16.mxu0 0
    %136 = vmatpush1.bf16.msra.mxu0 0
    %137 = vmatprep.subr.bf16.mxu0 0
    %138 = vmatpush1.bf16.msra.mxu0 0
    %139 = vmatprep.subr.bf16.mxu0 0
    %140 = vmatpush1.bf16.msra.mxu0 0
    %141 = vmatprep.subr.bf16.mxu0 0
    %142 = vmatpush1.bf16.msra.mxu0 0
    %143 = vmatprep.subr.bf16.mxu0 0
    %144 = vmatpush1.bf16.msra.mxu0 0
    %145 = vmatprep.subr.bf16.mxu0 0
    %146 = vmatpush1.bf16.msra.mxu0 0
    %147 = vmatprep.subr.bf16.mxu0 0
    %148 = vmatpush1.bf16.msra.mxu0 0
    %149 = vmatprep.subr.bf16.mxu0 0
    %150 = vmatpush1.bf16.msra.mxu0 0
    %151 = vmatprep.subr.bf16.mxu0 0
    %152 = vmatpush1.bf16.msra.mxu0 0
    %153 = vmatprep.mubr.bf16.mxu0 0
    %154 = vmatmul.mubr.bf16.gmra.mrb[0].mxu0 %v119
    %v155 = vpop.f32.mrb[0].mxu0
    %v156 = vadd.f32 %v104, %v155
    %v157 = vpop.f32.mrb[0].mxu0
    %v158 = vpop.f32.mrb[0].mxu0
    %v159 = vadd.f32 %v104, %v158
    %v160 = vpop.f32.mrb[0].mxu0
    %161 = vdwg.mxu0
    %v162 = vlaneseq
    %v163 = vshrl.u32 %v162, 7
    %v164 = vlaneseq
    %v165 = vand.u32 %v164, 127
    %vm166 = vcmp.le.s32.totalorder %v165, %v163
    %v167 = vld [vmem:[%s5] sm:$0xf]
    %v168 = vld [vmem:[%s5 + $0x4] sm:$0xf]
    %v169 = vld [vmem:[%s5 + $0x8] sm:$0xf]
    %v170 = vld [vmem:[%s5 + $0xc] sm:$0xf]
    %v171 = vpack.c.bf16 %v156, %v156
    %v172 = vpack.c.bf16 %v159, %v159
    %174 = vrot.lane.b32.xlu0 %v171, 96
    %v175 = vpop.permute.xlu0 %174
    %vm176 = vcmask 64512
    %v178 = vsel %vm176, %v171, 0
    %v181 = vsel %vm176, %v175, 0
    %183 = vmatprep.subr.bf16.mxu0 0
    %184 = vmatpush1.bf16.xpose.msra.mxu0 %v181
    %185 = vmatprep.subr.bf16.mxu0 0
    %186 = vmatpush1.bf16.xpose.msra.mxu0 0
    %187 = vmatprep.subr.bf16.mxu0 0
    %188 = vmatpush1.bf16.xpose.msra.mxu0 0
    %189 = vmatprep.subr.bf16.mxu0 0
    %190 = vmatpush1.bf16.xpose.msra.mxu0 0
    %191 = vmatprep.subr.bf16.mxu0 0
    %192 = vmatpush1.bf16.xpose.msra.mxu0 0
    %193 = vmatprep.subr.bf16.mxu0 0
    %194 = vmatpush1.bf16.xpose.msra.mxu0 0
    %195 = vmatprep.subr.bf16.mxu0 0
    %196 = vmatpush1.bf16.xpose.msra.mxu0 0
    %197 = vmatprep.subr.bf16.mxu0 0
    %198 = vmatpush1.bf16.xpose.msra.mxu0 0
    %199 = vmatprep.subr.bf16.mxu0 0
    %200 = vmatpush1.bf16.xpose.msra.mxu0 0
    %201 = vmatprep.subr.bf16.mxu0 0
    %202 = vmatpush1.bf16.xpose.msra.mxu0 0
    %203 = vmatprep.subr.bf16.mxu0 0
    %204 = vmatpush1.bf16.xpose.msra.mxu0 0
    %205 = vmatprep.subr.bf16.mxu0 0
    %206 = vmatpush1.bf16.xpose.msra.mxu0 0
    %207 = vmatprep.subr.bf16.mxu0 0
    %208 = vmatpush1.bf16.xpose.msra.mxu0 0
    %209 = vmatprep.subr.bf16.mxu0 0
    %210 = vmatpush1.bf16.xpose.msra.mxu0 0
    %211 = vmatprep.subr.bf16.mxu0 0
    %212 = vmatpush1.bf16.xpose.msra.mxu0 0
    %213 = vmatprep.subr.bf16.mxu0 0
    %214 = vmatpush1.bf16.xpose.msra.mxu0 0
    %215 = vmatprep.mubr.bf16.mxu0 0
    %216 = vmatmul.mubr.bf16.gmra.mrb[0].mxu0 %v178
    %v217 = vpop.f32.mrb[0].mxu0
    %v218 = vadd.f32 0.0, %v217
    %v219 = vpop.f32.mrb[0].mxu0
    %v220 = vpop.f32.mrb[0].mxu0
    %v221 = vpop.f32.mrb[0].mxu0
    %222 = vdwg.mxu0
    %224 = vrot.lane.b32.xlu0 %v172, 96
    %v225 = vpop.permute.xlu0 %224
    %v227 = vsel %vm176, %v172, 0
    %v230 = vsel %vm176, %v225, 0
    %232 = vmatprep.subr.bf16.mxu0 0
    %233 = vmatpush1.bf16.xpose.msra.mxu0 %v230
    %234 = vmatprep.subr.bf16.mxu0 0
    %235 = vmatpush1.bf16.xpose.msra.mxu0 0
    %236 = vmatprep.subr.bf16.mxu0 0
    %237 = vmatpush1.bf16.xpose.msra.mxu0 0
    %238 = vmatprep.subr.bf16.mxu0 0
    %239 = vmatpush1.bf16.xpose.msra.mxu0 0
    %240 = vmatprep.subr.bf16.mxu0 0
    %241 = vmatpush1.bf16.xpose.msra.mxu0 0
    %242 = vmatprep.subr.bf16.mxu0 0
    %243 = vmatpush1.bf16.xpose.msra.mxu0 0
    %244 = vmatprep.subr.bf16.mxu0 0
    %245 = vmatpush1.bf16.xpose.msra.mxu0 0
    %246 = vmatprep.subr.bf16.mxu0 0
    %247 = vmatpush1.bf16.xpose.msra.mxu0 0
    %248 = vmatprep.subr.bf16.mxu0 0
    %249 = vmatpush1.bf16.xpose.msra.mxu0 0
    %250 = vmatprep.subr.bf16.mxu0 0
    %251 = vmatpush1.bf16.xpose.msra.mxu0 0
    %252 = vmatprep.subr.bf16.mxu0 0
    %253 = vmatpush1.bf16.xpose.msra.mxu0 0
    %254 = vmatprep.subr.bf16.mxu0 0
    %255 = vmatpush1.bf16.xpose.msra.mxu0 0
    %256 = vmatprep.subr.bf16.mxu0 0
    %257 = vmatpush1.bf16.xpose.msra.mxu0 0
    %258 = vmatprep.subr.bf16.mxu0 0
    %259 = vmatpush1.bf16.xpose.msra.mxu0 0
    %260 = vmatprep.subr.bf16.mxu0 0
    %261 = vmatpush1.bf16.xpose.msra.mxu0 0
    %262 = vmatprep.subr.bf16.mxu0 0
    %263 = vmatpush1.bf16.xpose.msra.mxu0 0
    %264 = vmatprep.mubr.bf16.mxu0 0
    %265 = vmatmul.mubr.bf16.gmra.mrb[0].mxu0 %v227
    %v266 = vpop.f32.mrb[0].mxu0
    %v267 = vadd.f32 0.0, %v266
    %v268 = vpop.f32.mrb[0].mxu0
    %v269 = vpop.f32.mrb[0].mxu0
    %v270 = vpop.f32.mrb[0].mxu0
    %271 = vdwg.mxu0
    %v272 = vmul.f32 %v218, 0.35355338
    %v273 = vmul.f32 %v267, 0.35355338
    %v274 = vsel %vm166, 1, 0
    %vm275 = vcmp.eq.s32.totalorder %v274, 1
    %v276 = vsel %vm275, %v272, -1e+30
    %v277 = vsel %vm275, %v273, -1e+30
    %v278 = vsel %vm176, %v276, -inf
    %279 = vmax.xlane.f32.xlu0 %v278
    %v280 = vpop.xlane.xlu0 %279
    %v281 = vsel %vm176, %v277, -inf
    %282 = vmax.xlane.f32.xlu0 %v281
    %v283 = vpop.xlane.xlu0 %282
    %v284 = vsub.f32 %v276, %v280
    %v285 = vsub.f32 %v277, %v283
    %v286 = vmul.f32 %v284, 1.442695
    %v287 = vpow.pop %v286
    %v288 = vmul.f32 %v285, 1.442695
    %v289 = vpow.pop %v288
    %v290 = vsel %vm176, %v287, 0.0
    %291 = vadd.xlane.f32.xlu0 %v290
    %v292 = vpop.xlane.xlu0 %291
    %v293 = vsel %vm176, %v289, 0.0
    %294 = vadd.xlane.f32.xlu0 %v293
    %v295 = vpop.xlane.xlu0 %294
    %v296 = vrcp.pop %v292
    %v297 = vrcp.pop %v295
    %v298 = vmul.f32 %v287, %v296
    %v299 = vmul.f32 %v289, %v297
    %v300 = vpack.c.bf16 %v298, %v298
    %v301 = vpack.c.bf16 %v299, %v299
    %302 = vrot.lane.b32.xlu0 %v171, 64
    %v303 = vpop.permute.xlu0 %302
    %v305 = vsel %vm176, %v300, 0
    %vm307 = vcmask 1043456
    %v309 = vsel %vm307, %v303, 0
    %311 = vmatprep.subr.bf16.mxu0 0
    %312 = vmatpush1.bf16.msra.mxu0 %v309
    %313 = vmatprep.subr.bf16.mxu0 0
    %314 = vmatpush1.bf16.msra.mxu0 0
    %315 = vmatprep.subr.bf16.mxu0 0
    %316 = vmatpush1.bf16.msra.mxu0 0
    %317 = vmatprep.subr.bf16.mxu0 0
    %318 = vmatpush1.bf16.msra.mxu0 0
    %319 = vmatprep.subr.bf16.mxu0 0
    %320 = vmatpush1.bf16.msra.mxu0 0
    %321 = vmatprep.subr.bf16.mxu0 0
    %322 = vmatpush1.bf16.msra.mxu0 0
    %323 = vmatprep.subr.bf16.mxu0 0
    %324 = vmatpush1.bf16.msra.mxu0 0
    %325 = vmatprep.subr.bf16.mxu0 0
    %326 = vmatpush1.bf16.msra.mxu0 0
    %327 = vmatprep.subr.bf16.mxu0 0
    %328 = vmatpush1.bf16.msra.mxu0 0
    %329 = vmatprep.subr.bf16.mxu0 0
    %330 = vmatpush1.bf16.msra.mxu0 0
    %331 = vmatprep.subr.bf16.mxu0 0
    %332 = vmatpush1.bf16.msra.mxu0 0
    %333 = vmatprep.subr.bf16.mxu0 0
    %334 = vmatpush1.bf16.msra.mxu0 0
    %335 = vmatprep.subr.bf16.mxu0 0
    %336 = vmatpush1.bf16.msra.mxu0 0
    %337 = vmatprep.subr.bf16.mxu0 0
    %338 = vmatpush1.bf16.msra.mxu0 0
    %339 = vmatprep.subr.bf16.mxu0 0
    %340 = vmatpush1.bf16.msra.mxu0 0
    %341 = vmatprep.subr.bf16.mxu0 0
    %342 = vmatpush1.bf16.msra.mxu0 0
    %343 = vmatprep.mubr.bf16.mxu0 0
    %344 = vmatmul.mubr.bf16.gmra.mrb[0].mxu0 %v305
    %v345 = vpop.f32.mrb[0].mxu0
    %v346 = vadd.f32 0.0, %v345
    %v347 = vpop.f32.mrb[0].mxu0
    %v348 = vpop.f32.mrb[0].mxu0
    %v349 = vpop.f32.mrb[0].mxu0
    %350 = vdwg.mxu0
    %351 = vrot.lane.b32.xlu0 %v172, 64
    %v352 = vpop.permute.xlu0 %351
    %v354 = vsel %vm176, %v301, 0
    %v357 = vsel %vm307, %v352, 0
    %359 = vmatprep.subr.bf16.mxu0 0
    %360 = vmatpush1.bf16.msra.mxu0 %v357
    %361 = vmatprep.subr.bf16.mxu0 0
    %362 = vmatpush1.bf16.msra.mxu0 0
    %363 = vmatprep.subr.bf16.mxu0 0
    %364 = vmatpush1.bf16.msra.mxu0 0
    %365 = vmatprep.subr.bf16.mxu0 0
    %366 = vmatpush1.bf16.msra.mxu0 0
    %367 = vmatprep.subr.bf16.mxu0 0
    %368 = vmatpush1.bf16.msra.mxu0 0
    %369 = vmatprep.subr.bf16.mxu0 0
    %370 = vmatpush1.bf16.msra.mxu0 0
    %371 = vmatprep.subr.bf16.mxu0 0
    %372 = vmatpush1.bf16.msra.mxu0 0
    %373 = vmatprep.subr.bf16.mxu0 0
    %374 = vmatpush1.bf16.msra.mxu0 0
    %375 = vmatprep.subr.bf16.mxu0 0
    %376 = vmatpush1.bf16.msra.mxu0 0
    %377 = vmatprep.subr.bf16.mxu0 0
    %378 = vmatpush1.bf16.msra.mxu0 0
    %379 = vmatprep.subr.bf16.mxu0 0
    %380 = vmatpush1.bf16.msra.mxu0 0
    %381 = vmatprep.subr.bf16.mxu0 0
    %382 = vmatpush1.bf16.msra.mxu0 0
    %383 = vmatprep.subr.bf16.mxu0 0
    %384 = vmatpush1.bf16.msra.mxu0 0
    %385 = vmatprep.subr.bf16.mxu0 0
    %386 = vmatpush1.bf16.msra.mxu0 0
    %387 = vmatprep.subr.bf16.mxu0 0
    %388 = vmatpush1.bf16.msra.mxu0 0
    %389 = vmatprep.subr.bf16.mxu0 0
    %390 = vmatpush1.bf16.msra.mxu0 0
    %391 = vmatprep.mubr.bf16.mxu0 0
    %392 = vmatmul.mubr.bf16.gmra.mrb[0].mxu0 %v354
    %v393 = vpop.f32.mrb[0].mxu0
    %v394 = vadd.f32 0.0, %v393
    %v395 = vpop.f32.mrb[0].mxu0
    %v396 = vpop.f32.mrb[0].mxu0
    %v397 = vpop.f32.mrb[0].mxu0
    %398 = vdwg.mxu0
    %v399 = vpack.c.bf16 %v394, %v346
    %400 = vrot.lane.b32.xlu0 %v171, 120
    %v401 = vpop.permute.xlu0 %400
    %402 = vrot.lane.b32.xlu0 %v171, 88
    %v403 = vpop.permute.xlu0 %402
    %v405 = vsel %vm176, %v401, 0
    %v408 = vsel %vm176, %v403, 0
    %410 = vmatprep.subr.bf16.mxu0 0
    %411 = vmatpush1.bf16.xpose.msra.mxu0 %v408
    %412 = vmatprep.subr.bf16.mxu0 0
    %413 = vmatpush1.bf16.xpose.msra.mxu0 0
    %414 = vmatprep.subr.bf16.mxu0 0
    %415 = vmatpush1.bf16.xpose.msra.mxu0 0
    %416 = vmatprep.subr.bf16.mxu0 0
    %417 = vmatpush1.bf16.xpose.msra.mxu0 0
    %418 = vmatprep.subr.bf16.mxu0 0
    %419 = vmatpush1.bf16.xpose.msra.mxu0 0
    %420 = vmatprep.subr.bf16.mxu0 0
    %421 = vmatpush1.bf16.xpose.msra.mxu0 0
    %422 = vmatprep.subr.bf16.mxu0 0
    %423 = vmatpush1.bf16.xpose.msra.mxu0 0
    %424 = vmatprep.subr.bf16.mxu0 0
    %425 = vmatpush1.bf16.xpose.msra.mxu0 0
    %426 = vmatprep.subr.bf16.mxu0 0
    %427 = vmatpush1.bf16.xpose.msra.mxu0 0
    %428 = vmatprep.subr.bf16.mxu0 0
    %429 = vmatpush1.bf16.xpose.msra.mxu0 0
    %430 = vmatprep.subr.bf16.mxu0 0
    %431 = vmatpush1.bf16.xpose.msra.mxu0 0
    %432 = vmatprep.subr.bf16.mxu0 0
    %433 = vmatpush1.bf16.xpose.msra.mxu0 0
    %434 = vmatprep.subr.bf16.mxu0 0
    %435 = vmatpush1.bf16.xpose.msra.mxu0 0
    %436 = vmatprep.subr.bf16.mxu0 0
    %437 = vmatpush1.bf16.xpose.msra.mxu0 0
    %438 = vmatprep.subr.bf16.mxu0 0
    %439 = vmatpush1.bf16.xpose.msra.mxu0 0
    %440 = vmatprep.subr.bf16.mxu0 0
    %441 = vmatpush1.bf16.xpose.msra.mxu0 0
    %442 = vmatprep.mubr.bf16.mxu0 0
    %443 = vmatmul.mubr.bf16.gmra.mrb[0].mxu0 %v405
    %v444 = vpop.f32.mrb[0].mxu0
    %v445 = vadd.f32 0.0, %v444
    %v446 = vpop.f32.mrb[0].mxu0
    %v447 = vpop.f32.mrb[0].mxu0
    %v448 = vpop.f32.mrb[0].mxu0
    %449 = vdwg.mxu0
    %450 = vrot.lane.b32.xlu0 %v172, 120
    %v451 = vpop.permute.xlu0 %450
    %452 = vrot.lane.b32.xlu0 %v172, 88
    %v453 = vpop.permute.xlu0 %452
    %v455 = vsel %vm176, %v451, 0
    %v458 = vsel %vm176, %v453, 0
    %460 = vmatprep.subr.bf16.mxu0 0
    %461 = vmatpush1.bf16.xpose.msra.mxu0 %v458
    %462 = vmatprep.subr.bf16.mxu0 0
    %463 = vmatpush1.bf16.xpose.msra.mxu0 0
    %464 = vmatprep.subr.bf16.mxu0 0
    %465 = vmatpush1.bf16.xpose.msra.mxu0 0
    %466 = vmatprep.subr.bf16.mxu0 0
    %467 = vmatpush1.bf16.xpose.msra.mxu0 0
    %468 = vmatprep.subr.bf16.mxu0 0
    %469 = vmatpush1.bf16.xpose.msra.mxu0 0
    %470 = vmatprep.subr.bf16.mxu0 0
    %471 = vmatpush1.bf16.xpose.msra.mxu0 0
    %472 = vmatprep.subr.bf16.mxu0 0
    %473 = vmatpush1.bf16.xpose.msra.mxu0 0
    %474 = vmatprep.subr.bf16.mxu0 0
    %475 = vmatpush1.bf16.xpose.msra.mxu0 0
    %476 = vmatprep.subr.bf16.mxu0 0
    %477 = vmatpush1.bf16.xpose.msra.mxu0 0
    %478 = vmatprep.subr.bf16.mxu0 0
    %479 = vmatpush1.bf16.xpose.msra.mxu0 0
    %480 = vmatprep.subr.bf16.mxu0 0
    %481 = vmatpush1.bf16.xpose.msra.mxu0 0
    %482 = vmatprep.subr.bf16.mxu0 0
    %483 = vmatpush1.bf16.xpose.msra.mxu0 0
    %484 = vmatprep.subr.bf16.mxu0 0
    %485 = vmatpush1.bf16.xpose.msra.mxu0 0
    %486 = vmatprep.subr.bf16.mxu0 0
    %487 = vmatpush1.bf16.xpose.msra.mxu0 0
    %488 = vmatprep.subr.bf16.mxu0 0
    %489 = vmatpush1.bf16.xpose.msra.mxu0 0
    %490 = vmatprep.subr.bf16.mxu0 0
    %491 = vmatpush1.bf16.xpose.msra.mxu0 0
    %492 = vmatprep.mubr.bf16.mxu0 0
    %493 = vmatmul.mubr.bf16.gmra.mrb[0].mxu0 %v455
    %v494 = vpop.f32.mrb[0].mxu0
    %v495 = vadd.f32 0.0, %v494
    %v496 = vpop.f32.mrb[0].mxu0
    %v497 = vpop.f32.mrb[0].mxu0
    %v498 = vpop.f32.mrb[0].mxu0
    %499 = vdwg.mxu0
    %v500 = vmul.f32 %v445, 0.35355338
    %v501 = vmul.f32 %v495, 0.35355338
    %v502 = vsel %vm275, %v500, -1e+30
    %v503 = vsel %vm275, %v501, -1e+30
    %v504 = vsel %vm176, %v502, -inf
    %505 = vmax.xlane.f32.xlu0 %v504
    %v506 = vpop.xlane.xlu0 %505
    %v507 = vsel %vm176, %v503, -inf
    %508 = vmax.xlane.f32.xlu0 %v507
    %v509 = vpop.xlane.xlu0 %508
    %v510 = vsub.f32 %v502, %v506
    %v511 = vsub.f32 %v503, %v509
    %v512 = vmul.f32 %v510, 1.442695
    %v513 = vpow.pop %v512
    %v514 = vmul.f32 %v511, 1.442695
    %v515 = vpow.pop %v514
    %v516 = vsel %vm176, %v513, 0.0
    %517 = vadd.xlane.f32.xlu0 %v516
    %v518 = vpop.xlane.xlu0 %517
    %v519 = vsel %vm176, %v515, 0.0
    %520 = vadd.xlane.f32.xlu0 %v519
    %v521 = vpop.xlane.xlu0 %520
    %v522 = vrcp.pop %v518
    %v523 = vrcp.pop %v521
    %v524 = vmul.f32 %v513, %v522
    %v525 = vmul.f32 %v515, %v523
    %v526 = vpack.c.bf16 %v524, %v524
    %v527 = vpack.c.bf16 %v525, %v525
    %528 = vrot.lane.b32.xlu0 %v171, 56
    %v529 = vpop.permute.xlu0 %528
    %v531 = vsel %vm176, %v526, 0
    %v534 = vsel %vm307, %v529, 0
    %536 = vmatprep.subr.bf16.mxu0 0
    %537 = vmatpush1.bf16.msra.mxu0 %v534
    %538 = vmatprep.subr.bf16.mxu0 0
    %539 = vmatpush1.bf16.msra.mxu0 0
    %540 = vmatprep.subr.bf16.mxu0 0
    %541 = vmatpush1.bf16.msra.mxu0 0
    %542 = vmatprep.subr.bf16.mxu0 0
    %543 = vmatpush1.bf16.msra.mxu0 0
    %544 = vmatprep.subr.bf16.mxu0 0
    %545 = vmatpush1.bf16.msra.mxu0 0
    %546 = vmatprep.subr.bf16.mxu0 0
    %547 = vmatpush1.bf16.msra.mxu0 0
    %548 = vmatprep.subr.bf16.mxu0 0
    %549 = vmatpush1.bf16.msra.mxu0 0
    %550 = vmatprep.subr.bf16.mxu0 0
    %551 = vmatpush1.bf16.msra.mxu0 0
    %552 = vmatprep.subr.bf16.mxu0 0
    %553 = vmatpush1.bf16.msra.mxu0 0
    %554 = vmatprep.subr.bf16.mxu0 0
    %555 = vmatpush1.bf16.msra.mxu0 0
    %556 = vmatprep.subr.bf16.mxu0 0
    %557 = vmatpush1.bf16.msra.mxu0 0
    %558 = vmatprep.subr.bf16.mxu0 0
    %559 = vmatpush1.bf16.msra.mxu0 0
    %560 = vmatprep.subr.bf16.mxu0 0
    %561 = vmatpush1.bf16.msra.mxu0 0
    %562 = vmatprep.subr.bf16.mxu0 0
    %563 = vmatpush1.bf16.msra.mxu0 0
    %564 = vmatprep.subr.bf16.mxu0 0
    %565 = vmatpush1.bf16.msra.mxu0 0
    %566 = vmatprep.subr.bf16.mxu0 0
    %567 = vmatpush1.bf16.msra.mxu0 0
    %568 = vmatprep.mubr.bf16.mxu0 0
    %569 = vmatmul.mubr.bf16.gmra.mrb[0].mxu0 %v531
    %v570 = vpop.f32.mrb[0].mxu0
    %v571 = vadd.f32 0.0, %v570
    %v572 = vpop.f32.mrb[0].mxu0
    %v573 = vpop.f32.mrb[0].mxu0
    %v574 = vpop.f32.mrb[0].mxu0
    %575 = vdwg.mxu0
    %576 = vrot.lane.b32.xlu0 %v172, 56
    %v577 = vpop.permute.xlu0 %576
    %v579 = vsel %vm176, %v527, 0
    %v582 = vsel %vm307, %v577, 0
    %584 = vmatprep.subr.bf16.mxu0 0
    %585 = vmatpush1.bf16.msra.mxu0 %v582
    %586 = vmatprep.subr.bf16.mxu0 0
    %587 = vmatpush1.bf16.msra.mxu0 0
    %588 = vmatprep.subr.bf16.mxu0 0
    %589 = vmatpush1.bf16.msra.mxu0 0
    %590 = vmatprep.subr.bf16.mxu0 0
    %591 = vmatpush1.bf16.msra.mxu0 0
    %592 = vmatprep.subr.bf16.mxu0 0
    %593 = vmatpush1.bf16.msra.mxu0 0
    %594 = vmatprep.subr.bf16.mxu0 0
    %595 = vmatpush1.bf16.msra.mxu0 0
    %596 = vmatprep.subr.bf16.mxu0 0
    %597 = vmatpush1.bf16.msra.mxu0 0
    %598 = vmatprep.subr.bf16.mxu0 0
    %599 = vmatpush1.bf16.msra.mxu0 0
    %600 = vmatprep.subr.bf16.mxu0 0
    %601 = vmatpush1.bf16.msra.mxu0 0
    %602 = vmatprep.subr.bf16.mxu0 0
    %603 = vmatpush1.bf16.msra.mxu0 0
    %604 = vmatprep.subr.bf16.mxu0 0
    %605 = vmatpush1.bf16.msra.mxu0 0
    %606 = vmatprep.subr.bf16.mxu0 0
    %607 = vmatpush1.bf16.msra.mxu0 0
    %608 = vmatprep.subr.bf16.mxu0 0
    %609 = vmatpush1.bf16.msra.mxu0 0
    %610 = vmatprep.subr.bf16.mxu0 0
    %611 = vmatpush1.bf16.msra.mxu0 0
    %612 = vmatprep.subr.bf16.mxu0 0
    %613 = vmatpush1.bf16.msra.mxu0 0
    %614 = vmatprep.subr.bf16.mxu0 0
    %615 = vmatpush1.bf16.msra.mxu0 0
    %616 = vmatprep.mubr.bf16.mxu0 0
    %617 = vmatmul.mubr.bf16.gmra.mrb[0].mxu0 %v579
    %v618 = vpop.f32.mrb[0].mxu0
    %v619 = vadd.f32 0.0, %v618
    %v620 = vpop.f32.mrb[0].mxu0
    %v621 = vpop.f32.mrb[0].mxu0
    %v622 = vpop.f32.mrb[0].mxu0
    %623 = vdwg.mxu0
    %v624 = vpack.c.bf16 %v619, %v571
    %v626 = vsel %vm176, %v624, 0
    %v629 = vsel %vm307, %v168, 0
    %631 = vmatprep.subr.bf16.mxu0 0
    %632 = vmatpush1.bf16.msra.mxu0 %v629
    %633 = vmatprep.subr.bf16.mxu0 0
    %634 = vmatpush1.bf16.msra.mxu0 0
    %635 = vmatprep.subr.bf16.mxu0 0
    %636 = vmatpush1.bf16.msra.mxu0 0
    %637 = vmatprep.subr.bf16.mxu0 0
    %638 = vmatpush1.bf16.msra.mxu0 0
    %639 = vmatprep.subr.bf16.mxu0 0
    %640 = vmatpush1.bf16.msra.mxu0 0
    %641 = vmatprep.subr.bf16.mxu0 0
    %642 = vmatpush1.bf16.msra.mxu0 0
    %643 = vmatprep.subr.bf16.mxu0 0
    %644 = vmatpush1.bf16.msra.mxu0 0
    %645 = vmatprep.subr.bf16.mxu0 0
    %646 = vmatpush1.bf16.msra.mxu0 0
    %647 = vmatprep.subr.bf16.mxu0 0
    %648 = vmatpush1.bf16.msra.mxu0 0
    %649 = vmatprep.subr.bf16.mxu0 0
    %650 = vmatpush1.bf16.msra.mxu0 0
    %651 = vmatprep.subr.bf16.mxu0 0
    %652 = vmatpush1.bf16.msra.mxu0 0
    %653 = vmatprep.subr.bf16.mxu0 0
    %654 = vmatpush1.bf16.msra.mxu0 0
    %655 = vmatprep.subr.bf16.mxu0 0
    %656 = vmatpush1.bf16.msra.mxu0 0
    %657 = vmatprep.subr.bf16.mxu0 0
    %658 = vmatpush1.bf16.msra.mxu0 0
    %659 = vmatprep.subr.bf16.mxu0 0
    %660 = vmatpush1.bf16.msra.mxu0 0
    %661 = vmatprep.subr.bf16.mxu0 0
    %662 = vmatpush1.bf16.msra.mxu0 0
    %663 = vmatprep.mubr.bf16.mxu0 0
    %664 = vmatmul.mubr.bf16.gmra.mrb[0].mxu0 %v626
    %v665 = vpop.f32.mrb[0].mxu0
    %v666 = vadd.f32 0.0, %v665
    %v667 = vpop.f32.mrb[0].mxu0
    %v668 = vpop.f32.mrb[0].mxu0
    %v669 = vadd.f32 0.0, %v668
    %v670 = vpop.f32.mrb[0].mxu0
    %671 = vdwg.mxu0
    %v673 = vsel %vm176, %v399, 0
    %v676 = vsel %vm307, %v167, 0
    %678 = vmatprep.subr.bf16.mxu0 0
    %679 = vmatpush1.bf16.msra.mxu0 %v676
    %680 = vmatprep.subr.bf16.mxu0 0
    %681 = vmatpush1.bf16.msra.mxu0 0
    %682 = vmatprep.subr.bf16.mxu0 0
    %683 = vmatpush1.bf16.msra.mxu0 0
    %684 = vmatprep.subr.bf16.mxu0 0
    %685 = vmatpush1.bf16.msra.mxu0 0
    %686 = vmatprep.subr.bf16.mxu0 0
    %687 = vmatpush1.bf16.msra.mxu0 0
    %688 = vmatprep.subr.bf16.mxu0 0
    %689 = vmatpush1.bf16.msra.mxu0 0
    %690 = vmatprep.subr.bf16.mxu0 0
    %691 = vmatpush1.bf16.msra.mxu0 0
    %692 = vmatprep.subr.bf16.mxu0 0
    %693 = vmatpush1.bf16.msra.mxu0 0
    %694 = vmatprep.subr.bf16.mxu0 0
    %695 = vmatpush1.bf16.msra.mxu0 0
    %696 = vmatprep.subr.bf16.mxu0 0
    %697 = vmatpush1.bf16.msra.mxu0 0
    %698 = vmatprep.subr.bf16.mxu0 0
    %699 = vmatpush1.bf16.msra.mxu0 0
    %700 = vmatprep.subr.bf16.mxu0 0
    %701 = vmatpush1.bf16.msra.mxu0 0
    %702 = vmatprep.subr.bf16.mxu0 0
    %703 = vmatpush1.bf16.msra.mxu0 0
    %704 = vmatprep.subr.bf16.mxu0 0
    %705 = vmatpush1.bf16.msra.mxu0 0
    %706 = vmatprep.subr.bf16.mxu0 0
    %707 = vmatpush1.bf16.msra.mxu0 0
    %708 = vmatprep.subr.bf16.mxu0 0
    %709 = vmatpush1.bf16.msra.mxu0 0
    %710 = vmatprep.mubr.bf16.mxu0 0
    %711 = vmatmul.mubr.bf16.gmra.mrb[0].mxu0 %v673
    %v712 = vpop.f32.mrb[0].mxu0
    %v713 = vadd.f32 %v666, %v712
    %v714 = vpop.f32.mrb[0].mxu0
    %v715 = vpop.f32.mrb[0].mxu0
    %v716 = vadd.f32 %v669, %v715
    %v717 = vpop.f32.mrb[0].mxu0
    %718 = vdwg.mxu0
    %719 = vrot.lane.b32.xlu0 %v171, 112
    %v720 = vpop.permute.xlu0 %719
    %721 = vrot.lane.b32.xlu0 %v171, 80
    %v722 = vpop.permute.xlu0 %721
    %v724 = vsel %vm176, %v720, 0
    %v727 = vsel %vm176, %v722, 0
    %729 = vmatprep.subr.bf16.mxu0 0
    %730 = vmatpush1.bf16.xpose.msra.mxu0 %v727
    %731 = vmatprep.subr.bf16.mxu0 0
    %732 = vmatpush1.bf16.xpose.msra.mxu0 0
    %733 = vmatprep.subr.bf16.mxu0 0
    %734 = vmatpush1.bf16.xpose.msra.mxu0 0
    %735 = vmatprep.subr.bf16.mxu0 0
    %736 = vmatpush1.bf16.xpose.msra.mxu0 0
    %737 = vmatprep.subr.bf16.mxu0 0
    %738 = vmatpush1.bf16.xpose.msra.mxu0 0
    %739 = vmatprep.subr.bf16.mxu0 0
    %740 = vmatpush1.bf16.xpose.msra.mxu0 0
    %741 = vmatprep.subr.bf16.mxu0 0
    %742 = vmatpush1.bf16.xpose.msra.mxu0 0
    %743 = vmatprep.subr.bf16.mxu0 0
    %744 = vmatpush1.bf16.xpose.msra.mxu0 0
    %745 = vmatprep.subr.bf16.mxu0 0
    %746 = vmatpush1.bf16.xpose.msra.mxu0 0
    %747 = vmatprep.subr.bf16.mxu0 0
    %748 = vmatpush1.bf16.xpose.msra.mxu0 0
    %749 = vmatprep.subr.bf16.mxu0 0
    %750 = vmatpush1.bf16.xpose.msra.mxu0 0
    %751 = vmatprep.subr.bf16.mxu0 0
    %752 = vmatpush1.bf16.xpose.msra.mxu0 0
    %753 = vmatprep.subr.bf16.mxu0 0
    %754 = vmatpush1.bf16.xpose.msra.mxu0 0
    %755 = vmatprep.subr.bf16.mxu0 0
    %756 = vmatpush1.bf16.xpose.msra.mxu0 0
    %757 = vmatprep.subr.bf16.mxu0 0
    %758 = vmatpush1.bf16.xpose.msra.mxu0 0
    %759 = vmatprep.subr.bf16.mxu0 0
    %760 = vmatpush1.bf16.xpose.msra.mxu0 0
    %761 = vmatprep.mubr.bf16.mxu0 0
    %762 = vmatmul.mubr.bf16.gmra.mrb[0].mxu0 %v724
    %v763 = vpop.f32.mrb[0].mxu0
    %v764 = vadd.f32 0.0, %v763
    %v765 = vpop.f32.mrb[0].mxu0
    %v766 = vpop.f32.mrb[0].mxu0
    %v767 = vpop.f32.mrb[0].mxu0
    %768 = vdwg.mxu0
    %769 = vrot.lane.b32.xlu0 %v172, 112
    %v770 = vpop.permute.xlu0 %769
    %771 = vrot.lane.b32.xlu0 %v172, 80
    %v772 = vpop.permute.xlu0 %771
    %v774 = vsel %vm176, %v770, 0
    %v777 = vsel %vm176, %v772, 0
    %779 = vmatprep.subr.bf16.mxu0 0
    %780 = vmatpush1.bf16.xpose.msra.mxu0 %v777
    %781 = vmatprep.subr.bf16.mxu0 0
    %782 = vmatpush1.bf16.xpose.msra.mxu0 0
    %783 = vmatprep.subr.bf16.mxu0 0
    %784 = vmatpush1.bf16.xpose.msra.mxu0 0
    %785 = vmatprep.subr.bf16.mxu0 0
    %786 = vmatpush1.bf16.xpose.msra.mxu0 0
    %787 = vmatprep.subr.bf16.mxu0 0
    %788 = vmatpush1.bf16.xpose.msra.mxu0 0
    %789 = vmatprep.subr.bf16.mxu0 0
    %790 = vmatpush1.bf16.xpose.msra.mxu0 0
    %791 = vmatprep.subr.bf16.mxu0 0
    %792 = vmatpush1.bf16.xpose.msra.mxu0 0
    %793 = vmatprep.subr.bf16.mxu0 0
    %794 = vmatpush1.bf16.xpose.msra.mxu0 0
    %795 = vmatprep.subr.bf16.mxu0 0
    %796 = vmatpush1.bf16.xpose.msra.mxu0 0
    %797 = vmatprep.subr.bf16.mxu0 0
    %798 = vmatpush1.bf16.xpose.msra.mxu0 0
    %799 = vmatprep.subr.bf16.mxu0 0
    %800 = vmatpush1.bf16.xpose.msra.mxu0 0
    %801 = vmatprep.subr.bf16.mxu0 0
    %802 = vmatpush1.bf16.xpose.msra.mxu0 0
    %803 = vmatprep.subr.bf16.mxu0 0
    %804 = vmatpush1.bf16.xpose.msra.mxu0 0
    %805 = vmatprep.subr.bf16.mxu0 0
    %806 = vmatpush1.bf16.xpose.msra.mxu0 0
    %807 = vmatprep.subr.bf16.mxu0 0
    %808 = vmatpush1.bf16.xpose.msra.mxu0 0
    %809 = vmatprep.subr.bf16.mxu0 0
    %810 = vmatpush1.bf16.xpose.msra.mxu0 0
    %811 = vmatprep.mubr.bf16.mxu0 0
    %812 = vmatmul.mubr.bf16.gmra.mrb[0].mxu0 %v774
    %v813 = vpop.f32.mrb[0].mxu0
    %v814 = vadd.f32 0.0, %v813
    %v815 = vpop.f32.mrb[0].mxu0
    %v816 = vpop.f32.mrb[0].mxu0
    %v817 = vpop.f32.mrb[0].mxu0
    %818 = vdwg.mxu0
    %v819 = vmul.f32 %v764, 0.35355338
    %v820 = vmul.f32 %v814, 0.35355338
    %v821 = vsel %vm275, %v819, -1e+30
    %v822 = vsel %vm275, %v820, -1e+30
    %v823 = vsel %vm176, %v821, -inf
    %824 = vmax.xlane.f32.xlu0 %v823
    %v825 = vpop.xlane.xlu0 %824
    %v826 = vsel %vm176, %v822, -inf
    %827 = vmax.xlane.f32.xlu0 %v826
    %v828 = vpop.xlane.xlu0 %827
    %v829 = vsub.f32 %v821, %v825
    %v830 = vsub.f32 %v822, %v828
    %v831 = vmul.f32 %v829, 1.442695
    %v832 = vpow.pop %v831
    %v833 = vmul.f32 %v830, 1.442695
    %v834 = vpow.pop %v833
    %v835 = vsel %vm176, %v832, 0.0
    %836 = vadd.xlane.f32.xlu0 %v835
    %v837 = vpop.xlane.xlu0 %836
    %v838 = vsel %vm176, %v834, 0.0
    %839 = vadd.xlane.f32.xlu0 %v838
    %v840 = vpop.xlane.xlu0 %839
    %v841 = vrcp.pop %v837
    %v842 = vrcp.pop %v840
    %v843 = vmul.f32 %v832, %v841
    %v844 = vmul.f32 %v834, %v842
    %v845 = vpack.c.bf16 %v843, %v843
    %v846 = vpack.c.bf16 %v844, %v844
    %847 = vrot.lane.b32.xlu0 %v171, 48
    %v848 = vpop.permute.xlu0 %847
    %v850 = vsel %vm176, %v845, 0
    %v853 = vsel %vm307, %v848, 0
    %855 = vmatprep.subr.bf16.mxu0 0
    %856 = vmatpush1.bf16.msra.mxu0 %v853
    %857 = vmatprep.subr.bf16.mxu0 0
    %858 = vmatpush1.bf16.msra.mxu0 0
    %859 = vmatprep.subr.bf16.mxu0 0
    %860 = vmatpush1.bf16.msra.mxu0 0
    %861 = vmatprep.subr.bf16.mxu0 0
    %862 = vmatpush1.bf16.msra.mxu0 0
    %863 = vmatprep.subr.bf16.mxu0 0
    %864 = vmatpush1.bf16.msra.mxu0 0
    %865 = vmatprep.subr.bf16.mxu0 0
    %866 = vmatpush1.bf16.msra.mxu0 0
    %867 = vmatprep.subr.bf16.mxu0 0
    %868 = vmatpush1.bf16.msra.mxu0 0
    %869 = vmatprep.subr.bf16.mxu0 0
    %870 = vmatpush1.bf16.msra.mxu0 0
    %871 = vmatprep.subr.bf16.mxu0 0
    %872 = vmatpush1.bf16.msra.mxu0 0
    %873 = vmatprep.subr.bf16.mxu0 0
    %874 = vmatpush1.bf16.msra.mxu0 0
    %875 = vmatprep.subr.bf16.mxu0 0
    %876 = vmatpush1.bf16.msra.mxu0 0
    %877 = vmatprep.subr.bf16.mxu0 0
    %878 = vmatpush1.bf16.msra.mxu0 0
    %879 = vmatprep.subr.bf16.mxu0 0
    %880 = vmatpush1.bf16.msra.mxu0 0
    %881 = vmatprep.subr.bf16.mxu0 0
    %882 = vmatpush1.bf16.msra.mxu0 0
    %883 = vmatprep.subr.bf16.mxu0 0
    %884 = vmatpush1.bf16.msra.mxu0 0
    %885 = vmatprep.subr.bf16.mxu0 0
    %886 = vmatpush1.bf16.msra.mxu0 0
    %887 = vmatprep.mubr.bf16.mxu0 0
    %888 = vmatmul.mubr.bf16.gmra.mrb[0].mxu0 %v850
    %v889 = vpop.f32.mrb[0].mxu0
    %v890 = vadd.f32 0.0, %v889
    %v891 = vpop.f32.mrb[0].mxu0
    %v892 = vpop.f32.mrb[0].mxu0
    %v893 = vpop.f32.mrb[0].mxu0
    %894 = vdwg.mxu0
    %895 = vrot.lane.b32.xlu0 %v172, 48
    %v896 = vpop.permute.xlu0 %895
    %v898 = vsel %vm176, %v846, 0
    %v901 = vsel %vm307, %v896, 0
    %903 = vmatprep.subr.bf16.mxu0 0
    %904 = vmatpush1.bf16.msra.mxu0 %v901
    %905 = vmatprep.subr.bf16.mxu0 0
    %906 = vmatpush1.bf16.msra.mxu0 0
    %907 = vmatprep.subr.bf16.mxu0 0
    %908 = vmatpush1.bf16.msra.mxu0 0
    %909 = vmatprep.subr.bf16.mxu0 0
    %910 = vmatpush1.bf16.msra.mxu0 0
    %911 = vmatprep.subr.bf16.mxu0 0
    %912 = vmatpush1.bf16.msra.mxu0 0
    %913 = vmatprep.subr.bf16.mxu0 0
    %914 = vmatpush1.bf16.msra.mxu0 0
    %915 = vmatprep.subr.bf16.mxu0 0
    %916 = vmatpush1.bf16.msra.mxu0 0
    %917 = vmatprep.subr.bf16.mxu0 0
    %918 = vmatpush1.bf16.msra.mxu0 0
    %919 = vmatprep.subr.bf16.mxu0 0
    %920 = vmatpush1.bf16.msra.mxu0 0
    %921 = vmatprep.subr.bf16.mxu0 0
    %922 = vmatpush1.bf16.msra.mxu0 0
    %923 = vmatprep.subr.bf16.mxu0 0
    %924 = vmatpush1.bf16.msra.mxu0 0
    %925 = vmatprep.subr.bf16.mxu0 0
    %926 = vmatpush1.bf16.msra.mxu0 0
    %927 = vmatprep.subr.bf16.mxu0 0
    %928 = vmatpush1.bf16.msra.mxu0 0
    %929 = vmatprep.subr.bf16.mxu0 0
    %930 = vmatpush1.bf16.msra.mxu0 0
    %931 = vmatprep.subr.bf16.mxu0 0
    %932 = vmatpush1.bf16.msra.mxu0 0
    %933 = vmatprep.subr.bf16.mxu0 0
    %934 = vmatpush1.bf16.msra.mxu0 0
    %935 = vmatprep.mubr.bf16.mxu0 0
    %936 = vmatmul.mubr.bf16.gmra.mrb[0].mxu0 %v898
    %v937 = vpop.f32.mrb[0].mxu0
    %v938 = vadd.f32 0.0, %v937
    %v939 = vpop.f32.mrb[0].mxu0
    %v940 = vpop.f32.mrb[0].mxu0
    %v941 = vpop.f32.mrb[0].mxu0
    %942 = vdwg.mxu0
    %v943 = vpack.c.bf16 %v938, %v890
    %v945 = vsel %vm176, %v943, 0
    %v948 = vsel %vm307, %v169, 0
    %950 = vmatprep.subr.bf16.mxu0 0
    %951 = vmatpush1.bf16.msra.mxu0 %v948
    %952 = vmatprep.subr.bf16.mxu0 0
    %953 = vmatpush1.bf16.msra.mxu0 0
    %954 = vmatprep.subr.bf16.mxu0 0
    %955 = vmatpush1.bf16.msra.mxu0 0
    %956 = vmatprep.subr.bf16.mxu0 0
    %957 = vmatpush1.bf16.msra.mxu0 0
    %958 = vmatprep.subr.bf16.mxu0 0
    %959 = vmatpush1.bf16.msra.mxu0 0
    %960 = vmatprep.subr.bf16.mxu0 0
    %961 = vmatpush1.bf16.msra.mxu0 0
    %962 = vmatprep.subr.bf16.mxu0 0
    %963 = vmatpush1.bf16.msra.mxu0 0
    %964 = vmatprep.subr.bf16.mxu0 0
    %965 = vmatpush1.bf16.msra.mxu0 0
    %966 = vmatprep.subr.bf16.mxu0 0
    %967 = vmatpush1.bf16.msra.mxu0 0
    %968 = vmatprep.subr.bf16.mxu0 0
    %969 = vmatpush1.bf16.msra.mxu0 0
    %970 = vmatprep.subr.bf16.mxu0 0
    %971 = vmatpush1.bf16.msra.mxu0 0
    %972 = vmatprep.subr.bf16.mxu0 0
    %973 = vmatpush1.bf16.msra.mxu0 0
    %974 = vmatprep.subr.bf16.mxu0 0
    %975 = vmatpush1.bf16.msra.mxu0 0
    %976 = vmatprep.subr.bf16.mxu0 0
    %977 = vmatpush1.bf16.msra.mxu0 0
    %978 = vmatprep.subr.bf16.mxu0 0
    %979 = vmatpush1.bf16.msra.mxu0 0
    %980 = vmatprep.subr.bf16.mxu0 0
    %981 = vmatpush1.bf16.msra.mxu0 0
    %982 = vmatprep.mubr.bf16.mxu0 0
    %983 = vmatmul.mubr.bf16.gmra.mrb[0].mxu0 %v945
    %v984 = vpop.f32.mrb[0].mxu0
    %v985 = vadd.f32 0.0, %v984
    %v986 = vpop.f32.mrb[0].mxu0
    %v987 = vpop.f32.mrb[0].mxu0
    %v988 = vadd.f32 0.0, %v987
    %v989 = vpop.f32.mrb[0].mxu0
    %990 = vdwg.mxu0
    %v991 = vadd.f32 %v713, %v985
    %v992 = vadd.f32 %v716, %v988
    %993 = vrot.lane.b32.xlu0 %v171, 104
    %v994 = vpop.permute.xlu0 %993
    %995 = vrot.lane.b32.xlu0 %v171, 72
    %v996 = vpop.permute.xlu0 %995
    %v998 = vsel %vm176, %v994, 0
    %v1001 = vsel %vm176, %v996, 0
    %1003 = vmatprep.subr.bf16.mxu0 0
    %1004 = vmatpush1.bf16.xpose.msra.mxu0 %v1001
    %1005 = vmatprep.subr.bf16.mxu0 0
    %1006 = vmatpush1.bf16.xpose.msra.mxu0 0
    %1007 = vmatprep.subr.bf16.mxu0 0
    %1008 = vmatpush1.bf16.xpose.msra.mxu0 0
    %1009 = vmatprep.subr.bf16.mxu0 0
    %1010 = vmatpush1.bf16.xpose.msra.mxu0 0
    %1011 = vmatprep.subr.bf16.mxu0 0
    %1012 = vmatpush1.bf16.xpose.msra.mxu0 0
    %1013 = vmatprep.subr.bf16.mxu0 0
    %1014 = vmatpush1.bf16.xpose.msra.mxu0 0
    %1015 = vmatprep.subr.bf16.mxu0 0
    %1016 = vmatpush1.bf16.xpose.msra.mxu0 0
    %1017 = vmatprep.subr.bf16.mxu0 0
    %1018 = vmatpush1.bf16.xpose.msra.mxu0 0
    %1019 = vmatprep.subr.bf16.mxu0 0
    %1020 = vmatpush1.bf16.xpose.msra.mxu0 0
    %1021 = vmatprep.subr.bf16.mxu0 0
    %1022 = vmatpush1.bf16.xpose.msra.mxu0 0
    %1023 = vmatprep.subr.bf16.mxu0 0
    %1024 = vmatpush1.bf16.xpose.msra.mxu0 0
    %1025 = vmatprep.subr.bf16.mxu0 0
    %1026 = vmatpush1.bf16.xpose.msra.mxu0 0
    %1027 = vmatprep.subr.bf16.mxu0 0
    %1028 = vmatpush1.bf16.xpose.msra.mxu0 0
    %1029 = vmatprep.subr.bf16.mxu0 0
    %1030 = vmatpush1.bf16.xpose.msra.mxu0 0
    %1031 = vmatprep.subr.bf16.mxu0 0
    %1032 = vmatpush1.bf16.xpose.msra.mxu0 0
    %1033 = vmatprep.subr.bf16.mxu0 0
    %1034 = vmatpush1.bf16.xpose.msra.mxu0 0
    %1035 = vmatprep.mubr.bf16.mxu0 0
    %1036 = vmatmul.mubr.bf16.gmra.mrb[0].mxu0 %v998
    %v1037 = vpop.f32.mrb[0].mxu0
    %v1038 = vadd.f32 0.0, %v1037
    %v1039 = vpop.f32.mrb[0].mxu0
    %v1040 = vpop.f32.mrb[0].mxu0
    %v1041 = vpop.f32.mrb[0].mxu0
    %1042 = vdwg.mxu0
    %1043 = vrot.lane.b32.xlu0 %v172, 104
    %v1044 = vpop.permute.xlu0 %1043
    %1045 = vrot.lane.b32.xlu0 %v172, 72
    %v1046 = vpop.permute.xlu0 %1045
    %v1048 = vsel %vm176, %v1044, 0
    %v1051 = vsel %vm176, %v1046, 0
    %1053 = vmatprep.subr.bf16.mxu0 0
    %1054 = vmatpush1.bf16.xpose.msra.mxu0 %v1051
    %1055 = vmatprep.subr.bf16.mxu0 0
    %1056 = vmatpush1.bf16.xpose.msra.mxu0 0
    %1057 = vmatprep.subr.bf16.mxu0 0
    %1058 = vmatpush1.bf16.xpose.msra.mxu0 0
    %1059 = vmatprep.subr.bf16.mxu0 0
    %1060 = vmatpush1.bf16.xpose.msra.mxu0 0
    %1061 = vmatprep.subr.bf16.mxu0 0
    %1062 = vmatpush1.bf16.xpose.msra.mxu0 0
    %1063 = vmatprep.subr.bf16.mxu0 0
    %1064 = vmatpush1.bf16.xpose.msra.mxu0 0
    %1065 = vmatprep.subr.bf16.mxu0 0
    %1066 = vmatpush1.bf16.xpose.msra.mxu0 0
    %1067 = vmatprep.subr.bf16.mxu0 0
    %1068 = vmatpush1.bf16.xpose.msra.mxu0 0
    %1069 = vmatprep.subr.bf16.mxu0 0
    %1070 = vmatpush1.bf16.xpose.msra.mxu0 0
    %1071 = vmatprep.subr.bf16.mxu0 0
    %1072 = vmatpush1.bf16.xpose.msra.mxu0 0
    %1073 = vmatprep.subr.bf16.mxu0 0
    %1074 = vmatpush1.bf16.xpose.msra.mxu0 0
    %1075 = vmatprep.subr.bf16.mxu0 0
    %1076 = vmatpush1.bf16.xpose.msra.mxu0 0
    %1077 = vmatprep.subr.bf16.mxu0 0
    %1078 = vmatpush1.bf16.xpose.msra.mxu0 0
    %1079 = vmatprep.subr.bf16.mxu0 0
    %1080 = vmatpush1.bf16.xpose.msra.mxu0 0
    %1081 = vmatprep.subr.bf16.mxu0 0
    %1082 = vmatpush1.bf16.xpose.msra.mxu0 0
    %1083 = vmatprep.subr.bf16.mxu0 0
    %1084 = vmatpush1.bf16.xpose.msra.mxu0 0
    %1085 = vmatprep.mubr.bf16.mxu0 0
    %1086 = vmatmul.mubr.bf16.gmra.mrb[0].mxu0 %v1048
    %v1087 = vpop.f32.mrb[0].mxu0
    %v1088 = vadd.f32 0.0, %v1087
    %v1089 = vpop.f32.mrb[0].mxu0
    %v1090 = vpop.f32.mrb[0].mxu0
    %v1091 = vpop.f32.mrb[0].mxu0
    %1092 = vdwg.mxu0
    %v1093 = vmul.f32 %v1038, 0.35355338
    %v1094 = vmul.f32 %v1088, 0.35355338
    %v1095 = vsel %vm275, %v1093, -1e+30
    %v1096 = vsel %vm275, %v1094, -1e+30
    %v1097 = vsel %vm176, %v1095, -inf
    %1098 = vmax.xlane.f32.xlu0 %v1097
    %v1099 = vpop.xlane.xlu0 %1098
    %v1100 = vsel %vm176, %v1096, -inf
    %1101 = vmax.xlane.f32.xlu0 %v1100
    %v1102 = vpop.xlane.xlu0 %1101
    %v1103 = vsub.f32 %v1095, %v1099
    %v1104 = vsub.f32 %v1096, %v1102
    %v1105 = vmul.f32 %v1103, 1.442695
    %v1106 = vpow.pop %v1105
    %v1107 = vmul.f32 %v1104, 1.442695
    %v1108 = vpow.pop %v1107
    %v1109 = vsel %vm176, %v1106, 0.0
    %1110 = vadd.xlane.f32.xlu0 %v1109
    %v1111 = vpop.xlane.xlu0 %1110
    %v1112 = vsel %vm176, %v1108, 0.0
    %1113 = vadd.xlane.f32.xlu0 %v1112
    %v1114 = vpop.xlane.xlu0 %1113
    %v1115 = vrcp.pop %v1111
    %v1116 = vrcp.pop %v1114
    %v1117 = vmul.f32 %v1106, %v1115
    %v1118 = vmul.f32 %v1108, %v1116
    %v1119 = vpack.c.bf16 %v1117, %v1117
    %v1120 = vpack.c.bf16 %v1118, %v1118
    %1121 = vrot.lane.b32.xlu0 %v171, 40
    %v1122 = vpop.permute.xlu0 %1121
    %v1124 = vsel %vm176, %v1119, 0
    %v1127 = vsel %vm307, %v1122, 0
    %1129 = vmatprep.subr.bf16.mxu0 0
    %1130 = vmatpush1.bf16.msra.mxu0 %v1127
    %1131 = vmatprep.subr.bf16.mxu0 0
    %1132 = vmatpush1.bf16.msra.mxu0 0
    %1133 = vmatprep.subr.bf16.mxu0 0
    %1134 = vmatpush1.bf16.msra.mxu0 0
    %1135 = vmatprep.subr.bf16.mxu0 0
    %1136 = vmatpush1.bf16.msra.mxu0 0
    %1137 = vmatprep.subr.bf16.mxu0 0
    %1138 = vmatpush1.bf16.msra.mxu0 0
    %1139 = vmatprep.subr.bf16.mxu0 0
    %1140 = vmatpush1.bf16.msra.mxu0 0
    %1141 = vmatprep.subr.bf16.mxu0 0
    %1142 = vmatpush1.bf16.msra.mxu0 0
    %1143 = vmatprep.subr.bf16.mxu0 0
    %1144 = vmatpush1.bf16.msra.mxu0 0
    %1145 = vmatprep.subr.bf16.mxu0 0
    %1146 = vmatpush1.bf16.msra.mxu0 0
    %1147 = vmatprep.subr.bf16.mxu0 0
    %1148 = vmatpush1.bf16.msra.mxu0 0
    %1149 = vmatprep.subr.bf16.mxu0 0
    %1150 = vmatpush1.bf16.msra.mxu0 0
    %1151 = vmatprep.subr.bf16.mxu0 0
    %1152 = vmatpush1.bf16.msra.mxu0 0
    %1153 = vmatprep.subr.bf16.mxu0 0
    %1154 = vmatpush1.bf16.msra.mxu0 0
    %1155 = vmatprep.subr.bf16.mxu0 0
    %1156 = vmatpush1.bf16.msra.mxu0 0
    %1157 = vmatprep.subr.bf16.mxu0 0
    %1158 = vmatpush1.bf16.msra.mxu0 0
    %1159 = vmatprep.subr.bf16.mxu0 0
    %1160 = vmatpush1.bf16.msra.mxu0 0
    %1161 = vmatprep.mubr.bf16.mxu0 0
    %1162 = vmatmul.mubr.bf16.gmra.mrb[0].mxu0 %v1124
    %v1163 = vpop.f32.mrb[0].mxu0
    %v1164 = vadd.f32 0.0, %v1163
    %v1165 = vpop.f32.mrb[0].mxu0
    %v1166 = vpop.f32.mrb[0].mxu0
    %v1167 = vpop.f32.mrb[0].mxu0
    %1168 = vdwg.mxu0
    %1169 = vrot.lane.b32.xlu0 %v172, 40
    %v1170 = vpop.permute.xlu0 %1169
    %v1172 = vsel %vm176, %v1120, 0
    %v1175 = vsel %vm307, %v1170, 0
    %1177 = vmatprep.subr.bf16.mxu0 0
    %1178 = vmatpush1.bf16.msra.mxu0 %v1175
    %1179 = vmatprep.subr.bf16.mxu0 0
    %1180 = vmatpush1.bf16.msra.mxu0 0
    %1181 = vmatprep.subr.bf16.mxu0 0
    %1182 = vmatpush1.bf16.msra.mxu0 0
    %1183 = vmatprep.subr.bf16.mxu0 0
    %1184 = vmatpush1.bf16.msra.mxu0 0
    %1185 = vmatprep.subr.bf16.mxu0 0
    %1186 = vmatpush1.bf16.msra.mxu0 0
    %1187 = vmatprep.subr.bf16.mxu0 0
    %1188 = vmatpush1.bf16.msra.mxu0 0
    %1189 = vmatprep.subr.bf16.mxu0 0
    %1190 = vmatpush1.bf16.msra.mxu0 0
    %1191 = vmatprep.subr.bf16.mxu0 0
    %1192 = vmatpush1.bf16.msra.mxu0 0
    %1193 = vmatprep.subr.bf16.mxu0 0
    %1194 = vmatpush1.bf16.msra.mxu0 0
    %1195 = vmatprep.subr.bf16.mxu0 0
    %1196 = vmatpush1.bf16.msra.mxu0 0
    %1197 = vmatprep.subr.bf16.mxu0 0
    %1198 = vmatpush1.bf16.msra.mxu0 0
    %1199 = vmatprep.subr.bf16.mxu0 0
    %1200 = vmatpush1.bf16.msra.mxu0 0
    %1201 = vmatprep.subr.bf16.mxu0 0
    %1202 = vmatpush1.bf16.msra.mxu0 0
    %1203 = vmatprep.subr.bf16.mxu0 0
    %1204 = vmatpush1.bf16.msra.mxu0 0
    %1205 = vmatprep.subr.bf16.mxu0 0
    %1206 = vmatpush1.bf16.msra.mxu0 0
    %1207 = vmatprep.subr.bf16.mxu0 0
    %1208 = vmatpush1.bf16.msra.mxu0 0
    %1209 = vmatprep.mubr.bf16.mxu0 0
    %1210 = vmatmul.mubr.bf16.gmra.mrb[0].mxu0 %v1172
    %v1211 = vpop.f32.mrb[0].mxu0
    %v1212 = vadd.f32 0.0, %v1211
    %v1213 = vpop.f32.mrb[0].mxu0
    %v1214 = vpop.f32.mrb[0].mxu0
    %v1215 = vpop.f32.mrb[0].mxu0
    %1216 = vdwg.mxu0
    %v1217 = vpack.c.bf16 %v1212, %v1164
    %v1219 = vsel %vm176, %v1217, 0
    %v1222 = vsel %vm307, %v170, 0
    %1224 = vmatprep.subr.bf16.mxu0 0
    %1225 = vmatpush1.bf16.msra.mxu0 %v1222
    %1226 = vmatprep.subr.bf16.mxu0 0
    %1227 = vmatpush1.bf16.msra.mxu0 0
    %1228 = vmatprep.subr.bf16.mxu0 0
    %1229 = vmatpush1.bf16.msra.mxu0 0
    %1230 = vmatprep.subr.bf16.mxu0 0
    %1231 = vmatpush1.bf16.msra.mxu0 0
    %1232 = vmatprep.subr.bf16.mxu0 0
    %1233 = vmatpush1.bf16.msra.mxu0 0
    %1234 = vmatprep.subr.bf16.mxu0 0
    %1235 = vmatpush1.bf16.msra.mxu0 0
    %1236 = vmatprep.subr.bf16.mxu0 0
    %1237 = vmatpush1.bf16.msra.mxu0 0
    %1238 = vmatprep.subr.bf16.mxu0 0
    %1239 = vmatpush1.bf16.msra.mxu0 0
    %1240 = vmatprep.subr.bf16.mxu0 0
    %1241 = vmatpush1.bf16.msra.mxu0 0
    %1242 = vmatprep.subr.bf16.mxu0 0
    %1243 = vmatpush1.bf16.msra.mxu0 0
    %1244 = vmatprep.subr.bf16.mxu0 0
    %1245 = vmatpush1.bf16.msra.mxu0 0
    %1246 = vmatprep.subr.bf16.mxu0 0
    %1247 = vmatpush1.bf16.msra.mxu0 0
    %1248 = vmatprep.subr.bf16.mxu0 0
    %1249 = vmatpush1.bf16.msra.mxu0 0
    %1250 = vmatprep.subr.bf16.mxu0 0
    %1251 = vmatpush1.bf16.msra.mxu0 0
    %1252 = vmatprep.subr.bf16.mxu0 0
    %1253 = vmatpush1.bf16.msra.mxu0 0
    %1254 = vmatprep.subr.bf16.mxu0 0
    %1255 = vmatpush1.bf16.msra.mxu0 0
    %1256 = vmatprep.mubr.bf16.mxu0 0
    %1257 = vmatmul.mubr.bf16.gmra.mrb[0].mxu0 %v1219
    %v1258 = vpop.f32.mrb[0].mxu0
    %v1259 = vadd.f32 0.0, %v1258
    %v1260 = vpop.f32.mrb[0].mxu0
    %v1261 = vpop.f32.mrb[0].mxu0
    %v1262 = vadd.f32 0.0, %v1261
    %v1263 = vpop.f32.mrb[0].mxu0
    %1264 = vdwg.mxu0
    %v1265 = vadd.f32 %v991, %v1259
    %v1266 = vadd.f32 %v992, %v1262
    %v1267 = vadd.f32 %v46, %v1265
    %v1268 = vadd.f32 %v47, %v1266
    %v1269 = vld [vmem:[%s6] sm:$0x1]
    %v1271 = vlaneseq
    %v1272 = vshrl.u32 %v1271, 7
    %v1273 = vsub.s32 0, %v1272
    %v1274 = vrot.slane %v1269, %v1273
    %v1276 = vadd.f32 %v1267, %v1274
    %v1277 = vadd.f32 %v1268, %v1274
    %v1278 = vld [vmem:[%s7] sm:$0x1]
    %v1279 = vld [vmem:[%s8] sm:$0x1]
    %v1280 = vsel %vm50, %v1276, 0.0
    %1281 = vadd.xlane.f32.xlu0 %v1280
    %v1282 = vpop.xlane.xlu0 %1281
    %v1283 = vsel %vm50, %v1277, 0.0
    %1284 = vadd.xlane.f32.xlu0 %v1283
    %v1285 = vpop.xlane.xlu0 %1284
    %v1286 = vmul.f32 %v1282, %v57
    %v1287 = vmul.f32 %v1285, %v57
    %v1288 = vsub.f32 %v1276, %v1286
    %v1289 = vsub.f32 %v1277, %v1287
    %v1290 = vmul.f32 %v1288, %v1288
    %v1291 = vmul.f32 %v1289, %v1289
    %v1292 = vsel %vm50, %v1290, 0.0
    %1293 = vadd.xlane.f32.xlu0 %v1292
    %v1294 = vpop.xlane.xlu0 %1293
    %v1295 = vsel %vm50, %v1291, 0.0
    %1296 = vadd.xlane.f32.xlu0 %v1295
    %v1297 = vpop.xlane.xlu0 %1296
    %v1298 = vmul.f32 %v1294, %v57
    %v1299 = vmul.f32 %v1297, %v57
    %v1300 = vadd.f32 %v1298, 1e-05
    %v1301 = vadd.f32 %v1299, 1e-05
    %v1302 = vrsqrt.pop %v1300
    %v1303 = vrsqrt.pop %v1301
    %v1304 = vmul.f32 %v1288, %v1302
    %v1305 = vmul.f32 %v1289, %v1303
    %v1307 = vlaneseq
    %v1308 = vshrl.u32 %v1307, 7
    %v1309 = vsub.s32 0, %v1308
    %v1310 = vrot.slane %v1278, %v1309
    %v1312 = vmul.f32 %v1304, %v1310
    %v1313 = vmul.f32 %v1305, %v1310
    %v1315 = vlaneseq
    %v1316 = vshrl.u32 %v1315, 7
    %v1317 = vsub.s32 0, %v1316
    %v1318 = vrot.slane %v1279, %v1317
    %v1320 = vadd.f32 %v1312, %v1318
    %v1321 = vadd.f32 %v1313, %v1318
    %v1322 = vpack.c.bf16 %v1321, %v1320
    %v1323 = vld [vmem:[%s9] sm:$0xf]
    %v1324 = vld [vmem:[%s9 + $0x4] sm:$0xf]
    %v1325 = vld [vmem:[%s9 + $0x8] sm:$0xf]
    %v1326 = vld [vmem:[%s9 + $0xc] sm:$0xf]
    %v1327 = vld [vmem:[%s10] sm:$0x1]
    %v1329 = vlaneseq
    %v1330 = vshrl.u32 %v1329, 7
    %v1331 = vsub.s32 0, %v1330
    %v1332 = vrot.slane %v1327, %v1331
    %v1338 = vunpack.c.l.b16 %v1323
    %v1339 = vunpack.c.l.b16 %v1324
    %v1340 = vunpack.c.l.b16 %v1325
    %v1341 = vunpack.c.l.b16 %v1326
    %v1342 = vpack.c.b16 %v1339, %v1338
    %v1343 = vpack.c.b16 %v1341, %v1340
    %v1347 = vsel %vm50, %v1322, 0
    %1349 = vmatprep.subr.bf16.mxu0 0
    %1350 = vmatpush1.bf16.msra.mxu0 %v1342
    %1351 = vmatprep.subr.bf16.mxu0 0
    %1352 = vmatpush1.bf16.msra.mxu0 %v1343
    %1353 = vmatprep.subr.bf16.mxu0 0
    %1354 = vmatpush1.bf16.msra.mxu0 0
    %1355 = vmatprep.subr.bf16.mxu0 0
    %1356 = vmatpush1.bf16.msra.mxu0 0
    %1357 = vmatprep.subr.bf16.mxu0 0
    %1358 = vmatpush1.bf16.msra.mxu0 0
    %1359 = vmatprep.subr.bf16.mxu0 0
    %1360 = vmatpush1.bf16.msra.mxu0 0
    %1361 = vmatprep.subr.bf16.mxu0 0
    %1362 = vmatpush1.bf16.msra.mxu0 0
    %1363 = vmatprep.subr.bf16.mxu0 0
    %1364 = vmatpush1.bf16.msra.mxu0 0
    %1365 = vmatprep.subr.bf16.mxu0 0
    %1366 = vmatpush1.bf16.msra.mxu0 0
    %1367 = vmatprep.subr.bf16.mxu0 0
    %1368 = vmatpush1.bf16.msra.mxu0 0
    %1369 = vmatprep.subr.bf16.mxu0 0
    %1370 = vmatpush1.bf16.msra.mxu0 0
    %1371 = vmatprep.subr.bf16.mxu0 0
    %1372 = vmatpush1.bf16.msra.mxu0 0
    %1373 = vmatprep.subr.bf16.mxu0 0
    %1374 = vmatpush1.bf16.msra.mxu0 0
    %1375 = vmatprep.subr.bf16.mxu0 0
    %1376 = vmatpush1.bf16.msra.mxu0 0
    %1377 = vmatprep.subr.bf16.mxu0 0
    %1378 = vmatpush1.bf16.msra.mxu0 0
    %1379 = vmatprep.subr.bf16.mxu0 0
    %1380 = vmatpush1.bf16.msra.mxu0 0
    %1381 = vmatprep.mubr.bf16.mxu0 0
    %1382 = vmatmul.mubr.bf16.gmra.mrb[0].mxu0 %v1347
    %v1383 = vpop.f32.mrb[0].mxu0
    %v1384 = vadd.f32 %v1332, %v1383
    %v1385 = vpop.f32.mrb[0].mxu0
    %v1386 = vpop.f32.mrb[0].mxu0
    %v1387 = vadd.f32 %v1332, %v1386
    %v1388 = vpop.f32.mrb[0].mxu0
    %1389 = vdwg.mxu0
    %v1390 = vmul.f32 %v1384, 1.702
    %v1391 = vmul.f32 %v1387, 1.702
    %v1392 = vxor.u32 %v1390, 2147483648
    %v1393 = vxor.u32 %v1391, 2147483648
    %v1394 = vmul.f32 %v1392, 1.442695
    %v1395 = vpow.pop %v1394
    %v1396 = vmul.f32 %v1393, 1.442695
    %v1397 = vpow.pop %v1396
    %v1398 = vadd.f32 %v1395, 1.0
    %v1399 = vadd.f32 %v1397, 1.0
    %v1400 = vrcp.pop %v1398
    %v1401 = vmul.f32 1.0, %v1400
    %v1402 = vrcp.pop %v1399
    %v1403 = vmul.f32 1.0, %v1402
    %v1404 = vmul.f32 %v1384, %v1401
    %v1405 = vmul.f32 %v1387, %v1403
    %v1406 = vpack.c.bf16 %v1405, %v1404
    %v1407 = vld [vmem:[%s11] sm:$0xf]
    %v1408 = vld [vmem:[%s11 + $0x4] sm:$0xf]
    %v1409 = vld [vmem:[%s11 + $0x8] sm:$0xf]
    %v1410 = vld [vmem:[%s11 + $0xc] sm:$0xf]
    %v1411 = vld [vmem:[%s11 + $0x10] sm:$0xf]
    %v1412 = vld [vmem:[%s11 + $0x14] sm:$0xf]
    %v1413 = vld [vmem:[%s11 + $0x18] sm:$0xf]
    %v1414 = vld [vmem:[%s11 + $0x1c] sm:$0xf]
    %v1415 = vld [vmem:[%s11 + $0x20] sm:$0xf]
    %v1416 = vld [vmem:[%s11 + $0x24] sm:$0xf]
    %v1417 = vld [vmem:[%s11 + $0x28] sm:$0xf]
    %v1418 = vld [vmem:[%s11 + $0x2c] sm:$0xf]
    %v1419 = vld [vmem:[%s11 + $0x30] sm:$0xf]
    %v1420 = vld [vmem:[%s11 + $0x34] sm:$0xf]
    %v1421 = vld [vmem:[%s11 + $0x38] sm:$0xf]
    %v1422 = vld [vmem:[%s11 + $0x3c] sm:$0xf]
    %v1423 = vld [vmem:[%s12] sm:$0x1]
    %v1425 = vlaneseq
    %v1426 = vshrl.u32 %v1425, 7
    %v1427 = vsub.s32 0, %v1426
    %v1428 = vrot.slane %v1423, %v1427
    %v1446 = vunpack.c.l.b16 %v1407
    %v1447 = vunpack.c.l.b16 %v1408
    %v1448 = vunpack.c.l.b16 %v1409
    %v1449 = vunpack.c.l.b16 %v1410
    %v1450 = vunpack.c.l.b16 %v1411
    %v1451 = vunpack.c.l.b16 %v1412
    %v1452 = vunpack.c.l.b16 %v1413
    %v1453 = vunpack.c.l.b16 %v1414
    %v1454 = vunpack.c.l.b16 %v1415
    %v1455 = vunpack.c.l.b16 %v1416
    %v1456 = vunpack.c.l.b16 %v1417
    %v1457 = vunpack.c.l.b16 %v1418
    %v1458 = vunpack.c.l.b16 %v1419
    %v1459 = vunpack.c.l.b16 %v1420
    %v1460 = vunpack.c.l.b16 %v1421
    %v1461 = vunpack.c.l.b16 %v1422
    %v1462 = vpack.c.b16 %v1447, %v1446
    %v1463 = vpack.c.b16 %v1449, %v1448
    %v1464 = vpack.c.b16 %v1451, %v1450
    %v1465 = vpack.c.b16 %v1453, %v1452
    %v1466 = vpack.c.b16 %v1455, %v1454
    %v1467 = vpack.c.b16 %v1457, %v1456
    %v1468 = vpack.c.b16 %v1459, %v1458
    %v1469 = vpack.c.b16 %v1461, %v1460
    %1478 = vmatprep.subr.bf16.mxu0 0
    %1479 = vmatpush1.bf16.msra.mxu0 %v1462
    %1480 = vmatprep.subr.bf16.mxu0 0
    %1481 = vmatpush1.bf16.msra.mxu0 %v1463
    %1482 = vmatprep.subr.bf16.mxu0 0
    %1483 = vmatpush1.bf16.msra.mxu0 %v1464
    %1484 = vmatprep.subr.bf16.mxu0 0
    %1485 = vmatpush1.bf16.msra.mxu0 %v1465
    %1486 = vmatprep.subr.bf16.mxu0 0
    %1487 = vmatpush1.bf16.msra.mxu0 %v1466
    %1488 = vmatprep.subr.bf16.mxu0 0
    %1489 = vmatpush1.bf16.msra.mxu0 %v1467
    %1490 = vmatprep.subr.bf16.mxu0 0
    %1491 = vmatpush1.bf16.msra.mxu0 %v1468
    %1492 = vmatprep.subr.bf16.mxu0 0
    %1493 = vmatpush1.bf16.msra.mxu0 %v1469
    %1494 = vmatprep.subr.bf16.mxu0 0
    %1495 = vmatpush1.bf16.msra.mxu0 0
    %1496 = vmatprep.subr.bf16.mxu0 0
    %1497 = vmatpush1.bf16.msra.mxu0 0
    %1498 = vmatprep.subr.bf16.mxu0 0
    %1499 = vmatpush1.bf16.msra.mxu0 0
    %1500 = vmatprep.subr.bf16.mxu0 0
    %1501 = vmatpush1.bf16.msra.mxu0 0
    %1502 = vmatprep.subr.bf16.mxu0 0
    %1503 = vmatpush1.bf16.msra.mxu0 0
    %1504 = vmatprep.subr.bf16.mxu0 0
    %1505 = vmatpush1.bf16.msra.mxu0 0
    %1506 = vmatprep.subr.bf16.mxu0 0
    %1507 = vmatpush1.bf16.msra.mxu0 0
    %1508 = vmatprep.subr.bf16.mxu0 0
    %1509 = vmatpush1.bf16.msra.mxu0 0
    %1510 = vmatprep.mubr.bf16.mxu0 0
    %1511 = vmatmul.mubr.bf16.gmra.mrb[0].mxu0 %v1406
    %v1512 = vpop.f32.mrb[0].mxu0
    %v1513 = vadd.f32 %v1428, %v1512
    %v1514 = vpop.f32.mrb[0].mxu0
    %v1515 = vpop.f32.mrb[0].mxu0
    %v1516 = vadd.f32 %v1428, %v1515
    %v1517 = vpop.f32.mrb[0].mxu0
    %1518 = vdwg.mxu0
    %v1519 = vadd.f32 %v1276, %v1513
    %v1520 = vadd.f32 %v1277, %v1516
    %1521 = vst.msk [vmem:[#allocation2] sm:$0xff] %vm50, %v1519
    %1522 = vst.msk [vmem:[#allocation2 + $0x8] sm:$0xff] %vm50, %v1520
    // Predicated region
    $region54: #{tpu_custom_call.1} parent=1 // pred_check
      _
    $region55: #{tpu_custom_call.1} parent=1 // pred_check_branch
      %1524 = sbr.rel (0) target = $region57
    $region56: #{tpu_custom_call.1} parent=1 // pred_region
      %s1526 = ssub.s32 256, 256
      %1527 = vsyncadd [#allocation3], %s1526
      %s1528 = sshll.u32 [#allocation2], 4
      %s1529 = int_to_ptr.vmem [resolvable:$true] %s1528
      %1534 = dma.vmem_to_hbm [thread:$0]  %s1529, 256, %s13, [#allocation3], 128, 128, 8
    $region57: #{tpu_custom_call.1} parent=1 // pred_fallthru
      _
    // Predicated region
    $region58: #{tpu_custom_call.1} parent=1 // pred_check
      _
    $region59: #{tpu_custom_call.1} parent=1 // pred_check_branch
      %1536 = sbr.rel (0) target = $region61
    $region60: #{tpu_custom_call.1} parent=1 // pred_region
      %1537 = dma.done [#allocation3], 256
    $region61: #{tpu_custom_call.1} parent=1 // pred_fallthru
      _
    %1538 = vsyncpa [#allocation3], 1

// kernel: tpu_custom_call.1
$region0: #{tpu_custom_call.1}
  #allocation0 [shape = 'u32[]', space=smem, size = 0x4, offset = 0x4, fixed_abs, tag = 'smem constant byte address 0x4 - core index']
  #allocation1 [shape = 'u32[144,128]{1,0:T(1,128)}', space=vmem, size = 0x12000, scoped, tag = 'internal scratch']
  %s0 = inlined_call_operand.vmem [shape: f32[2,8,32], index: 0, kind: input, shape index: {}]
  %s1 = inlined_call_operand.vmem [shape: f32[1,32], index: 1, kind: input, shape index: {}]
  %s2 = inlined_call_operand.vmem [shape: f32[1,32], index: 2, kind: input, shape index: {}]
  %s3 = inlined_call_operand.vmem [shape: bf16[32,96], index: 3, kind: input, shape index: {}]
  %s4 = inlined_call_operand.vmem [shape: f32[1,96], index: 4, kind: input, shape index: {}]
  %s5 = inlined_call_operand.vmem [shape: bf16[32,32], index: 5, kind: input, shape index: {}]
  %s6 = inlined_call_operand.vmem [shape: f32[1,32], index: 6, kind: input, shape index: {}]
  %s7 = inlined_call_operand.vmem [shape: f32[1,32], index: 7, kind: input, shape index: {}]
  %s8 = inlined_call_operand.vmem [shape: f32[1,32], index: 8, kind: input, shape index: {}]
  %s9 = inlined_call_operand.vmem [shape: bf16[32,128], index: 9, kind: input, shape index: {}]
  %s10 = inlined_call_operand.vmem [shape: f32[1,128], index: 10, kind: input, shape index: {}]
  %s11 = inlined_call_operand.vmem [shape: bf16[128,32], index: 11, kind: input, shape index: {}]
  %s12 = inlined_call_operand.vmem [shape: f32[1,32], index: 12, kind: input, shape index: {}]
  %s13 = inlined_call_operand.hbm [shape: f32[2,8,32], index: 13, kind: output, shape index: {}]
  %s14 = sld [smem:[#allocation0]]
  $region62: #{tpu_custom_call.1} parent=0
    _
  %s16 = ssub.s32 1, %s14
  %s17 = scalar_select 0, %s16, %s14
  $region1: #{tpu_custom_call.1} parent=0
    #allocation2 [shape = 'u8[8192]{0}', space=vmem, size = 0x2000, scoped, tag = 'output window, operand 0, single buffered']
    #allocation3 [shape = 's32[1]{0}', space=sflag, size = 0x4, scoped, tag = 'scoped memory for tpu_custom_call.1']
    %18 = vsyncpa [#allocation3], 0
    // Predicated region
    $region2: #{tpu_custom_call.1} parent=1 // pred_check
      _
    $region3: #{tpu_custom_call.1} parent=1 // pred_check_branch
      %20 = sbr.rel (0) target = $region5
    $region4: #{tpu_custom_call.1} parent=1 // pred_region
      _
    $region5: #{tpu_custom_call.1} parent=1 // pred_fallthru
      _
    // Predicated region
    $region6: #{tpu_custom_call.1} parent=1 // pred_check
      _
    $region7: #{tpu_custom_call.1} parent=1 // pred_check_branch
      %22 = sbr.rel (0) target = $region9
    $region8: #{tpu_custom_call.1} parent=1 // pred_region
      _
    $region9: #{tpu_custom_call.1} parent=1 // pred_fallthru
      _
    // Predicated region
    $region10: #{tpu_custom_call.1} parent=1 // pred_check
      _
    $region11: #{tpu_custom_call.1} parent=1 // pred_check_branch
      %24 = sbr.rel (0) target = $region13
    $region12: #{tpu_custom_call.1} parent=1 // pred_region
      _
    $region13: #{tpu_custom_call.1} parent=1 // pred_fallthru
      _
    // Predicated region
    $region14: #{tpu_custom_call.1} parent=1 // pred_check
      _
    $region15: #{tpu_custom_call.1} parent=1 // pred_check_branch
      %26 = sbr.rel (0) target = $region17
    $region16: #{tpu_custom_call.1} parent=1 // pred_region
      _
    $region17: #{tpu_custom_call.1} parent=1 // pred_fallthru
      _
    // Predicated region
    $region18: #{tpu_custom_call.1} parent=1 // pred_check
      _
    $region19: #{tpu_custom_call.1} parent=1 // pred_check_branch
      %28 = sbr.rel (0) target = $region21
    $region20: #{tpu_custom_call.1} parent=1 // pred_region
      _
    $region21: #{tpu_custom_call.1} parent=1 // pred_fallthru
      _
    // Predicated region
    $region22: #{tpu_custom_call.1} parent=1 // pred_check
      _
    $region23: #{tpu_custom_call.1} parent=1 // pred_check_branch
      %30 = sbr.rel (0) target = $region25
    $region24: #{tpu_custom_call.1} parent=1 // pred_region
      _
    $region25: #{tpu_custom_call.1} parent=1 // pred_fallthru
      _
    // Predicated region
    $region26: #{tpu_custom_call.1} parent=1 // pred_check
      _
    $region27: #{tpu_custom_call.1} parent=1 // pred_check_branch
      %32 = sbr.rel (0) target = $region29
    $region28: #{tpu_custom_call.1} parent=1 // pred_region
      _
    $region29: #{tpu_custom_call.1} parent=1 // pred_fallthru
      _
    // Predicated region
    $region30: #{tpu_custom_call.1} parent=1 // pred_check
      _
    $region31: #{tpu_custom_call.1} parent=1 // pred_check_branch
      %34 = sbr.rel (0) target = $region33
    $region32: #{tpu_custom_call.1} parent=1 // pred_region
      _
    $region33: #{tpu_custom_call.1} parent=1 // pred_fallthru
      _
    // Predicated region
    $region34: #{tpu_custom_call.1} parent=1 // pred_check
      _
    $region35: #{tpu_custom_call.1} parent=1 // pred_check_branch
      %36 = sbr.rel (0) target = $region37
    $region36: #{tpu_custom_call.1} parent=1 // pred_region
      _
    $region37: #{tpu_custom_call.1} parent=1 // pred_fallthru
      _
    // Predicated region
    $region38: #{tpu_custom_call.1} parent=1 // pred_check
      _
    $region39: #{tpu_custom_call.1} parent=1 // pred_check_branch
      %38 = sbr.rel (0) target = $region41
    $region40: #{tpu_custom_call.1} parent=1 // pred_region
      _
    $region41: #{tpu_custom_call.1} parent=1 // pred_fallthru
      _
    // Predicated region
    $region42: #{tpu_custom_call.1} parent=1 // pred_check
      _
    $region43: #{tpu_custom_call.1} parent=1 // pred_check_branch
      %40 = sbr.rel (0) target = $region45
    $region44: #{tpu_custom_call.1} parent=1 // pred_region
      _
    $region45: #{tpu_custom_call.1} parent=1 // pred_fallthru
      _
    // Predicated region
    $region46: #{tpu_custom_call.1} parent=1 // pred_check
      _
    $region47: #{tpu_custom_call.1} parent=1 // pred_check_branch
      %42 = sbr.rel (0) target = $region49
    $region48: #{tpu_custom_call.1} parent=1 // pred_region
      _
    $region49: #{tpu_custom_call.1} parent=1 // pred_fallthru
      _
    // Predicated region
    $region50: #{tpu_custom_call.1} parent=1 // pred_check
      _
    $region51: #{tpu_custom_call.1} parent=1 // pred_check_branch
      %44 = sbr.rel (0) target = $region53
    $region52: #{tpu_custom_call.1} parent=1 // pred_region
      _
    $region53: #{tpu_custom_call.1} parent=1 // pred_fallthru
      _
    %v46 = vld [vmem:[%s0] sm:$0xff]
    %v47 = vld [vmem:[%s0 + $0x8] sm:$0xff]
    %v48 = vld [vmem:[%s1] sm:$0x1]
    %v49 = vld [vmem:[%s2] sm:$0x1]
    %vm50 = vcmask 261120
    %v51 = vsel %vm50, %v46, 0.0
    %52 = vadd.xlane.f32.xlu0 %v51
    %v53 = vpop.xlane.xlu0 %52
    %v54 = vsel %vm50, %v47, 0.0
    %55 = vadd.xlane.f32.xlu0 %v54
    %v56 = vpop.xlane.xlu0 %55
    %v57 = vrcp.pop 32.0
    %v58 = vmul.f32 %v53, %v57
    %v59 = vmul.f32 %v56, %v57
    %v60 = vsub.f32 %v46, %v58
    %v61 = vsub.f32 %v47, %v59
    %v62 = vmul.f32 %v60, %v60
    %v63 = vmul.f32 %v61, %v61
    %v64 = vsel %vm50, %v62, 0.0
    %65 = vadd.xlane.f32.xlu0 %v64
    %v66 = vpop.xlane.xlu0 %65
    %v67 = vsel %vm50, %v63, 0.0
    %68 = vadd.xlane.f32.xlu0 %v67
    %v69 = vpop.xlane.xlu0 %68
    %v70 = vmul.f32 %v66, %v57
    %v71 = vmul.f32 %v69, %v57
    %v72 = vadd.f32 %v70, 1e-05
    %v73 = vadd.f32 %v71, 1e-05
    %v74 = vrsqrt.pop %v72
    %v75 = vrsqrt.pop %v73
    %v76 = vmul.f32 %v60, %v74
    %v77 = vmul.f32 %v61, %v75
    %v79 = vlaneseq
    %v80 = vshrl.u32 %v79, 7
    %v81 = vsub.s32 0, %v80
    %v82 = vrot.slane %v48, %v81
    %v84 = vmul.f32 %v76, %v82
    %v85 = vmul.f32 %v77, %v82
    %v87 = vlaneseq
    %v88 = vshrl.u32 %v87, 7
    %v89 = vsub.s32 0, %v88
    %v90 = vrot.slane %v49, %v89
    %v92 = vadd.f32 %v84, %v90
    %v93 = vadd.f32 %v85, %v90
    %v94 = vpack.c.bf16 %v93, %v92
    %v95 = vld [vmem:[%s3] sm:$0xf]
    %v96 = vld [vmem:[%s3 + $0x4] sm:$0xf]
    %v97 = vld [vmem:[%s3 + $0x8] sm:$0xf]
    %v98 = vld [vmem:[%s3 + $0xc] sm:$0xf]
    %v99 = vld [vmem:[%s4] sm:$0x1]
    %v101 = vlaneseq
    %v102 = vshrl.u32 %v101, 7
    %v103 = vsub.s32 0, %v102
    %v104 = vrot.slane %v99, %v103
    %v110 = vunpack.c.l.b16 %v95
    %v111 = vunpack.c.l.b16 %v96
    %v112 = vunpack.c.l.b16 %v97
    %v113 = vunpack.c.l.b16 %v98
    %v114 = vpack.c.b16 %v111, %v110
    %v115 = vpack.c.b16 %v113, %v112
    %v119 = vsel %vm50, %v94, 0
    %121 = vmatprep.subr.bf16.mxu0 0
    %122 = vmatpush1.bf16.msra.mxu0 %v114
    %123 = vmatprep.subr.bf16.mxu0 0
    %124 = vmatpush1.bf16.msra.mxu0 %v115
    %125 = vmatprep.subr.bf16.mxu0 0
    %126 = vmatpush1.bf16.msra.mxu0 0
    %127 = vmatprep.subr.bf16.mxu0 0
    %128 = vmatpush1.bf16.msra.mxu0 0
    %129 = vmatprep.subr.bf16.mxu0 0
    %130 = vmatpush1.bf16.msra.mxu0 0
    %131 = vmatprep.subr.bf16.mxu0 0
    %132 = vmatpush1.bf16.msra.mxu0 0
    %133 = vmatprep.subr.bf16.mxu0 0
    %134 = vmatpush1.bf16.msra.mxu0 0
    %135 = vmatprep.subr.bf16.mxu0 0
    %136 = vmatpush1.bf16.msra.mxu0 0
    %137 = vmatprep.subr.bf16.mxu0 0
    %138 = vmatpush1.bf16.msra.mxu0 0
    %139 = vmatprep.subr.bf16.mxu0 0
    %140 = vmatpush1.bf16.msra.mxu0 0
    %141 = vmatprep.subr.bf16.mxu0 0
    %142 = vmatpush1.bf16.msra.mxu0 0
    %143 = vmatprep.subr.bf16.mxu0 0
    %144 = vmatpush1.bf16.msra.mxu0 0
    %145 = vmatprep.subr.bf16.mxu0 0
    %146 = vmatpush1.bf16.msra.mxu0 0
    %147 = vmatprep.subr.bf16.mxu0 0
    %148 = vmatpush1.bf16.msra.mxu0 0
    %149 = vmatprep.subr.bf16.mxu0 0
    %150 = vmatpush1.bf16.msra.mxu0 0
    %151 = vmatprep.subr.bf16.mxu0 0
    %152 = vmatpush1.bf16.msra.mxu0 0
    %153 = vmatprep.mubr.bf16.mxu0 0
    %154 = vmatmul.mubr.bf16.gmra.mrb[0].mxu0 %v119
    %v155 = vpop.f32.mrb[0].mxu0
    %v156 = vadd.f32 %v104, %v155
    %v157 = vpop.f32.mrb[0].mxu0
    %v158 = vpop.f32.mrb[0].mxu0
    %v159 = vadd.f32 %v104, %v158
    %v160 = vpop.f32.mrb[0].mxu0
    %161 = vdwg.mxu0
    %v162 = vlaneseq
    %v163 = vshrl.u32 %v162, 7
    %v164 = vlaneseq
    %v165 = vand.u32 %v164, 127
    %vm166 = vcmp.le.s32.totalorder %v165, %v163
    %v167 = vld [vmem:[%s5] sm:$0xf]
    %v168 = vld [vmem:[%s5 + $0x4] sm:$0xf]
    %v169 = vld [vmem:[%s5 + $0x8] sm:$0xf]
    %v170 = vld [vmem:[%s5 + $0xc] sm:$0xf]
    %v171 = vpack.c.bf16 %v156, %v156
    %v172 = vpack.c.bf16 %v159, %v159
    %174 = vrot.lane.b32.xlu0 %v171, 96
    %v175 = vpop.permute.xlu0 %174
    %vm176 = vcmask 64512
    %v178 = vsel %vm176, %v171, 0
    %v181 = vsel %vm176, %v175, 0
    %183 = vmatprep.subr.bf16.mxu0 0
    %184 = vmatpush1.bf16.xpose.msra.mxu0 %v181
    %185 = vmatprep.subr.bf16.mxu0 0
    %186 = vmatpush1.bf16.xpose.msra.mxu0 0
    %187 = vmatprep.subr.bf16.mxu0 0
    %188 = vmatpush1.bf16.xpose.msra.mxu0 0
    %189 = vmatprep.subr.bf16.mxu0 0
    %190 = vmatpush1.bf16.xpose.msra.mxu0 0
    %191 = vmatprep.subr.bf16.mxu0 0
    %192 = vmatpush1.bf16.xpose.msra.mxu0 0
    %193 = vmatprep.subr.bf16.mxu0 0
    %194 = vmatpush1.bf16.xpose.msra.mxu0 0
    %195 = vmatprep.subr.bf16.mxu0 0
    %196 = vmatpush1.bf16.xpose.msra.mxu0 0
    %197 = vmatprep.subr.bf16.mxu0 0
    %198 = vmatpush1.bf16.xpose.msra.mxu0 0
    %199 = vmatprep.subr.bf16.mxu0 0
    %200 = vmatpush1.bf16.xpose.msra.mxu0 0
    %201 = vmatprep.subr.bf16.mxu0 0
    %202 = vmatpush1.bf16.xpose.msra.mxu0 0
    %203 = vmatprep.subr.bf16.mxu0 0
    %204 = vmatpush1.bf16.xpose.msra.mxu0 0
    %205 = vmatprep.subr.bf16.mxu0 0
    %206 = vmatpush1.bf16.xpose.msra.mxu0 0
    %207 = vmatprep.subr.bf16.mxu0 0
    %208 = vmatpush1.bf16.xpose.msra.mxu0 0
    %209 = vmatprep.subr.bf16.mxu0 0
    %210 = vmatpush1.bf16.xpose.msra.mxu0 0
    %211 = vmatprep.subr.bf16.mxu0 0
    %212 = vmatpush1.bf16.xpose.msra.mxu0 0
    %213 = vmatprep.subr.bf16.mxu0 0
    %214 = vmatpush1.bf16.xpose.msra.mxu0 0
    %215 = vmatprep.mubr.bf16.mxu0 0
    %216 = vmatmul.mubr.bf16.gmra.mrb[0].mxu0 %v178
    %v217 = vpop.f32.mrb[0].mxu0
    %v218 = vadd.f32 0.0, %v217
    %v219 = vpop.f32.mrb[0].mxu0
    %v220 = vpop.f32.mrb[0].mxu0
    %v221 = vpop.f32.mrb[0].mxu0
    %222 = vdwg.mxu0
    %224 = vrot.lane.b32.xlu0 %v172, 96
    %v225 = vpop.permute.xlu0 %224
    %v227 = vsel %vm176, %v172, 0
    %v230 = vsel %vm176, %v225, 0
    %232 = vmatprep.subr.bf16.mxu0 0
    %233 = vmatpush1.bf16.xpose.msra.mxu0 %v230
    %234 = vmatprep.subr.bf16.mxu0 0
    %235 = vmatpush1.bf16.xpose.msra.mxu0 0
    %236 = vmatprep.subr.bf16.mxu0 0
    %237 = vmatpush1.bf16.xpose.msra.mxu0 0
    %238 = vmatprep.subr.bf16.mxu0 0
    %239 = vmatpush1.bf16.xpose.msra.mxu0 0
    %240 = vmatprep.subr.bf16.mxu0 0
    %241 = vmatpush1.bf16.xpose.msra.mxu0 0
    %242 = vmatprep.subr.bf16.mxu0 0
    %243 = vmatpush1.bf16.xpose.msra.mxu0 0
    %244 = vmatprep.subr.bf16.mxu0 0
    %245 = vmatpush1.bf16.xpose.msra.mxu0 0
    %246 = vmatprep.subr.bf16.mxu0 0
    %247 = vmatpush1.bf16.xpose.msra.mxu0 0
    %248 = vmatprep.subr.bf16.mxu0 0
    %249 = vmatpush1.bf16.xpose.msra.mxu0 0
    %250 = vmatprep.subr.bf16.mxu0 0
    %251 = vmatpush1.bf16.xpose.msra.mxu0 0
    %252 = vmatprep.subr.bf16.mxu0 0
    %253 = vmatpush1.bf16.xpose.msra.mxu0 0
    %254 = vmatprep.subr.bf16.mxu0 0
    %255 = vmatpush1.bf16.xpose.msra.mxu0 0
    %256 = vmatprep.subr.bf16.mxu0 0
    %257 = vmatpush1.bf16.xpose.msra.mxu0 0
    %258 = vmatprep.subr.bf16.mxu0 0
    %259 = vmatpush1.bf16.xpose.msra.mxu0 0
    %260 = vmatprep.subr.bf16.mxu0 0
    %261 = vmatpush1.bf16.xpose.msra.mxu0 0
    %262 = vmatprep.subr.bf16.mxu0 0
    %263 = vmatpush1.bf16.xpose.msra.mxu0 0
    %264 = vmatprep.mubr.bf16.mxu0 0
    %265 = vmatmul.mubr.bf16.gmra.mrb[0].mxu0 %v227
    %v266 = vpop.f32.mrb[0].mxu0
    %v267 = vadd.f32 0.0, %v266
    %v268 = vpop.f32.mrb[0].mxu0
    %v269 = vpop.f32.mrb[0].mxu0
    %v270 = vpop.f32.mrb[0].mxu0
    %271 = vdwg.mxu0
    %v272 = vmul.f32 %v218, 0.35355338
    %v273 = vmul.f32 %v267, 0.35355338
    %v274 = vsel %vm166, 1, 0
    %vm275 = vcmp.eq.s32.totalorder %v274, 1
    %v276 = vsel %vm275, %v272, -1e+30
    %v277 = vsel %vm275, %v273, -1e+30
    %v278 = vsel %vm176, %v276, -inf
    %279 = vmax.xlane.f32.xlu0 %v278
    %v280 = vpop.xlane.xlu0 %279
    %v281 = vsel %vm176, %v277, -inf
    %282 = vmax.xlane.f32.xlu0 %v281
    %v283 = vpop.xlane.xlu0 %282
    %v284 = vsub.f32 %v276, %v280
    %v285 = vsub.f32 %v277, %v283
    %v286 = vmul.f32 %v284, 1.442695
    %v287 = vpow.pop %v286
    %v288 = vmul.f32 %v285, 1.442695
    %v289 = vpow.pop %v288
    %v290 = vsel %vm176, %v287, 0.0
    %291 = vadd.xlane.f32.xlu0 %v290
    %v292 = vpop.xlane.xlu0 %291
    %v293 = vsel %vm176, %v289, 0.0
    %294 = vadd.xlane.f32.xlu0 %v293
    %v295 = vpop.xlane.xlu0 %294
    %v296 = vrcp.pop %v292
    %v297 = vrcp.pop %v295
    %v298 = vmul.f32 %v287, %v296
    %v299 = vmul.f32 %v289, %v297
    %v300 = vpack.c.bf16 %v298, %v298
    %v301 = vpack.c.bf16 %v299, %v299
    %302 = vrot.lane.b32.xlu0 %v171, 64
    %v303 = vpop.permute.xlu0 %302
    %v305 = vsel %vm176, %v300, 0
    %vm307 = vcmask 1043456
    %v309 = vsel %vm307, %v303, 0
    %311 = vmatprep.subr.bf16.mxu0 0
    %312 = vmatpush1.bf16.msra.mxu0 %v309
    %313 = vmatprep.subr.bf16.mxu0 0
    %314 = vmatpush1.bf16.msra.mxu0 0
    %315 = vmatprep.subr.bf16.mxu0 0
    %316 = vmatpush1.bf16.msra.mxu0 0
    %317 = vmatprep.subr.bf16.mxu0 0
    %318 = vmatpush1.bf16.msra.mxu0 0
    %319 = vmatprep.subr.bf16.mxu0 0
    %320 = vmatpush1.bf16.msra.mxu0 0
    %321 = vmatprep.subr.bf16.mxu0 0
    %322 = vmatpush1.bf16.msra.mxu0 0
    %323 = vmatprep.subr.bf16.mxu0 0
    %324 = vmatpush1.bf16.msra.mxu0 0
    %325 = vmatprep.subr.bf16.mxu0 0
    %326 = vmatpush1.bf16.msra.mxu0 0
    %327 = vmatprep.subr.bf16.mxu0 0
    %328 = vmatpush1.bf16.msra.mxu0 0
    %329 = vmatprep.subr.bf16.mxu0 0
    %330 = vmatpush1.bf16.msra.mxu0 0
    %331 = vmatprep.subr.bf16.mxu0 0
    %332 = vmatpush1.bf16.msra.mxu0 0
    %333 = vmatprep.subr.bf16.mxu0 0
    %334 = vmatpush1.bf16.msra.mxu0 0
    %335 = vmatprep.subr.bf16.mxu0 0
    %336 = vmatpush1.bf16.msra.mxu0 0
    %337 = vmatprep.subr.bf16.mxu0 0
    %338 = vmatpush1.bf16.msra.mxu0 0
    %339 = vmatprep.subr.bf16.mxu0 0
    %340 = vmatpush1.bf16.msra.mxu0 0
    %341 = vmatprep.subr.bf16.mxu0 0
    %342 = vmatpush1.bf16.msra.mxu0 0
    %343 = vmatprep.mubr.bf16.mxu0 0
    %344 = vmatmul.mubr.bf16.gmra.mrb[0].mxu0 %v305
    %v345 = vpop.f32.mrb[0].mxu0
    %v346 = vadd.f32 0.0, %v345
    %v347 = vpop.f32.mrb[0].mxu0
    %v348 = vpop.f32.mrb[0].mxu0
    %v349 = vpop.f32.mrb[0].mxu0
    %350 = vdwg.mxu0
    %351 = vrot.lane.b32.xlu0 %v172, 64
    %v352 = vpop.permute.xlu0 %351
    %v354 = vsel %vm176, %v301, 0
    %v357 = vsel %vm307, %v352, 0
    %359 = vmatprep.subr.bf16.mxu0 0
    %360 = vmatpush1.bf16.msra.mxu0 %v357
    %361 = vmatprep.subr.bf16.mxu0 0
    %362 = vmatpush1.bf16.msra.mxu0 0
    %363 = vmatprep.subr.bf16.mxu0 0
    %364 = vmatpush1.bf16.msra.mxu0 0
    %365 = vmatprep.subr.bf16.mxu0 0
    %366 = vmatpush1.bf16.msra.mxu0 0
    %367 = vmatprep.subr.bf16.mxu0 0
    %368 = vmatpush1.bf16.msra.mxu0 0
    %369 = vmatprep.subr.bf16.mxu0 0
    %370 = vmatpush1.bf16.msra.mxu0 0
    %371 = vmatprep.subr.bf16.mxu0 0
    %372 = vmatpush1.bf16.msra.mxu0 0
    %373 = vmatprep.subr.bf16.mxu0 0
    %374 = vmatpush1.bf16.msra.mxu0 0
    %375 = vmatprep.subr.bf16.mxu0 0
    %376 = vmatpush1.bf16.msra.mxu0 0
    %377 = vmatprep.subr.bf16.mxu0 0
    %378 = vmatpush1.bf16.msra.mxu0 0
    %379 = vmatprep.subr.bf16.mxu0 0
    %380 = vmatpush1.bf16.msra.mxu0 0
    %381 = vmatprep.subr.bf16.mxu0 0
    %382 = vmatpush1.bf16.msra.mxu0 0
    %383 = vmatprep.subr.bf16.mxu0 0
    %384 = vmatpush1.bf16.msra.mxu0 0
    %385 = vmatprep.subr.bf16.mxu0 0
    %386 = vmatpush1.bf16.msra.mxu0 0
    %387 = vmatprep.subr.bf16.mxu0 0
    %388 = vmatpush1.bf16.msra.mxu0 0
    %389 = vmatprep.subr.bf16.mxu0 0
    %390 = vmatpush1.bf16.msra.mxu0 0
    %391 = vmatprep.mubr.bf16.mxu0 0
    %392 = vmatmul.mubr.bf16.gmra.mrb[0].mxu0 %v354
    %v393 = vpop.f32.mrb[0].mxu0
    %v394 = vadd.f32 0.0, %v393
    %v395 = vpop.f32.mrb[0].mxu0
    %v396 = vpop.f32.mrb[0].mxu0
    %v397 = vpop.f32.mrb[0].mxu0
    %398 = vdwg.mxu0
    %v399 = vpack.c.bf16 %v394, %v346
    %400 = vrot.lane.b32.xlu0 %v171, 120
    %v401 = vpop.permute.xlu0 %400
    %402 = vrot.lane.b32.xlu0 %v171, 88
    %v403 = vpop.permute.xlu0 %402
    %v405 = vsel %vm176, %v401, 0
    %v408 = vsel %vm176, %v403, 0
    %410 = vmatprep.subr.bf16.mxu0 0
    %411 = vmatpush1.bf16.xpose.msra.mxu0 %v408
    %412 = vmatprep.subr.bf16.mxu0 0
    %413 = vmatpush1.bf16.xpose.msra.mxu0 0
    %414 = vmatprep.subr.bf16.mxu0 0
    %415 = vmatpush1.bf16.xpose.msra.mxu0 0
    %416 = vmatprep.subr.bf16.mxu0 0
    %417 = vmatpush1.bf16.xpose.msra.mxu0 0
    %418 = vmatprep.subr.bf16.mxu0 0
    %419 = vmatpush1.bf16.xpose.msra.mxu0 0
    %420 = vmatprep.subr.bf16.mxu0 0
    %421 = vmatpush1.bf16.xpose.msra.mxu0 0
    %422 = vmatprep.subr.bf16.mxu0 0
    %423 = vmatpush1.bf16.xpose.msra.mxu0 0
    %424 = vmatprep.subr.bf16.mxu0 0
    %425 = vmatpush1.bf16.xpose.msra.mxu0 0
    %426 = vmatprep.subr.bf16.mxu0 0
    %427 = vmatpush1.bf16.xpose.msra.mxu0 0
    %428 = vmatprep.subr.bf16.mxu0 0
    %429 = vmatpush1.bf16.xpose.msra.mxu0 0
    %430 = vmatprep.subr.bf16.mxu0 0
    %431 = vmatpush1.bf16.xpose.msra.mxu0 0
    %432 = vmatprep.subr.bf16.mxu0 0
    %433 = vmatpush1.bf16.xpose.msra.mxu0 0
    %434 = vmatprep.subr.bf16.mxu0 0
    %435 = vmatpush1.bf16.xpose.msra.mxu0 0
    %436 = vmatprep.subr.bf16.mxu0 0
    %437 = vmatpush1.bf16.xpose.msra.mxu0 0
    %438 = vmatprep.subr.bf16.mxu0 0
    %439 = vmatpush1.bf16.xpose.msra.mxu0 0
    %440 = vmatprep.subr.bf16.mxu0 0
    %441 = vmatpush1.bf16.xpose.msra.mxu0 0
    %442 = vmatprep.mubr.bf16.mxu0 0
    %443 = vmatmul.mubr.bf16.gmra.mrb[0].mxu0 %v405
    %v444 = vpop.f32.mrb[0].mxu0
    %v445 = vadd.f32 0.0, %v444
    %v446 = vpop.f32.mrb[0].mxu0
    %v447 = vpop.f32.mrb[0].mxu0
    %v448 = vpop.f32.mrb[0].mxu0
    %449 = vdwg.mxu0
    %450 = vrot.lane.b32.xlu0 %v172, 120
    %v451 = vpop.permute.xlu0 %450
    %452 = vrot.lane.b32.xlu0 %v172, 88
    %v453 = vpop.permute.xlu0 %452
    %v455 = vsel %vm176, %v451, 0
    %v458 = vsel %vm176, %v453, 0
    %460 = vmatprep.subr.bf16.mxu0 0
    %461 = vmatpush1.bf16.xpose.msra.mxu0 %v458
    %462 = vmatprep.subr.bf16.mxu0 0
    %463 = vmatpush1.bf16.xpose.msra.mxu0 0
    %464 = vmatprep.subr.bf16.mxu0 0
    %465 = vmatpush1.bf16.xpose.msra.mxu0 0
    %466 = vmatprep.subr.bf16.mxu0 0
    %467 = vmatpush1.bf16.xpose.msra.mxu0 0
    %468 = vmatprep.subr.bf16.mxu0 0
    %469 = vmatpush1.bf16.xpose.msra.mxu0 0
    %470 = vmatprep.subr.bf16.mxu0 0
    %471 = vmatpush1.bf16.xpose.msra.mxu0 0
    %472 = vmatprep.subr.bf16.mxu0 0
    %473 = vmatpush1.bf16.xpose.msra.mxu0 0
    %474 = vmatprep.subr.bf16.mxu0 0
    %475 = vmatpush1.bf16.xpose.msra.mxu0 0
    %476 = vmatprep.subr.bf16.mxu0 0
    %477 = vmatpush1.bf16.xpose.msra.mxu0 0
    %478 = vmatprep.subr.bf16.mxu0 0
    %479 = vmatpush1.bf16.xpose.msra.mxu0 0
    %480 = vmatprep.subr.bf16.mxu0 0
    %481 = vmatpush1.bf16.xpose.msra.mxu0 0
    %482 = vmatprep.subr.bf16.mxu0 0
    %483 = vmatpush1.bf16.xpose.msra.mxu0 0
    %484 = vmatprep.subr.bf16.mxu0 0
    %485 = vmatpush1.bf16.xpose.msra.mxu0 0
    %486 = vmatprep.subr.bf16.mxu0 0
    %487 = vmatpush1.bf16.xpose.msra.mxu0 0
    %488 = vmatprep.subr.bf16.mxu0 0
    %489 = vmatpush1.bf16.xpose.msra.mxu0 0
    %490 = vmatprep.subr.bf16.mxu0 0
    %491 = vmatpush1.bf16.xpose.msra.mxu0 0
    %492 = vmatprep.mubr.bf16.mxu0 0
    %493 = vmatmul.mubr.bf16.gmra.mrb[0].mxu0 %v455
    %v494 = vpop.f32.mrb[0].mxu0
    %v495 = vadd.f32 0.0, %v494
    %v496 = vpop.f32.mrb[0].mxu0
    %v497 = vpop.f32.mrb[0].mxu0
    %v498 = vpop.f32.mrb[0].mxu0
    %499 = vdwg.mxu0
    %v500 = vmul.f32 %v445, 0.35355338
    %v501 = vmul.f32 %v495, 0.35355338
    %v502 = vsel %vm275, %v500, -1e+30
    %v503 = vsel %vm275, %v501, -1e+30
    %v504 = vsel %vm176, %v502, -inf
    %505 = vmax.xlane.f32.xlu0 %v504
    %v506 = vpop.xlane.xlu0 %505
    %v507 = vsel %vm176, %v503, -inf
    %508 = vmax.xlane.f32.xlu0 %v507
    %v509 = vpop.xlane.xlu0 %508
    %v510 = vsub.f32 %v502, %v506
    %v511 = vsub.f32 %v503, %v509
    %v512 = vmul.f32 %v510, 1.442695
    %v513 = vpow.pop %v512
    %v514 = vmul.f32 %v511, 1.442695
    %v515 = vpow.pop %v514
    %v516 = vsel %vm176, %v513, 0.0
    %517 = vadd.xlane.f32.xlu0 %v516
    %v518 = vpop.xlane.xlu0 %517
    %v519 = vsel %vm176, %v515, 0.0
    %520 = vadd.xlane.f32.xlu0 %v519
    %v521 = vpop.xlane.xlu0 %520
    %v522 = vrcp.pop %v518
    %v523 = vrcp.pop %v521
    %v524 = vmul.f32 %v513, %v522
    %v525 = vmul.f32 %v515, %v523
    %v526 = vpack.c.bf16 %v524, %v524
    %v527 = vpack.c.bf16 %v525, %v525
    %528 = vrot.lane.b32.xlu0 %v171, 56
    %v529 = vpop.permute.xlu0 %528
    %v531 = vsel %vm176, %v526, 0
    %v534 = vsel %vm307, %v529, 0
    %536 = vmatprep.subr.bf16.mxu0 0
    %537 = vmatpush1.bf16.msra.mxu0 %v534
    %538 = vmatprep.subr.bf16.mxu0 0
    %539 = vmatpush1.bf16.msra.mxu0 0
    %540 = vmatprep.subr.bf16.mxu0 0
    %541 = vmatpush1.bf16.msra.mxu0 0
    %542 = vmatprep.subr.bf16.mxu0 0
    %543 = vmatpush1.bf16.msra.mxu0 0
    %544 = vmatprep.subr.bf16.mxu0 0
    %545 = vmatpush1.bf16.msra.mxu0 0
    %546 = vmatprep.subr.bf16.mxu0 0
    %547 = vmatpush1.bf16.msra.mxu0 0
    %548 = vmatprep.subr.bf16.mxu0 0
    %549 = vmatpush1.bf16.msra.mxu0 0
    %550 = vmatprep.subr.bf16.mxu0 0
    %551 = vmatpush1.bf16.msra.mxu0 0
    %552 = vmatprep.subr.bf16.mxu0 0
    %553 = vmatpush1.bf16.msra.mxu0 0
    %554 = vmatprep.subr.bf16.mxu0 0
    %555 = vmatpush1.bf16.msra.mxu0 0
    %556 = vmatprep.subr.bf16.mxu0 0
    %557 = vmatpush1.bf16.msra.mxu0 0
    %558 = vmatprep.subr.bf16.mxu0 0
    %559 = vmatpush1.bf16.msra.mxu0 0
    %560 = vmatprep.subr.bf16.mxu0 0
    %561 = vmatpush1.bf16.msra.mxu0 0
    %562 = vmatprep.subr.bf16.mxu0 0
    %563 = vmatpush1.bf16.msra.mxu0 0
    %564 = vmatprep.subr.bf16.mxu0 0
    %565 = vmatpush1.bf16.msra.mxu0 0
    %566 = vmatprep.subr.bf16.mxu0 0
    %567 = vmatpush1.bf16.msra.mxu0 0
    %568 = vmatprep.mubr.bf16.mxu0 0
    %569 = vmatmul.mubr.bf16.gmra.mrb[0].mxu0 %v531
    %v570 = vpop.f32.mrb[0].mxu0
    %v571 = vadd.f32 0.0, %v570
    %v572 = vpop.f32.mrb[0].mxu0
    %v573 = vpop.f32.mrb[0].mxu0
    %v574 = vpop.f32.mrb[0].mxu0
    %575 = vdwg.mxu0
    %576 = vrot.lane.b32.xlu0 %v172, 56
    %v577 = vpop.permute.xlu0 %576
    %v579 = vsel %vm176, %v527, 0
    %v582 = vsel %vm307, %v577, 0
    %584 = vmatprep.subr.bf16.mxu0 0
    %585 = vmatpush1.bf16.msra.mxu0 %v582
    %586 = vmatprep.subr.bf16.mxu0 0
    %587 = vmatpush1.bf16.msra.mxu0 0
    %588 = vmatprep.subr.bf16.mxu0 0
    %589 = vmatpush1.bf16.msra.mxu0 0
    %590 = vmatprep.subr.bf16.mxu0 0
    %591 = vmatpush1.bf16.msra.mxu0 0
    %592 = vmatprep.subr.bf16.mxu0 0
    %593 = vmatpush1.bf16.msra.mxu0 0
    %594 = vmatprep.subr.bf16.mxu0 0
    %595 = vmatpush1.bf16.msra.mxu0 0
    %596 = vmatprep.subr.bf16.mxu0 0
    %597 = vmatpush1.bf16.msra.mxu0 0
    %598 = vmatprep.subr.bf16.mxu0 0
    %599 = vmatpush1.bf16.msra.mxu0 0
    %600 = vmatprep.subr.bf16.mxu0 0
    %601 = vmatpush1.bf16.msra.mxu0 0
    %602 = vmatprep.subr.bf16.mxu0 0
    %603 = vmatpush1.bf16.msra.mxu0 0
    %604 = vmatprep.subr.bf16.mxu0 0
    %605 = vmatpush1.bf16.msra.mxu0 0
    %606 = vmatprep.subr.bf16.mxu0 0
    %607 = vmatpush1.bf16.msra.mxu0 0
    %608 = vmatprep.subr.bf16.mxu0 0
    %609 = vmatpush1.bf16.msra.mxu0 0
    %610 = vmatprep.subr.bf16.mxu0 0
    %611 = vmatpush1.bf16.msra.mxu0 0
    %612 = vmatprep.subr.bf16.mxu0 0
    %613 = vmatpush1.bf16.msra.mxu0 0
    %614 = vmatprep.subr.bf16.mxu0 0
    %615 = vmatpush1.bf16.msra.mxu0 0
    %616 = vmatprep.mubr.bf16.mxu0 0
    %617 = vmatmul.mubr.bf16.gmra.mrb[0].mxu0 %v579
    %v618 = vpop.f32.mrb[0].mxu0
    %v619 = vadd.f32 0.0, %v618
    %v620 = vpop.f32.mrb[0].mxu0
    %v621 = vpop.f32.mrb[0].mxu0
    %v622 = vpop.f32.mrb[0].mxu0
    %623 = vdwg.mxu0
    %v624 = vpack.c.bf16 %v619, %v571
    %v626 = vsel %vm176, %v624, 0
    %v629 = vsel %vm307, %v168, 0
    %631 = vmatprep.subr.bf16.mxu0 0
    %632 = vmatpush1.bf16.msra.mxu0 %v629
    %633 = vmatprep.subr.bf16.mxu0 0
    %634 = vmatpush1.bf16.msra.mxu0 0
    %635 = vmatprep.subr.bf16.mxu0 0
    %636 = vmatpush1.bf16.msra.mxu0 0
    %637 = vmatprep.subr.bf16.mxu0 0
    %638 = vmatpush1.bf16.msra.mxu0 0
    %639 = vmatprep.subr.bf16.mxu0 0
    %640 = vmatpush1.bf16.msra.mxu0 0
    %641 = vmatprep.subr.bf16.mxu0 0
    %642 = vmatpush1.bf16.msra.mxu0 0
    %643 = vmatprep.subr.bf16.mxu0 0
    %644 = vmatpush1.bf16.msra.mxu0 0
    %645 = vmatprep.subr.bf16.mxu0 0
    %646 = vmatpush1.bf16.msra.mxu0 0
    %647 = vmatprep.subr.bf16.mxu0 0
    %648 = vmatpush1.bf16.msra.mxu0 0
    %649 = vmatprep.subr.bf16.mxu0 0
    %650 = vmatpush1.bf16.msra.mxu0 0
    %651 = vmatprep.subr.bf16.mxu0 0
    %652 = vmatpush1.bf16.msra.mxu0 0
    %653 = vmatprep.subr.bf16.mxu0 0
    %654 = vmatpush1.bf16.msra.mxu0 0
    %655 = vmatprep.subr.bf16.mxu0 0
    %656 = vmatpush1.bf16.msra.mxu0 0
    %657 = vmatprep.subr.bf16.mxu0 0
    %658 = vmatpush1.bf16.msra.mxu0 0
    %659 = vmatprep.subr.bf16.mxu0 0
    %660 = vmatpush1.bf16.msra.mxu0 0
    %661 = vmatprep.subr.bf16.mxu0 0
    %662 = vmatpush1.bf16.msra.mxu0 0
    %663 = vmatprep.mubr.bf16.mxu0 0
    %664 = vmatmul.mubr.bf16.gmra.mrb[0].mxu0 %v626
    %v665 = vpop.f32.mrb[0].mxu0
    %v666 = vadd.f32 0.0, %v665
    %v667 = vpop.f32.mrb[0].mxu0
    %v668 = vpop.f32.mrb[0].mxu0
    %v669 = vadd.f32 0.0, %v668
    %v670 = vpop.f32.mrb[0].mxu0
    %671 = vdwg.mxu0
    %v673 = vsel %vm176, %v399, 0
    %v676 = vsel %vm307, %v167, 0
    %678 = vmatprep.subr.bf16.mxu0 0
    %679 = vmatpush1.bf16.msra.mxu0 %v676
    %680 = vmatprep.subr.bf16.mxu0 0
    %681 = vmatpush1.bf16.msra.mxu0 0
    %682 = vmatprep.subr.bf16.mxu0 0
    %683 = vmatpush1.bf16.msra.mxu0 0
    %684 = vmatprep.subr.bf16.mxu0 0
    %685 = vmatpush1.bf16.msra.mxu0 0
    %686 = vmatprep.subr.bf16.mxu0 0
    %687 = vmatpush1.bf16.msra.mxu0 0
    %688 = vmatprep.subr.bf16.mxu0 0
    %689 = vmatpush1.bf16.msra.mxu0 0
    %690 = vmatprep.subr.bf16.mxu0 0
    %691 = vmatpush1.bf16.msra.mxu0 0
    %692 = vmatprep.subr.bf16.mxu0 0
    %693 = vmatpush1.bf16.msra.mxu0 0
    %694 = vmatprep.subr.bf16.mxu0 0
    %695 = vmatpush1.bf16.msra.mxu0 0
    %696 = vmatprep.subr.bf16.mxu0 0
    %697 = vmatpush1.bf16.msra.mxu0 0
    %698 = vmatprep.subr.bf16.mxu0 0
    %699 = vmatpush1.bf16.msra.mxu0 0
    %700 = vmatprep.subr.bf16.mxu0 0
    %701 = vmatpush1.bf16.msra.mxu0 0
    %702 = vmatprep.subr.bf16.mxu0 0
    %703 = vmatpush1.bf16.msra.mxu0 0
    %704 = vmatprep.subr.bf16.mxu0 0
    %705 = vmatpush1.bf16.msra.mxu0 0
    %706 = vmatprep.subr.bf16.mxu0 0
    %707 = vmatpush1.bf16.msra.mxu0 0
    %708 = vmatprep.subr.bf16.mxu0 0
    %709 = vmatpush1.bf16.msra.mxu0 0
    %710 = vmatprep.mubr.bf16.mxu0 0
    %711 = vmatmul.mubr.bf16.gmra.mrb[0].mxu0 %v673
    %v712 = vpop.f32.mrb[0].mxu0
    %v713 = vadd.f32 %v666, %v712
    %v714 = vpop.f32.mrb[0].mxu0
    %v715 = vpop.f32.mrb[0].mxu0
    %v716 = vadd.f32 %v669, %v715
    %v717 = vpop.f32.mrb[0].mxu0
    %718 = vdwg.mxu0
    %719 = vrot.lane.b32.xlu0 %v171, 112
    %v720 = vpop.permute.xlu0 %719
    %721 = vrot.lane.b32.xlu0 %v171, 80
    %v722 = vpop.permute.xlu0 %721
    %v724 = vsel %vm176, %v720, 0
    %v727 = vsel %vm176, %v722, 0
    %729 = vmatprep.subr.bf16.mxu0 0
    %730 = vmatpush1.bf16.xpose.msra.mxu0 %v727
    %731 = vmatprep.subr.bf16.mxu0 0
    %732 = vmatpush1.bf16.xpose.msra.mxu0 0
    %733 = vmatprep.subr.bf16.mxu0 0
    %734 = vmatpush1.bf16.xpose.msra.mxu0 0
    %735 = vmatprep.subr.bf16.mxu0 0
    %736 = vmatpush1.bf16.xpose.msra.mxu0 0
    %737 = vmatprep.subr.bf16.mxu0 0
    %738 = vmatpush1.bf16.xpose.msra.mxu0 0
    %739 = vmatprep.subr.bf16.mxu0 0
    %740 = vmatpush1.bf16.xpose.msra.mxu0 0
    %741 = vmatprep.subr.bf16.mxu0 0
    %742 = vmatpush1.bf16.xpose.msra.mxu0 0
    %743 = vmatprep.subr.bf16.mxu0 0
    %744 = vmatpush1.bf16.xpose.msra.mxu0 0
    %745 = vmatprep.subr.bf16.mxu0 0
    %746 = vmatpush1.bf16.xpose.msra.mxu0 0
    %747 = vmatprep.subr.bf16.mxu0 0
    %748 = vmatpush1.bf16.xpose.msra.mxu0 0
    %749 = vmatprep.subr.bf16.mxu0 0
    %750 = vmatpush1.bf16.xpose.msra.mxu0 0
    %751 = vmatprep.subr.bf16.mxu0 0
    %752 = vmatpush1.bf16.xpose.msra.mxu0 0
    %753 = vmatprep.subr.bf16.mxu0 0
    %754 = vmatpush1.bf16.xpose.msra.mxu0 0
    %755 = vmatprep.subr.bf16.mxu0 0
    %756 = vmatpush1.bf16.xpose.msra.mxu0 0
    %757 = vmatprep.subr.bf16.mxu0 0
    %758 = vmatpush1.bf16.xpose.msra.mxu0 0
    %759 = vmatprep.subr.bf16.mxu0 0
    %760 = vmatpush1.bf16.xpose.msra.mxu0 0
    %761 = vmatprep.mubr.bf16.mxu0 0
    %762 = vmatmul.mubr.bf16.gmra.mrb[0].mxu0 %v724
    %v763 = vpop.f32.mrb[0].mxu0
    %v764 = vadd.f32 0.0, %v763
    %v765 = vpop.f32.mrb[0].mxu0
    %v766 = vpop.f32.mrb[0].mxu0
    %v767 = vpop.f32.mrb[0].mxu0
    %768 = vdwg.mxu0
    %769 = vrot.lane.b32.xlu0 %v172, 112
    %v770 = vpop.permute.xlu0 %769
    %771 = vrot.lane.b32.xlu0 %v172, 80
    %v772 = vpop.permute.xlu0 %771
    %v774 = vsel %vm176, %v770, 0
    %v777 = vsel %vm176, %v772, 0
    %779 = vmatprep.subr.bf16.mxu0 0
    %780 = vmatpush1.bf16.xpose.msra.mxu0 %v777
    %781 = vmatprep.subr.bf16.mxu0 0
    %782 = vmatpush1.bf16.xpose.msra.mxu0 0
    %783 = vmatprep.subr.bf16.mxu0 0
    %784 = vmatpush1.bf16.xpose.msra.mxu0 0
    %785 = vmatprep.subr.bf16.mxu0 0
    %786 = vmatpush1.bf16.xpose.msra.mxu0 0
    %787 = vmatprep.subr.bf16.mxu0 0
    %788 = vmatpush1.bf16.xpose.msra.mxu0 0
    %789 = vmatprep.subr.bf16.mxu0 0
    %790 = vmatpush1.bf16.xpose.msra.mxu0 0
    %791 = vmatprep.subr.bf16.mxu0 0
    %792 = vmatpush1.bf16.xpose.msra.mxu0 0
    %793 = vmatprep.subr.bf16.mxu0 0
    %794 = vmatpush1.bf16.xpose.msra.mxu0 0
    %795 = vmatprep.subr.bf16.mxu0 0
    %796 = vmatpush1.bf16.xpose.msra.mxu0 0
    %797 = vmatprep.subr.bf16.mxu0 0
    %798 = vmatpush1.bf16.xpose.msra.mxu0 0
    %799 = vmatprep.subr.bf16.mxu0 0
    %800 = vmatpush1.bf16.xpose.msra.mxu0 0
    %801 = vmatprep.subr.bf16.mxu0 0
    %802 = vmatpush1.bf16.xpose.msra.mxu0 0
    %803 = vmatprep.subr.bf16.mxu0 0
    %804 = vmatpush1.bf16.xpose.msra.mxu0 0
    %805 = vmatprep.subr.bf16.mxu0 0
    %806 = vmatpush1.bf16.xpose.msra.mxu0 0
    %807 = vmatprep.subr.bf16.mxu0 0
    %808 = vmatpush1.bf16.xpose.msra.mxu0 0
    %809 = vmatprep.subr.bf16.mxu0 0
    %810 = vmatpush1.bf16.xpose.msra.mxu0 0
    %811 = vmatprep.mubr.bf16.mxu0 0
    %812 = vmatmul.mubr.bf16.gmra.mrb[0].mxu0 %v774
    %v813 = vpop.f32.mrb[0].mxu0
    %v814 = vadd.f32 0.0, %v813
    %v815 = vpop.f32.mrb[0].mxu0
    %v816 = vpop.f32.mrb[0].mxu0
    %v817 = vpop.f32.mrb[0].mxu0
    %818 = vdwg.mxu0
    %v819 = vmul.f32 %v764, 0.35355338
    %v820 = vmul.f32 %v814, 0.35355338
    %v821 = vsel %vm275, %v819, -1e+30
    %v822 = vsel %vm275, %v820, -1e+30
    %v823 = vsel %vm176, %v821, -inf
    %824 = vmax.xlane.f32.xlu0 %v823
    %v825 = vpop.xlane.xlu0 %824
    %v826 = vsel %vm176, %v822, -inf
    %827 = vmax.xlane.f32.xlu0 %v826
    %v828 = vpop.xlane.xlu0 %827
    %v829 = vsub.f32 %v821, %v825
    %v830 = vsub.f32 %v822, %v828
    %v831 = vmul.f32 %v829, 1.442695
    %v832 = vpow.pop %v831
    %v833 = vmul.f32 %v830, 1.442695
    %v834 = vpow.pop %v833
    %v835 = vsel %vm176, %v832, 0.0
    %836 = vadd.xlane.f32.xlu0 %v835
    %v837 = vpop.xlane.xlu0 %836
    %v838 = vsel %vm176, %v834, 0.0
    %839 = vadd.xlane.f32.xlu0 %v838
    %v840 = vpop.xlane.xlu0 %839
    %v841 = vrcp.pop %v837
    %v842 = vrcp.pop %v840
    %v843 = vmul.f32 %v832, %v841
    %v844 = vmul.f32 %v834, %v842
    %v845 = vpack.c.bf16 %v843, %v843
    %v846 = vpack.c.bf16 %v844, %v844
    %847 = vrot.lane.b32.xlu0 %v171, 48
    %v848 = vpop.permute.xlu0 %847
    %v850 = vsel %vm176, %v845, 0
    %v853 = vsel %vm307, %v848, 0
    %855 = vmatprep.subr.bf16.mxu0 0
    %856 = vmatpush1.bf16.msra.mxu0 %v853
    %857 = vmatprep.subr.bf16.mxu0 0
    %858 = vmatpush1.bf16.msra.mxu0 0
    %859 = vmatprep.subr.bf16.mxu0 0
    %860 = vmatpush1.bf16.msra.mxu0 0
    %861 = vmatprep.subr.bf16.mxu0 0
    %862 = vmatpush1.bf16.msra.mxu0 0
    %863 = vmatprep.subr.bf16.mxu0 0
    %864 = vmatpush1.bf16.msra.mxu0 0
    %865 = vmatprep.subr.bf16.mxu0 0
    %866 = vmatpush1.bf16.msra.mxu0 0
    %867 = vmatprep.subr.bf16.mxu0 0
    %868 = vmatpush1.bf16.msra.mxu0 0
    %869 = vmatprep.subr.bf16.mxu0 0
    %870 = vmatpush1.bf16.msra.mxu0 0
    %871 = vmatprep.subr.bf16.mxu0 0
    %872 = vmatpush1.bf16.msra.mxu0 0
    %873 = vmatprep.subr.bf16.mxu0 0
    %874 = vmatpush1.bf16.msra.mxu0 0
    %875 = vmatprep.subr.bf16.mxu0 0
    %876 = vmatpush1.bf16.msra.mxu0 0
    %877 = vmatprep.subr.bf16.mxu0 0
    %878 = vmatpush1.bf16.msra.mxu0 0
    %879 = vmatprep.subr.bf16.mxu0 0
    %880 = vmatpush1.bf16.msra.mxu0 0
    %881 = vmatprep.subr.bf16.mxu0 0
    %882 = vmatpush1.bf16.msra.mxu0 0
    %883 = vmatprep.subr.bf16.mxu0 0
    %884 = vmatpush1.bf16.msra.mxu0 0
    %885 = vmatprep.subr.bf16.mxu0 0
    %886 = vmatpush1.bf16.msra.mxu0 0
    %887 = vmatprep.mubr.bf16.mxu0 0
    %888 = vmatmul.mubr.bf16.gmra.mrb[0].mxu0 %v850
    %v889 = vpop.f32.mrb[0].mxu0
    %v890 = vadd.f32 0.0, %v889
    %v891 = vpop.f32.mrb[0].mxu0
    %v892 = vpop.f32.mrb[0].mxu0
    %v893 = vpop.f32.mrb[0].mxu0
    %894 = vdwg.mxu0
    %895 = vrot.lane.b32.xlu0 %v172, 48
    %v896 = vpop.permute.xlu0 %895
    %v898 = vsel %vm176, %v846, 0
    %v901 = vsel %vm307, %v896, 0
    %903 = vmatprep.subr.bf16.mxu0 0
    %904 = vmatpush1.bf16.msra.mxu0 %v901
    %905 = vmatprep.subr.bf16.mxu0 0
    %906 = vmatpush1.bf16.msra.mxu0 0
    %907 = vmatprep.subr.bf16.mxu0 0
    %908 = vmatpush1.bf16.msra.mxu0 0
    %909 = vmatprep.subr.bf16.mxu0 0
    %910 = vmatpush1.bf16.msra.mxu0 0
    %911 = vmatprep.subr.bf16.mxu0 0
    %912 = vmatpush1.bf16.msra.mxu0 0
    %913 = vmatprep.subr.bf16.mxu0 0
    %914 = vmatpush1.bf16.msra.mxu0 0
    %915 = vmatprep.subr.bf16.mxu0 0
    %916 = vmatpush1.bf16.msra.mxu0 0
    %917 = vmatprep.subr.bf16.mxu0 0
    %918 = vmatpush1.bf16.msra.mxu0 0
    %919 = vmatprep.subr.bf16.mxu0 0
    %920 = vmatpush1.bf16.msra.mxu0 0
    %921 = vmatprep.subr.bf16.mxu0 0
    %922 = vmatpush1.bf16.msra.mxu0 0
    %923 = vmatprep.subr.bf16.mxu0 0
    %924 = vmatpush1.bf16.msra.mxu0 0
    %925 = vmatprep.subr.bf16.mxu0 0
    %926 = vmatpush1.bf16.msra.mxu0 0
    %927 = vmatprep.subr.bf16.mxu0 0
    %928 = vmatpush1.bf16.msra.mxu0 0
    %929 = vmatprep.subr.bf16.mxu0 0
    %930 = vmatpush1.bf16.msra.mxu0 0
    %931 = vmatprep.subr.bf16.mxu0 0
    %932 = vmatpush1.bf16.msra.mxu0 0
    %933 = vmatprep.subr.bf16.mxu0 0
    %934 = vmatpush1.bf16.msra.mxu0 0
    %935 = vmatprep.mubr.bf16.mxu0 0
    %936 = vmatmul.mubr.bf16.gmra.mrb[0].mxu0 %v898
    %v937 = vpop.f32.mrb[0].mxu0
    %v938 = vadd.f32 0.0, %v937
    %v939 = vpop.f32.mrb[0].mxu0
    %v940 = vpop.f32.mrb[0].mxu0
    %v941 = vpop.f32.mrb[0].mxu0
    %942 = vdwg.mxu0
    %v943 = vpack.c.bf16 %v938, %v890
    %v945 = vsel %vm176, %v943, 0
    %v948 = vsel %vm307, %v169, 0
    %950 = vmatprep.subr.bf16.mxu0 0
    %951 = vmatpush1.bf16.msra.mxu0 %v948
    %952 = vmatprep.subr.bf16.mxu0 0
    %953 = vmatpush1.bf16.msra.mxu0 0
    %954 = vmatprep.subr.bf16.mxu0 0
    %955 = vmatpush1.bf16.msra.mxu0 0
    %956 = vmatprep.subr.bf16.mxu0 0
    %957 = vmatpush1.bf16.msra.mxu0 0
    %958 = vmatprep.subr.bf16.mxu0 0
    %959 = vmatpush1.bf16.msra.mxu0 0
    %960 = vmatprep.subr.bf16.mxu0 0
    %961 = vmatpush1.bf16.msra.mxu0 0
    %962 = vmatprep.subr.bf16.mxu0 0
    %963 = vmatpush1.bf16.msra.mxu0 0
    %964 = vmatprep.subr.bf16.mxu0 0
    %965 = vmatpush1.bf16.msra.mxu0 0
    %966 = vmatprep.subr.bf16.mxu0 0
    %967 = vmatpush1.bf16.msra.mxu0 0
    %968 = vmatprep.subr.bf16.mxu0 0
    %969 = vmatpush1.bf16.msra.mxu0 0
    %970 = vmatprep.subr.bf16.mxu0 0
    %971 = vmatpush1.bf16.msra.mxu0 0
    %972 = vmatprep.subr.bf16.mxu0 0
    %973 = vmatpush1.bf16.msra.mxu0 0
    %974 = vmatprep.subr.bf16.mxu0 0
    %975 = vmatpush1.bf16.msra.mxu0 0
    %976 = vmatprep.subr.bf16.mxu0 0
    %977 = vmatpush1.bf16.msra.mxu0 0
    %978 = vmatprep.subr.bf16.mxu0 0
    %979 = vmatpush1.bf16.msra.mxu0 0
    %980 = vmatprep.subr.bf16.mxu0 0
    %981 = vmatpush1.bf16.msra.mxu0 0
    %982 = vmatprep.mubr.bf16.mxu0 0
    %983 = vmatmul.mubr.bf16.gmra.mrb[0].mxu0 %v945
    %v984 = vpop.f32.mrb[0].mxu0
    %v985 = vadd.f32 0.0, %v984
    %v986 = vpop.f32.mrb[0].mxu0
    %v987 = vpop.f32.mrb[0].mxu0
    %v988 = vadd.f32 0.0, %v987
    %v989 = vpop.f32.mrb[0].mxu0
    %990 = vdwg.mxu0
    %v991 = vadd.f32 %v713, %v985
    %v992 = vadd.f32 %v716, %v988
    %993 = vrot.lane.b32.xlu0 %v171, 104
    %v994 = vpop.permute.xlu0 %993
    %995 = vrot.lane.b32.xlu0 %v171, 72
    %v996 = vpop.permute.xlu0 %995
    %v998 = vsel %vm176, %v994, 0
    %v1001 = vsel %vm176, %v996, 0
    %1003 = vmatprep.subr.bf16.mxu0 0
    %1004 = vmatpush1.bf16.xpose.msra.mxu0 %v1001
    %1005 = vmatprep.subr.bf16.mxu0 0
    %1006 = vmatpush1.bf16.xpose.msra.mxu0 0
    %1007 = vmatprep.subr.bf16.mxu0 0
    %1008 = vmatpush1.bf16.xpose.msra.mxu0 0
    %1009 = vmatprep.subr.bf16.mxu0 0
    %1010 = vmatpush1.bf16.xpose.msra.mxu0 0
    %1011 = vmatprep.subr.bf16.mxu0 0
    %1012 = vmatpush1.bf16.xpose.msra.mxu0 0
    %1013 = vmatprep.subr.bf16.mxu0 0
    %1014 = vmatpush1.bf16.xpose.msra.mxu0 0
    %1015 = vmatprep.subr.bf16.mxu0 0
    %1016 = vmatpush1.bf16.xpose.msra.mxu0 0
    %1017 = vmatprep.subr.bf16.mxu0 0
    %1018 = vmatpush1.bf16.xpose.msra.mxu0 0
    %1019 = vmatprep.subr.bf16.mxu0 0
    %1020 = vmatpush1.bf16.xpose.msra.mxu0 0
    %1021 = vmatprep.subr.bf16.mxu0 0
    %1022 = vmatpush1.bf16.xpose.msra.mxu0 0
    %1023 = vmatprep.subr.bf16.mxu0 0
    %1024 = vmatpush1.bf16.xpose.msra.mxu0 0
    %1025 = vmatprep.subr.bf16.mxu0 0
    %1026 = vmatpush1.bf16.xpose.msra.mxu0 0
    %1027 = vmatprep.subr.bf16.mxu0 0
    %1028 = vmatpush1.bf16.xpose.msra.mxu0 0
    %1029 = vmatprep.subr.bf16.mxu0 0
    %1030 = vmatpush1.bf16.xpose.msra.mxu0 0
    %1031 = vmatprep.subr.bf16.mxu0 0
    %1032 = vmatpush1.bf16.xpose.msra.mxu0 0
    %1033 = vmatprep.subr.bf16.mxu0 0
    %1034 = vmatpush1.bf16.xpose.msra.mxu0 0
    %1035 = vmatprep.mubr.bf16.mxu0 0
    %1036 = vmatmul.mubr.bf16.gmra.mrb[0].mxu0 %v998
    %v1037 = vpop.f32.mrb[0].mxu0
    %v1038 = vadd.f32 0.0, %v1037
    %v1039 = vpop.f32.mrb[0].mxu0
    %v1040 = vpop.f32.mrb[0].mxu0
    %v1041 = vpop.f32.mrb[0].mxu0
    %1042 = vdwg.mxu0
    %1043 = vrot.lane.b32.xlu0 %v172, 104
    %v1044 = vpop.permute.xlu0 %1043
    %1045 = vrot.lane.b32.xlu0 %v172, 72
    %v1046 = vpop.permute.xlu0 %1045
    %v1048 = vsel %vm176, %v1044, 0
    %v1051 = vsel %vm176, %v1046, 0
    %1053 = vmatprep.subr.bf16.mxu0 0
    %1054 = vmatpush1.bf16.xpose.msra.mxu0 %v1051
    %1055 = vmatprep.subr.bf16.mxu0 0
    %1056 = vmatpush1.bf16.xpose.msra.mxu0 0
    %1057 = vmatprep.subr.bf16.mxu0 0
    %1058 = vmatpush1.bf16.xpose.msra.mxu0 0
    %1059 = vmatprep.subr.bf16.mxu0 0
    %1060 = vmatpush1.bf16.xpose.msra.mxu0 0
    %1061 = vmatprep.subr.bf16.mxu0 0
    %1062 = vmatpush1.bf16.xpose.msra.mxu0 0
    %1063 = vmatprep.subr.bf16.mxu0 0
    %1064 = vmatpush1.bf16.xpose.msra.mxu0 0
    %1065 = vmatprep.subr.bf16.mxu0 0
    %1066 = vmatpush1.bf16.xpose.msra.mxu0 0
    %1067 = vmatprep.subr.bf16.mxu0 0
    %1068 = vmatpush1.bf16.xpose.msra.mxu0 0
    %1069 = vmatprep.subr.bf16.mxu0 0
    %1070 = vmatpush1.bf16.xpose.msra.mxu0 0
    %1071 = vmatprep.subr.bf16.mxu0 0
    %1072 = vmatpush1.bf16.xpose.msra.mxu0 0
    %1073 = vmatprep.subr.bf16.mxu0 0
    %1074 = vmatpush1.bf16.xpose.msra.mxu0 0
    %1075 = vmatprep.subr.bf16.mxu0 0
    %1076 = vmatpush1.bf16.xpose.msra.mxu0 0
    %1077 = vmatprep.subr.bf16.mxu0 0
    %1078 = vmatpush1.bf16.xpose.msra.mxu0 0
    %1079 = vmatprep.subr.bf16.mxu0 0
    %1080 = vmatpush1.bf16.xpose.msra.mxu0 0
    %1081 = vmatprep.subr.bf16.mxu0 0
    %1082 = vmatpush1.bf16.xpose.msra.mxu0 0
    %1083 = vmatprep.subr.bf16.mxu0 0
    %1084 = vmatpush1.bf16.xpose.msra.mxu0 0
    %1085 = vmatprep.mubr.bf16.mxu0 0
    %1086 = vmatmul.mubr.bf16.gmra.mrb[0].mxu0 %v1048
    %v1087 = vpop.f32.mrb[0].mxu0
    %v1088 = vadd.f32 0.0, %v1087
    %v1089 = vpop.f32.mrb[0].mxu0
    %v1090 = vpop.f32.mrb[0].mxu0
    %v1091 = vpop.f32.mrb[0].mxu0
    %1092 = vdwg.mxu0
    %v1093 = vmul.f32 %v1038, 0.35355338
    %v1094 = vmul.f32 %v1088, 0.35355338
    %v1095 = vsel %vm275, %v1093, -1e+30
    %v1096 = vsel %vm275, %v1094, -1e+30
    %v1097 = vsel %vm176, %v1095, -inf
    %1098 = vmax.xlane.f32.xlu0 %v1097
    %v1099 = vpop.xlane.xlu0 %1098
    %v1100 = vsel %vm176, %v1096, -inf
    %1101 = vmax.xlane.f32.xlu0 %v1100
    %v1102 = vpop.xlane.xlu0 %1101
    %v1103 = vsub.f32 %v1095, %v1099
    %v1104 = vsub.f32 %v1096, %v1102
    %v1105 = vmul.f32 %v1103, 1.442695
    %v1106 = vpow.pop %v1105
    %v1107 = vmul.f32 %v1104, 1.442695
    %v1108 = vpow.pop %v1107
    %v1109 = vsel %vm176, %v1106, 0.0
    %1110 = vadd.xlane.f32.xlu0 %v1109
    %v1111 = vpop.xlane.xlu0 %1110
    %v1112 = vsel %vm176, %v1108, 0.0
    %1113 = vadd.xlane.f32.xlu0 %v1112
    %v1114 = vpop.xlane.xlu0 %1113
    %v1115 = vrcp.pop %v1111
    %v1116 = vrcp.pop %v1114
    %v1117 = vmul.f32 %v1106, %v1115
    %v1118 = vmul.f32 %v1108, %v1116
    %v1119 = vpack.c.bf16 %v1117, %v1117
    %v1120 = vpack.c.bf16 %v1118, %v1118
    %1121 = vrot.lane.b32.xlu0 %v171, 40
    %v1122 = vpop.permute.xlu0 %1121
    %v1124 = vsel %vm176, %v1119, 0
    %v1127 = vsel %vm307, %v1122, 0
    %1129 = vmatprep.subr.bf16.mxu0 0
    %1130 = vmatpush1.bf16.msra.mxu0 %v1127
    %1131 = vmatprep.subr.bf16.mxu0 0
    %1132 = vmatpush1.bf16.msra.mxu0 0
    %1133 = vmatprep.subr.bf16.mxu0 0
    %1134 = vmatpush1.bf16.msra.mxu0 0
    %1135 = vmatprep.subr.bf16.mxu0 0
    %1136 = vmatpush1.bf16.msra.mxu0 0
    %1137 = vmatprep.subr.bf16.mxu0 0
    %1138 = vmatpush1.bf16.msra.mxu0 0
    %1139 = vmatprep.subr.bf16.mxu0 0
    %1140 = vmatpush1.bf16.msra.mxu0 0
    %1141 = vmatprep.subr.bf16.mxu0 0
    %1142 = vmatpush1.bf16.msra.mxu0 0
    %1143 = vmatprep.subr.bf16.mxu0 0
    %1144 = vmatpush1.bf16.msra.mxu0 0
    %1145 = vmatprep.subr.bf16.mxu0 0
    %1146 = vmatpush1.bf16.msra.mxu0 0
    %1147 = vmatprep.subr.bf16.mxu0 0
    %1148 = vmatpush1.bf16.msra.mxu0 0
    %1149 = vmatprep.subr.bf16.mxu0 0
    %1150 = vmatpush1.bf16.msra.mxu0 0
    %1151 = vmatprep.subr.bf16.mxu0 0
    %1152 = vmatpush1.bf16.msra.mxu0 0
    %1153 = vmatprep.subr.bf16.mxu0 0
    %1154 = vmatpush1.bf16.msra.mxu0 0
    %1155 = vmatprep.subr.bf16.mxu0 0
    %1156 = vmatpush1.bf16.msra.mxu0 0
    %1157 = vmatprep.subr.bf16.mxu0 0
    %1158 = vmatpush1.bf16.msra.mxu0 0
    %1159 = vmatprep.subr.bf16.mxu0 0
    %1160 = vmatpush1.bf16.msra.mxu0 0
    %1161 = vmatprep.mubr.bf16.mxu0 0
    %1162 = vmatmul.mubr.bf16.gmra.mrb[0].mxu0 %v1124
    %v1163 = vpop.f32.mrb[0].mxu0
    %v1164 = vadd.f32 0.0, %v1163
    %v1165 = vpop.f32.mrb[0].mxu0
    %v1166 = vpop.f32.mrb[0].mxu0
    %v1167 = vpop.f32.mrb[0].mxu0
    %1168 = vdwg.mxu0
    %1169 = vrot.lane.b32.xlu0 %v172, 40
    %v1170 = vpop.permute.xlu0 %1169
    %v1172 = vsel %vm176, %v1120, 0
    %v1175 = vsel %vm307, %v1170, 0
    %1177 = vmatprep.subr.bf16.mxu0 0
    %1178 = vmatpush1.bf16.msra.mxu0 %v1175
    %1179 = vmatprep.subr.bf16.mxu0 0
    %1180 = vmatpush1.bf16.msra.mxu0 0
    %1181 = vmatprep.subr.bf16.mxu0 0
    %1182 = vmatpush1.bf16.msra.mxu0 0
    %1183 = vmatprep.subr.bf16.mxu0 0
    %1184 = vmatpush1.bf16.msra.mxu0 0
    %1185 = vmatprep.subr.bf16.mxu0 0
    %1186 = vmatpush1.bf16.msra.mxu0 0
    %1187 = vmatprep.subr.bf16.mxu0 0
    %1188 = vmatpush1.bf16.msra.mxu0 0
    %1189 = vmatprep.subr.bf16.mxu0 0
    %1190 = vmatpush1.bf16.msra.mxu0 0
    %1191 = vmatprep.subr.bf16.mxu0 0
    %1192 = vmatpush1.bf16.msra.mxu0 0
    %1193 = vmatprep.subr.bf16.mxu0 0
    %1194 = vmatpush1.bf16.msra.mxu0 0
    %1195 = vmatprep.subr.bf16.mxu0 0
    %1196 = vmatpush1.bf16.msra.mxu0 0
    %1197 = vmatprep.subr.bf16.mxu0 0
    %1198 = vmatpush1.bf16.msra.mxu0 0
    %1199 = vmatprep.subr.bf16.mxu0 0
    %1200 = vmatpush1.bf16.msra.mxu0 0
    %1201 = vmatprep.subr.bf16.mxu0 0
    %1202 = vmatpush1.bf16.msra.mxu0 0
    %1203 = vmatprep.subr.bf16.mxu0 0
    %1204 = vmatpush1.bf16.msra.mxu0 0
    %1205 = vmatprep.subr.bf16.mxu0 0
    %1206 = vmatpush1.bf16.msra.mxu0 0
    %1207 = vmatprep.subr.bf16.mxu0 0
    %1208 = vmatpush1.bf16.msra.mxu0 0
    %1209 = vmatprep.mubr.bf16.mxu0 0
    %1210 = vmatmul.mubr.bf16.gmra.mrb[0].mxu0 %v1172
    %v1211 = vpop.f32.mrb[0].mxu0
    %v1212 = vadd.f32 0.0, %v1211
    %v1213 = vpop.f32.mrb[0].mxu0
    %v1214 = vpop.f32.mrb[0].mxu0
    %v1215 = vpop.f32.mrb[0].mxu0
    %1216 = vdwg.mxu0
    %v1217 = vpack.c.bf16 %v1212, %v1164
    %v1219 = vsel %vm176, %v1217, 0
    %v1222 = vsel %vm307, %v170, 0
    %1224 = vmatprep.subr.bf16.mxu0 0
    %1225 = vmatpush1.bf16.msra.mxu0 %v1222
    %1226 = vmatprep.subr.bf16.mxu0 0
    %1227 = vmatpush1.bf16.msra.mxu0 0
    %1228 = vmatprep.subr.bf16.mxu0 0
    %1229 = vmatpush1.bf16.msra.mxu0 0
    %1230 = vmatprep.subr.bf16.mxu0 0
    %1231 = vmatpush1.bf16.msra.mxu0 0
    %1232 = vmatprep.subr.bf16.mxu0 0
    %1233 = vmatpush1.bf16.msra.mxu0 0
    %1234 = vmatprep.subr.bf16.mxu0 0
    %1235 = vmatpush1.bf16.msra.mxu0 0
    %1236 = vmatprep.subr.bf16.mxu0 0
    %1237 = vmatpush1.bf16.msra.mxu0 0
    %1238 = vmatprep.subr.bf16.mxu0 0
    %1239 = vmatpush1.bf16.msra.mxu0 0
    %1240 = vmatprep.subr.bf16.mxu0 0
    %1241 = vmatpush1.bf16.msra.mxu0 0
    %1242 = vmatprep.subr.bf16.mxu0 0
    %1243 = vmatpush1.bf16.msra.mxu0 0
    %1244 = vmatprep.subr.bf16.mxu0 0
    %1245 = vmatpush1.bf16.msra.mxu0 0
    %1246 = vmatprep.subr.bf16.mxu0 0
    %1247 = vmatpush1.bf16.msra.mxu0 0
    %1248 = vmatprep.subr.bf16.mxu0 0
    %1249 = vmatpush1.bf16.msra.mxu0 0
    %1250 = vmatprep.subr.bf16.mxu0 0
    %1251 = vmatpush1.bf16.msra.mxu0 0
    %1252 = vmatprep.subr.bf16.mxu0 0
    %1253 = vmatpush1.bf16.msra.mxu0 0
    %1254 = vmatprep.subr.bf16.mxu0 0
    %1255 = vmatpush1.bf16.msra.mxu0 0
    %1256 = vmatprep.mubr.bf16.mxu0 0
    %1257 = vmatmul.mubr.bf16.gmra.mrb[0].mxu0 %v1219
    %v1258 = vpop.f32.mrb[0].mxu0
    %v1259 = vadd.f32 0.0, %v1258
    %v1260 = vpop.f32.mrb[0].mxu0
    %v1261 = vpop.f32.mrb[0].mxu0
    %v1262 = vadd.f32 0.0, %v1261
    %v1263 = vpop.f32.mrb[0].mxu0
    %1264 = vdwg.mxu0
    %v1265 = vadd.f32 %v991, %v1259
    %v1266 = vadd.f32 %v992, %v1262
    %v1267 = vadd.f32 %v46, %v1265
    %v1268 = vadd.f32 %v47, %v1266
    %v1269 = vld [vmem:[%s6] sm:$0x1]
    %v1271 = vlaneseq
    %v1272 = vshrl.u32 %v1271, 7
    %v1273 = vsub.s32 0, %v1272
    %v1274 = vrot.slane %v1269, %v1273
    %v1276 = vadd.f32 %v1267, %v1274
    %v1277 = vadd.f32 %v1268, %v1274
    %v1278 = vld [vmem:[%s7] sm:$0x1]
    %v1279 = vld [vmem:[%s8] sm:$0x1]
    %v1280 = vsel %vm50, %v1276, 0.0
    %1281 = vadd.xlane.f32.xlu0 %v1280
    %v1282 = vpop.xlane.xlu0 %1281
    %v1283 = vsel %vm50, %v1277, 0.0
    %1284 = vadd.xlane.f32.xlu0 %v1283
    %v1285 = vpop.xlane.xlu0 %1284
    %v1286 = vmul.f32 %v1282, %v57
    %v1287 = vmul.f32 %v1285, %v57
    %v1288 = vsub.f32 %v1276, %v1286
    %v1289 = vsub.f32 %v1277, %v1287
    %v1290 = vmul.f32 %v1288, %v1288
    %v1291 = vmul.f32 %v1289, %v1289
    %v1292 = vsel %vm50, %v1290, 0.0
    %1293 = vadd.xlane.f32.xlu0 %v1292
    %v1294 = vpop.xlane.xlu0 %1293
    %v1295 = vsel %vm50, %v1291, 0.0
    %1296 = vadd.xlane.f32.xlu0 %v1295
    %v1297 = vpop.xlane.xlu0 %1296
    %v1298 = vmul.f32 %v1294, %v57
    %v1299 = vmul.f32 %v1297, %v57
    %v1300 = vadd.f32 %v1298, 1e-05
    %v1301 = vadd.f32 %v1299, 1e-05
    %v1302 = vrsqrt.pop %v1300
    %v1303 = vrsqrt.pop %v1301
    %v1304 = vmul.f32 %v1288, %v1302
    %v1305 = vmul.f32 %v1289, %v1303
    %v1307 = vlaneseq
    %v1308 = vshrl.u32 %v1307, 7
    %v1309 = vsub.s32 0, %v1308
    %v1310 = vrot.slane %v1278, %v1309
    %v1312 = vmul.f32 %v1304, %v1310
    %v1313 = vmul.f32 %v1305, %v1310
    %v1315 = vlaneseq
    %v1316 = vshrl.u32 %v1315, 7
    %v1317 = vsub.s32 0, %v1316
    %v1318 = vrot.slane %v1279, %v1317
    %v1320 = vadd.f32 %v1312, %v1318
    %v1321 = vadd.f32 %v1313, %v1318
    %v1322 = vpack.c.bf16 %v1321, %v1320
    %v1323 = vld [vmem:[%s9] sm:$0xf]
    %v1324 = vld [vmem:[%s9 + $0x4] sm:$0xf]
    %v1325 = vld [vmem:[%s9 + $0x8] sm:$0xf]
    %v1326 = vld [vmem:[%s9 + $0xc] sm:$0xf]
    %v1327 = vld [vmem:[%s10] sm:$0x1]
    %v1329 = vlaneseq
    %v1330 = vshrl.u32 %v1329, 7
    %v1331 = vsub.s32 0, %v1330
    %v1332 = vrot.slane %v1327, %v1331
    %v1338 = vunpack.c.l.b16 %v1323
    %v1339 = vunpack.c.l.b16 %v1324
    %v1340 = vunpack.c.l.b16 %v1325
    %v1341 = vunpack.c.l.b16 %v1326
    %v1342 = vpack.c.b16 %v1339, %v1338
    %v1343 = vpack.c.b16 %v1341, %v1340
    %v1347 = vsel %vm50, %v1322, 0
    %1349 = vmatprep.subr.bf16.mxu0 0
    %1350 = vmatpush1.bf16.msra.mxu0 %v1342
    %1351 = vmatprep.subr.bf16.mxu0 0
    %1352 = vmatpush1.bf16.msra.mxu0 %v1343
    %1353 = vmatprep.subr.bf16.mxu0 0
    %1354 = vmatpush1.bf16.msra.mxu0 0
    %1355 = vmatprep.subr.bf16.mxu0 0
    %1356 = vmatpush1.bf16.msra.mxu0 0
    %1357 = vmatprep.subr.bf16.mxu0 0
    %1358 = vmatpush1.bf16.msra.mxu0 0
    %1359 = vmatprep.subr.bf16.mxu0 0
    %1360 = vmatpush1.bf16.msra.mxu0 0
    %1361 = vmatprep.subr.bf16.mxu0 0
    %1362 = vmatpush1.bf16.msra.mxu0 0
    %1363 = vmatprep.subr.bf16.mxu0 0
    %1364 = vmatpush1.bf16.msra.mxu0 0
    %1365 = vmatprep.subr.bf16.mxu0 0
    %1366 = vmatpush1.bf16.msra.mxu0 0
    %1367 = vmatprep.subr.bf16.mxu0 0
    %1368 = vmatpush1.bf16.msra.mxu0 0
    %1369 = vmatprep.subr.bf16.mxu0 0
    %1370 = vmatpush1.bf16.msra.mxu0 0
    %1371 = vmatprep.subr.bf16.mxu0 0
    %1372 = vmatpush1.bf16.msra.mxu0 0
    %1373 = vmatprep.subr.bf16.mxu0 0
    %1374 = vmatpush1.bf16.msra.mxu0 0
    %1375 = vmatprep.subr.bf16.mxu0 0
    %1376 = vmatpush1.bf16.msra.mxu0 0
    %1377 = vmatprep.subr.bf16.mxu0 0
    %1378 = vmatpush1.bf16.msra.mxu0 0
    %1379 = vmatprep.subr.bf16.mxu0 0
    %1380 = vmatpush1.bf16.msra.mxu0 0
    %1381 = vmatprep.mubr.bf16.mxu0 0
    %1382 = vmatmul.mubr.bf16.gmra.mrb[0].mxu0 %v1347
    %v1383 = vpop.f32.mrb[0].mxu0
    %v1384 = vadd.f32 %v1332, %v1383
    %v1385 = vpop.f32.mrb[0].mxu0
    %v1386 = vpop.f32.mrb[0].mxu0
    %v1387 = vadd.f32 %v1332, %v1386
    %v1388 = vpop.f32.mrb[0].mxu0
    %1389 = vdwg.mxu0
    %v1390 = vmul.f32 %v1384, 1.702
    %v1391 = vmul.f32 %v1387, 1.702
    %v1392 = vxor.u32 %v1390, 2147483648
    %v1393 = vxor.u32 %v1391, 2147483648
    %v1394 = vmul.f32 %v1392, 1.442695
    %v1395 = vpow.pop %v1394
    %v1396 = vmul.f32 %v1393, 1.442695
    %v1397 = vpow.pop %v1396
    %v1398 = vadd.f32 %v1395, 1.0
    %v1399 = vadd.f32 %v1397, 1.0
    %v1400 = vrcp.pop %v1398
    %v1401 = vmul.f32 1.0, %v1400
    %v1402 = vrcp.pop %v1399
    %v1403 = vmul.f32 1.0, %v1402
    %v1404 = vmul.f32 %v1384, %v1401
    %v1405 = vmul.f32 %v1387, %v1403
    %v1406 = vpack.c.bf16 %v1405, %v1404
    %v1407 = vld [vmem:[%s11] sm:$0xf]
    %v1408 = vld [vmem:[%s11 + $0x4] sm:$0xf]
    %v1409 = vld [vmem:[%s11 + $0x8] sm:$0xf]
    %v1410 = vld [vmem:[%s11 + $0xc] sm:$0xf]
    %v1411 = vld [vmem:[%s11 + $0x10] sm:$0xf]
    %v1412 = vld [vmem:[%s11 + $0x14] sm:$0xf]
    %v1413 = vld [vmem:[%s11 + $0x18] sm:$0xf]
    %v1414 = vld [vmem:[%s11 + $0x1c] sm:$0xf]
    %v1415 = vld [vmem:[%s11 + $0x20] sm:$0xf]
    %v1416 = vld [vmem:[%s11 + $0x24] sm:$0xf]
    %v1417 = vld [vmem:[%s11 + $0x28] sm:$0xf]
    %v1418 = vld [vmem:[%s11 + $0x2c] sm:$0xf]
    %v1419 = vld [vmem:[%s11 + $0x30] sm:$0xf]
    %v1420 = vld [vmem:[%s11 + $0x34] sm:$0xf]
    %v1421 = vld [vmem:[%s11 + $0x38] sm:$0xf]
    %v1422 = vld [vmem:[%s11 + $0x3c] sm:$0xf]
    %v1423 = vld [vmem:[%s12] sm:$0x1]
    %v1425 = vlaneseq
    %v1426 = vshrl.u32 %v1425, 7
    %v1427 = vsub.s32 0, %v1426
    %v1428 = vrot.slane %v1423, %v1427
    %v1446 = vunpack.c.l.b16 %v1407
    %v1447 = vunpack.c.l.b16 %v1408
    %v1448 = vunpack.c.l.b16 %v1409
    %v1449 = vunpack.c.l.b16 %v1410
    %v1450 = vunpack.c.l.b16 %v1411
    %v1451 = vunpack.c.l.b16 %v1412
    %v1452 = vunpack.c.l.b16 %v1413
    %v1453 = vunpack.c.l.b16 %v1414
    %v1454 = vunpack.c.l.b16 %v1415
    %v1455 = vunpack.c.l.b16 %v1416
    %v1456 = vunpack.c.l.b16 %v1417
    %v1457 = vunpack.c.l.b16 %v1418
    %v1458 = vunpack.c.l.b16 %v1419
    %v1459 = vunpack.c.l.b16 %v1420
    %v1460 = vunpack.c.l.b16 %v1421
    %v1461 = vunpack.c.l.b16 %v1422
    %v1462 = vpack.c.b16 %v1447, %v1446
    %v1463 = vpack.c.b16 %v1449, %v1448
    %v1464 = vpack.c.b16 %v1451, %v1450
    %v1465 = vpack.c.b16 %v1453, %v1452
    %v1466 = vpack.c.b16 %v1455, %v1454
    %v1467 = vpack.c.b16 %v1457, %v1456
    %v1468 = vpack.c.b16 %v1459, %v1458
    %v1469 = vpack.c.b16 %v1461, %v1460
    %1478 = vmatprep.subr.bf16.mxu0 0
    %1479 = vmatpush1.bf16.msra.mxu0 %v1462
    %1480 = vmatprep.subr.bf16.mxu0 0
    %1481 = vmatpush1.bf16.msra.mxu0 %v1463
    %1482 = vmatprep.subr.bf16.mxu0 0
    %1483 = vmatpush1.bf16.msra.mxu0 %v1464
    %1484 = vmatprep.subr.bf16.mxu0 0
    %1485 = vmatpush1.bf16.msra.mxu0 %v1465
    %1486 = vmatprep.subr.bf16.mxu0 0
    %1487 = vmatpush1.bf16.msra.mxu0 %v1466
    %1488 = vmatprep.subr.bf16.mxu0 0
    %1489 = vmatpush1.bf16.msra.mxu0 %v1467
    %1490 = vmatprep.subr.bf16.mxu0 0
    %1491 = vmatpush1.bf16.msra.mxu0 %v1468
    %1492 = vmatprep.subr.bf16.mxu0 0
    %1493 = vmatpush1.bf16.msra.mxu0 %v1469
    %1494 = vmatprep.subr.bf16.mxu0 0
    %1495 = vmatpush1.bf16.msra.mxu0 0
    %1496 = vmatprep.subr.bf16.mxu0 0
    %1497 = vmatpush1.bf16.msra.mxu0 0
    %1498 = vmatprep.subr.bf16.mxu0 0
    %1499 = vmatpush1.bf16.msra.mxu0 0
    %1500 = vmatprep.subr.bf16.mxu0 0
    %1501 = vmatpush1.bf16.msra.mxu0 0
    %1502 = vmatprep.subr.bf16.mxu0 0
    %1503 = vmatpush1.bf16.msra.mxu0 0
    %1504 = vmatprep.subr.bf16.mxu0 0
    %1505 = vmatpush1.bf16.msra.mxu0 0
    %1506 = vmatprep.subr.bf16.mxu0 0
    %1507 = vmatpush1.bf16.msra.mxu0 0
    %1508 = vmatprep.subr.bf16.mxu0 0
    %1509 = vmatpush1.bf16.msra.mxu0 0
    %1510 = vmatprep.mubr.bf16.mxu0 0
    %1511 = vmatmul.mubr.bf16.gmra.mrb[0].mxu0 %v1406
    %v1512 = vpop.f32.mrb[0].mxu0
    %v1513 = vadd.f32 %v1428, %v1512
    %v1514 = vpop.f32.mrb[0].mxu0
    %v1515 = vpop.f32.mrb[0].mxu0
    %v1516 = vadd.f32 %v1428, %v1515
    %v1517 = vpop.f32.mrb[0].mxu0
    %1518 = vdwg.mxu0
    %v1519 = vadd.f32 %v1276, %v1513
    %v1520 = vadd.f32 %v1277, %v1516
    %1521 = vst.msk [vmem:[#allocation2] sm:$0xff] %vm50, %v1519
    %1522 = vst.msk [vmem:[#allocation2 + $0x8] sm:$0xff] %vm50, %v1520
    // Predicated region
    $region54: #{tpu_custom_call.1} parent=1 // pred_check
      _
    $region55: #{tpu_custom_call.1} parent=1 // pred_check_branch
      %1524 = sbr.rel (0) target = $region57
    $region56: #{tpu_custom_call.1} parent=1 // pred_region
      %s1526 = ssub.s32 256, 256
      %1527 = vsyncadd [#allocation3], %s1526
      %s1528 = sshll.u32 [#allocation2], 4
      %s1529 = int_to_ptr.vmem [resolvable:$true] %s1528
      %1534 = dma.vmem_to_hbm [thread:$0]  %s1529, 256, %s13, [#allocation3], 128, 128, 8
    $region57: #{tpu_custom_call.1} parent=1 // pred_fallthru
      _
    // Predicated region
    $region58: #{tpu_custom_call.1} parent=1 // pred_check
      _
    $region59: #{tpu_custom_call.1} parent=1 // pred_check_branch
      %1536 = sbr.rel (0) target = $region61
    $region60: #{tpu_custom_call.1} parent=1 // pred_region
      %1537 = dma.done [#allocation3], 256
    $region61: #{tpu_custom_call.1} parent=1 // pred_fallthru
      _
    %1538 = vsyncpa [#allocation3], 1

</llo_original>
